<compile_context>
chip_gen: v6e
topology: v6e:2x2x1
jax: 0.10.0
libtpu: 0.0.40
codegen_flags: <defaults>
</compile_context>

<pallas_src>
import functools

import numpy as np

import jax
import jax.numpy as jnp
from jax.experimental import pallas as pl
from jax.experimental.pallas import tpu as pltpu

_BN_EPS = 1e-5
_VMEM = pl.BlockSpec(memory_space=pltpu.MemorySpace.VMEM)


# ------------------------------ Pallas kernel ------------------------------ #

def _autoencoder_kernel(
    x_ref,
    a1_ref, w1_ref, sh1_ref, r1_ref, s1_ref,
    a2_ref, w2_ref, sh2_ref, r2_ref, s2_ref,
    a3_ref, w3_ref, sh3_ref, r3_ref, s3_ref,
    e1_ref, wd1_ref, shd1_ref,
    e2_ref, wd2_ref, shd2_ref,
    e3_ref, wd3_ref, shd3_ref,
    o_ref,
):
    def mm(a, b):
        return jnp.dot(a, b, preferred_element_type=jnp.float32)

    def enc_stage(x, a_ref, w_ref, sh_ref, r_ref, s_ref):
        # Conv2d(k=2, s=1, p=1) + folded-BN:  sum_t (row-select @ x) @ band-weight.
        acc = mm(mm(a_ref[0], x), w_ref[0])
        for t in range(1, a_ref.shape[0]):
            acc += mm(mm(a_ref[t], x), w_ref[t])
        y = jnp.maximum(acc + sh_ref[...], 0.0)                    # shift + ReLU
        # MaxPool2d(2, 2) via exact 0/1 selection matmuls (fused epilogue).
        rm = jnp.maximum(mm(r_ref[0], y), mm(r_ref[1], y))         # pool rows
        return jnp.maximum(mm(rm, s_ref[0]), mm(rm, s_ref[1]))     # pool cols

    def dec_stage(x, e_ref, w_ref, sh_ref, act):
        # ConvTranspose2d(stride=2) via sub-pixel row expansion + band weights.
        acc = mm(e_ref[0], mm(x, w_ref[0]))
        for t in range(1, e_ref.shape[0]):
            acc += mm(e_ref[t], mm(x, w_ref[t]))
        y = acc + sh_ref[...]                                      # bias + BN shift
        return jnp.maximum(y, 0.0) if act == "relu" else jax.nn.sigmoid(y)

    x = x_ref[...]
    # ---- Encoder ----
    x = enc_stage(x, a1_ref, w1_ref, sh1_ref, r1_ref, s1_ref)      # planar input
    x = enc_stage(x, a2_ref, w2_ref, sh2_ref, r2_ref, s2_ref)
    x = enc_stage(x, a3_ref, w3_ref, sh3_ref, r3_ref, s3_ref)
    # Dropout(0.3): identity in eval/inference mode.
    # ---- Decoder ----
    x = dec_stage(x, e1_ref, wd1_ref, shd1_ref, "relu")
    x = dec_stage(x, e2_ref, wd2_ref, shd2_ref, "relu")
    x = dec_stage(x, e3_ref, wd3_ref, shd3_ref, "sigmoid")         # planar output
    o_ref[...] = x


# --------------------- host-side operand precomputation -------------------- #

def _fold_bn(bias, bn):
    """Eval-mode BatchNorm (+conv bias) -> per-channel (scale, shift)."""
    gamma, beta, mean, var = (np.asarray(v, np.float32) for v in bn)
    b = np.asarray(bias, np.float32)
    inv = gamma / np.sqrt(var + _BN_EPS)
    return inv, beta + (b - mean) * inv


def _conv_terms_planar_in(w, inv, n, h_in, w_in, pad):
    """Conv2d terms for channel-planar input rows (n,cin,h), cols (w).

    Returns A:[k*Cin, N*Ho, N*Cin*H], B:[k*Cin, W, Wo*Cout] (BN scale folded)."""
    cout, cin, k, _ = w.shape
    ho = h_in + 2 * pad - k + 1
    wo = w_in + 2 * pad - k + 1
    eye_n = np.eye(n, dtype=np.float32)
    a_list, b_list = [], []
    for di in range(k):
        a = np.zeros((ho, h_in), np.float32)
        for i in range(ho):
            r = i + di - pad
            if 0 <= r < h_in:
                a[i, r] = 1.0
        for ci in range(cin):
            embed = np.zeros((ho, cin * h_in), np.float32)
            embed[:, ci * h_in:(ci + 1) * h_in] = a
            a_list.append(np.kron(eye_n, embed))
            band = np.zeros((w_in, wo, cout), np.float32)
            for j in range(wo):
                for dj in range(k):
                    wc = j + dj - pad
                    if 0 <= wc < w_in:
                        band[wc, j, :] += w[:, ci, di, dj] * inv
            b_list.append(band.reshape(w_in, wo * cout))
    return np.stack(a_list), np.stack(b_list), ho, wo


def _conv_terms_nhwc(w, inv, n, h_in, w_in, pad):
    """Conv2d terms for (N*H, W*Cin) layout. A:[k,N*Ho,N*H], B:[k,W*Cin,Wo*Cout]."""
    cout, cin, k, _ = w.shape
    ho = h_in + 2 * pad - k + 1
    wo = w_in + 2 * pad - k + 1
    eye_n = np.eye(n, dtype=np.float32)
    a_list, b_list = [], []
    for di in range(k):
        a = np.zeros((ho, h_in), np.float32)
        for i in range(ho):
            r = i + di - pad
            if 0 <= r < h_in:
                a[i, r] = 1.0
        a_list.append(np.kron(eye_n, a))
        band = np.zeros((w_in, cin, wo, cout), np.float32)
        for j in range(wo):
            for dj in range(k):
                wc = j + dj - pad
                if 0 <= wc < w_in:
                    band[wc, :, j, :] += (w[:, :, di, dj] * inv[:, None]).T
        b_list.append(band.reshape(w_in * cin, wo * cout))
    return np.stack(a_list), np.stack(b_list), ho, wo


def _convT_terms_nhwc(wt, inv, n, h_in, w_in, stride):
    """ConvTranspose2d(stride, pad=0) terms, (N*H, W*C) in/out (BN scale folded)."""
    cin, cout, k, _ = wt.shape
    ho = (h_in - 1) * stride + k
    wo = (w_in - 1) * stride + k
    eye_n = np.eye(n, dtype=np.float32)
    e_list, b_list = [], []
    for kr in range(k):
        e = np.zeros((ho, h_in), np.float32)
        for ii in range(h_in):
            e[stride * ii + kr, ii] = 1.0
        e_list.append(np.kron(eye_n, e))
        band = np.zeros((w_in, cin, wo, cout), np.float32)
        for ji in range(w_in):
            for kj in range(k):
                band[ji, :, stride * ji + kj, :] += wt[:, :, kr, kj] * inv[None, :]
        b_list.append(band.reshape(w_in * cin, wo * cout))
    return np.stack(e_list), np.stack(b_list), ho, wo


def _convT_terms_planar_out(wt, inv, n, h_in, w_in, stride):
    """Final ConvTranspose2d producing channel-planar output rows (n,cout,ho).

    Returns E:[k*Cout, N*Cout*Ho, N*Hin], B:[k*Cout, Win*Cin, Wo]."""
    cin, cout, k, _ = wt.shape
    ho = (h_in - 1) * stride + k
    wo = (w_in - 1) * stride + k
    e_list, b_list = [], []
    for kr in range(k):
        e = np.zeros((ho, h_in), np.float32)
        for ii in range(h_in):
            e[stride * ii + kr, ii] = 1.0
        for co in range(cout):
            emb = np.zeros((n, cout, ho, n, h_in), np.float32)
            for nn in range(n):
                emb[nn, co, :, nn, :] = e
            e_list.append(emb.reshape(n * cout * ho, n * h_in))
            band = np.zeros((w_in, cin, wo), np.float32)
            for ji in range(w_in):
                for kj in range(k):
                    band[ji, :, stride * ji + kj] += wt[:, co, kr, kj] * inv[co]
            b_list.append(band.reshape(w_in * cin, wo))
    return np.stack(e_list), np.stack(b_list), ho, wo


def _pool_mats(ho, wo, c, n):
    """0/1 selection matrices for fused MaxPool2d(2, 2) (floor mode)."""
    ph, pw = ho // 2, wo // 2
    rs, ss = [], []
    for r in range(2):
        rmat = np.zeros((ph, ho), np.float32)
        for i in range(ph):
            rmat[i, 2 * i + r] = 1.0
        rs.append(np.kron(np.eye(n, dtype=np.float32), rmat))
        smat = np.zeros((wo * c, pw * c), np.float32)
        for j in range(pw):
            for cc in range(c):
                smat[(2 * j + r) * c + cc, j * c + cc] = 1.0
        ss.append(smat)
    return np.stack(rs), np.stack(ss), ph, pw


def prepare_operands(params, n, h, w):
    """Precompute (once, on host) every constant operand of the fused kernel."""
    p = jax.tree_util.tree_map(np.asarray, params)
    ops = []
    H, W = h, w

    # Encoder stage 1: Conv2d on the channel-planar input view [N*Cin*H, W].
    inv, shift = _fold_bn(p["e1_b"], p["e1_bn"])
    A, B, Ho, Wo = _conv_terms_planar_in(p["e1_w"], inv, n, H, W, pad=1)
    R, S, H, W = _pool_mats(Ho, Wo, int(p["e1_w"].shape[0]), n)
    ops += [A, B, np.tile(shift, Wo)[None, :], R, S]

    # Encoder stages 2-3: Conv2d on the [N*H, W*C] layout.
    for name in ("e2", "e3"):
        inv, shift = _fold_bn(p[f"{name}_b"], p[f"{name}_bn"])
        A, B, Ho, Wo = _conv_terms_nhwc(p[f"{name}_w"], inv, n, H, W, pad=1)
        R, S, H, W = _pool_mats(Ho, Wo, int(p[f"{name}_w"].shape[0]), n)
        ops += [A, B, np.tile(shift, Wo)[None, :], R, S]

    # Decoder stages 1-2: ConvTranspose2d(stride=2) on the [N*H, W*C] layout.
    for name in ("d1", "d2"):
        inv, shift = _fold_bn(p[f"{name}_b"], p[f"{name}_bn"])
        E, B, H, W = _convT_terms_nhwc(p[f"{name}_w"], inv, n, H, W, stride=2)
        ops += [E, B, np.tile(shift, W)[None, :]]

    # Decoder stage 3: ConvTranspose2d producing channel-planar output [N*Cout*Ho, Wo].
    inv, shift = _fold_bn(p["d3_b"], p["d3_bn"])
    E, B, H, W = _convT_terms_planar_out(p["d3_w"], inv, n, H, W, stride=2)
    cout_final = int(p["d3_w"].shape[1])
    ops += [E, B, np.tile(np.repeat(shift, H), n)[:, None]]

    operands = tuple(jnp.asarray(o, dtype=jnp.float32) for o in ops)
    return operands, (H, W, cout_final)


# ------------------------------- forward pass ------------------------------ #

@functools.partial(jax.jit, static_argnames=("out_hwc",))
def autoencoder_forward(x_nchw, operands, out_hwc):
    n, c, h, w = x_nchw.shape
    ho, wo, co = out_hwc
    # Free (layout-preserving) reshape: NCHW -> channel-planar 2-D view.
    x2d = x_nchw.reshape(n * c * h, w)
    out2d = pl.pallas_call(
        _autoencoder_kernel,
        out_shape=jax.ShapeDtypeStruct((n * co * ho, wo), jnp.float32),
        in_specs=[_VMEM] * (1 + len(operands)),
        out_specs=_VMEM,
    )(x2d, *operands)
    # Free reshape back: channel-planar 2-D -> NCHW.
    return out2d.reshape(n, co, ho, wo)


# ----------------------------- parameter init ------------------------------ #

def _init_conv(key, cout, cin, k):
    k1, k2 = jax.random.split(key)
    bound = 1.0 / jnp.sqrt(cin * k * k)
    w = jax.random.uniform(k1, (cout, cin, k, k), jnp.float32, -bound, bound)
    b = jax.random.uniform(k2, (cout,), jnp.float32, -bound, bound)
    return w, b


def _init_convT(key, cin, cout, k):
    k1, k2 = jax.random.split(key)
    bound = 1.0 / jnp.sqrt(cout * k * k)
    w = jax.random.uniform(k1, (cin, cout, k, k), jnp.float32, -bound, bound)
    b = jax.random.uniform(k2, (cout,), jnp.float32, -bound, bound)
    return w, b


def _init_bn(key, c):
    # Eval-mode BatchNorm: running stats + affine params (deterministic, perturbed).
    k1, k2, k3, k4 = jax.random.split(key, 4)
    gamma = 1.0 + 0.1 * jax.random.normal(k1, (c,), jnp.float32)
    beta = 0.1 * jax.random.normal(k2, (c,), jnp.float32)
    mean = 0.05 * jax.random.normal(k3, (c,), jnp.float32)
    var = 1.0 + 0.1 * jax.random.uniform(k4, (c,), jnp.float32)
    return gamma, beta, mean, var


def init_autoencoder_params(key):
    keys = jax.random.split(key, 12)
    p = {}
    p["e1_w"], p["e1_b"] = _init_conv(keys[0], 8, 3, 2)
    p["e1_bn"] = _init_bn(keys[1], 8)
    p["e2_w"], p["e2_b"] = _init_conv(keys[2], 16, 8, 2)
    p["e2_bn"] = _init_bn(keys[3], 16)
    p["e3_w"], p["e3_b"] = _init_conv(keys[4], 32, 16, 2)
    p["e3_bn"] = _init_bn(keys[5], 32)
    p["d1_w"], p["d1_b"] = _init_convT(keys[6], 32, 16, 1)
    p["d1_bn"] = _init_bn(keys[7], 16)
    p["d2_w"], p["d2_b"] = _init_convT(keys[8], 16, 8, 3)
    p["d2_bn"] = _init_bn(keys[9], 8)
    p["d3_w"], p["d3_b"] = _init_convT(keys[10], 8, 3, 2)
    p["d3_bn"] = _init_bn(keys[11], 3)
    return p


# ----------------- pure-JAX reference (validated, no Pallas) ---------------- #

def _ref_fold_bn(b, bn):
    gamma, beta, mean, var = bn
    inv = gamma / jnp.sqrt(var + _BN_EPS)
    return inv, beta + (b - mean) * inv


def _ref_im2col(x, k):
    n, h, w, c = x.shape
    ho, wo = h - k + 1, w - k + 1
    cols = [x[:, di:di + ho, dj:dj + wo, :] for di in range(k) for dj in range(k)]
    p = jnp.stack(cols, axis=3)
    return p.reshape(n * ho * wo, k * k * c), (n, ho, wo)


def _ref_act(y, act):
    return jnp.maximum(y, 0.0) if act == "relu" else jax.nn.sigmoid(y)


def _ref_conv(x, w, b, bn, k, pad, act):
    cout = w.shape[0]
    xp = jnp.pad(x, ((0, 0), (pad, pad), (pad, pad), (0, 0)))
    patches, (n, ho, wo) = _ref_im2col(xp, k)
    wmat = jnp.transpose(w, (2, 3, 1, 0)).reshape(-1, cout)
    scale, shift = _ref_fold_bn(b, bn)
    y = _ref_act(patches @ wmat * scale + shift, act)
    return y.reshape(n, ho, wo, cout)


def _ref_convT(x, wt, b, bn, k, stride, act):
    cin, cout = wt.shape[0], wt.shape[1]
    n, h, w, _ = x.shape
    xd = jnp.zeros((n, (h - 1) * stride + 1, (w - 1) * stride + 1, cin), x.dtype)
    xd = xd.at[:, ::stride, ::stride, :].set(x)
    pp = k - 1
    xp = jnp.pad(xd, ((0, 0), (pp, pp), (pp, pp), (0, 0)))
    patches, (n2, ho, wo) = _ref_im2col(xp, k)
    wflip = wt[:, :, ::-1, ::-1]
    wmat = jnp.transpose(wflip, (2, 3, 0, 1)).reshape(k * k * cin, cout)
    scale, shift = _ref_fold_bn(b, bn)
    y = _ref_act(patches @ wmat * scale + shift, act)
    return y.reshape(n2, ho, wo, cout)


def _ref_pool(x):
    n, h, w, c = x.shape
    ho, wo = h // 2, w // 2
    x = x[:, : 2 * ho, : 2 * wo, :]
    return jnp.maximum(jnp.maximum(x[:, 0::2, 0::2], x[:, 0::2, 1::2]),
                       jnp.maximum(x[:, 1::2, 0::2], x[:, 1::2, 1::2]))


@jax.jit
def reference_forward(x_nchw, p):
    x = jnp.transpose(x_nchw, (0, 2, 3, 1))
    x = _ref_pool(_ref_conv(x, p["e1_w"], p["e1_b"], p["e1_bn"], 2, 1, "relu"))
    x = _ref_pool(_ref_conv(x, p["e2_w"], p["e2_b"], p["e2_bn"], 2, 1, "relu"))
    x = _ref_pool(_ref_conv(x, p["e3_w"], p["e3_b"], p["e3_bn"], 2, 1, "relu"))
    x = _ref_convT(x, p["d1_w"], p["d1_b"], p["d1_bn"], 1, 2, "relu")
    x = _ref_convT(x, p["d2_w"], p["d2_b"], p["d2_bn"], 3, 2, "relu")
    x = _ref_convT(x, p["d3_w"], p["d3_b"], p["d3_bn"], 2, 2, "sigmoid")
    return jnp.transpose(x, (0, 3, 1, 2))


# ----------------------------------- main ----------------------------------- #

if __name__ == "__main__":
    key = jax.random.PRNGKey(0)
    k_params, k_input = jax.random.split(key)

    params = init_autoencoder_params(k_params)
    x = jax.random.normal(k_input, (2, 3, 16, 16), jnp.float32)      # NCHW

    operands, out_hwc = prepare_operands(params, 2, 16, 16)
    out = jax.block_until_ready(autoencoder_forward(x, operands, out_hwc))

    # Shape / range checks: 16 -> enc(17->8 -> 9->4 -> 5->2) -> dec(3 -> 7 -> 14).
    assert out.shape == (2, 3, 14, 14), out.shape
    assert bool(jnp.all(jnp.isfinite(out)))
    assert bool(jnp.all((out >= 0.0) & (out <= 1.0)))                # sigmoid range

    # Numerical self-check vs. the previously validated pure-JAX reference
    # (loose tolerance only to absorb MXU default-precision rounding).
    ref = jax.block_until_ready(reference_forward(x, params))
    np.testing.assert_allclose(np.asarray(out), np.asarray(ref), rtol=0, atol=5e-2)

    print("KERNEL_OK")
</pallas_src>

<mosaic_0001>
module attributes {stable_mosaic.version = 11 : i64} {
  func.func @_autoencoder_kernel(%arg0: memref<96x16xf32, #tpu.memory_space<vmem>>, %arg1: memref<6x34x96xf32, #tpu.memory_space<vmem>>, %arg2: memref<6x16x136xf32, #tpu.memory_space<vmem>>, %arg3: memref<1x136xf32, #tpu.memory_space<vmem>>, %arg4: memref<2x16x34xf32, #tpu.memory_space<vmem>>, %arg5: memref<2x136x64xf32, #tpu.memory_space<vmem>>, %arg6: memref<2x18x16xf32, #tpu.memory_space<vmem>>, %arg7: memref<2x64x144xf32, #tpu.memory_space<vmem>>, %arg8: memref<1x144xf32, #tpu.memory_space<vmem>>, %arg9: memref<2x8x18xf32, #tpu.memory_space<vmem>>, %arg10: memref<2x144x64xf32, #tpu.memory_space<vmem>>, %arg11: memref<2x10x8xf32, #tpu.memory_space<vmem>>, %arg12: memref<2x64x160xf32, #tpu.memory_space<vmem>>, %arg13: memref<1x160xf32, #tpu.memory_space<vmem>>, %arg14: memref<2x4x10xf32, #tpu.memory_space<vmem>>, %arg15: memref<2x160x64xf32, #tpu.memory_space<vmem>>, %arg16: memref<1x6x4xf32, #tpu.memory_space<vmem>>, %arg17: memref<1x64x48xf32, #tpu.memory_space<vmem>>, %arg18: memref<1x48xf32, #tpu.memory_space<vmem>>, %arg19: memref<3x14x6xf32, #tpu.memory_space<vmem>>, %arg20: memref<3x48x56xf32, #tpu.memory_space<vmem>>, %arg21: memref<1x56xf32, #tpu.memory_space<vmem>>, %arg22: memref<6x84x14xf32, #tpu.memory_space<vmem>>, %arg23: memref<6x56x14xf32, #tpu.memory_space<vmem>>, %arg24: memref<84x1xf32, #tpu.memory_space<vmem>>, %arg25: memref<84x14xf32, #tpu.memory_space<vmem>>) attributes {dimension_semantics = [], scalar_prefetch = 0 : i64, scratch_operands = 0 : i64, tpu.core_type = #tpu.core_type<tc>} {
    %c0 = arith.constant 0 : index
    %c0_0 = arith.constant 0 : index
    %0 = vector.load %arg0[%c0, %c0_0] : memref<96x16xf32, #tpu.memory_space<vmem>>, vector<96x16xf32>
    %c0_1 = arith.constant 0 : index
    %c0_2 = arith.constant 0 : index
    %c0_3 = arith.constant 0 : index
    %1 = vector.load %arg1[%c0_1, %c0_2, %c0_3] : memref<6x34x96xf32, #tpu.memory_space<vmem>>, vector<1x34x96xf32>
    %2 = vector.shape_cast %1 : vector<1x34x96xf32> to vector<34x96xf32>
    %cst = arith.constant dense<0.000000e+00> : vector<34x16xf32>
    %3 = tpu.matmul %2, %0, %cst {dimension_numbers = #tpu.dot_dimension_numbers<[1], [0], [0], [1], [0, 0, 1, 1], [], []>} : vector<34x96xf32>, vector<96x16xf32>, vector<34x16xf32> -> vector<34x16xf32>
    %c0_4 = arith.constant 0 : index
    %c0_5 = arith.constant 0 : index
    %c0_6 = arith.constant 0 : index
    %4 = vector.load %arg2[%c0_4, %c0_5, %c0_6] : memref<6x16x136xf32, #tpu.memory_space<vmem>>, vector<1x16x136xf32>
    %5 = vector.shape_cast %4 : vector<1x16x136xf32> to vector<16x136xf32>
    %cst_7 = arith.constant dense<0.000000e+00> : vector<34x136xf32>
    %6 = tpu.matmul %3, %5, %cst_7 {dimension_numbers = #tpu.dot_dimension_numbers<[1], [0], [0], [1], [0, 0, 1, 1], [], []>} : vector<34x16xf32>, vector<16x136xf32>, vector<34x136xf32> -> vector<34x136xf32>
    %c1 = arith.constant 1 : index
    %c0_8 = arith.constant 0 : index
    %c0_9 = arith.constant 0 : index
    %7 = vector.load %arg1[%c1, %c0_8, %c0_9] : memref<6x34x96xf32, #tpu.memory_space<vmem>>, vector<1x34x96xf32>
    %8 = vector.shape_cast %7 : vector<1x34x96xf32> to vector<34x96xf32>
    %cst_10 = arith.constant dense<0.000000e+00> : vector<34x16xf32>
    %9 = tpu.matmul %8, %0, %cst_10 {dimension_numbers = #tpu.dot_dimension_numbers<[1], [0], [0], [1], [0, 0, 1, 1], [], []>} : vector<34x96xf32>, vector<96x16xf32>, vector<34x16xf32> -> vector<34x16xf32>
    %c1_11 = arith.constant 1 : index
    %c0_12 = arith.constant 0 : index
    %c0_13 = arith.constant 0 : index
    %10 = vector.load %arg2[%c1_11, %c0_12, %c0_13] : memref<6x16x136xf32, #tpu.memory_space<vmem>>, vector<1x16x136xf32>
    %11 = vector.shape_cast %10 : vector<1x16x136xf32> to vector<16x136xf32>
    %cst_14 = arith.constant dense<0.000000e+00> : vector<34x136xf32>
    %12 = tpu.matmul %9, %11, %cst_14 {dimension_numbers = #tpu.dot_dimension_numbers<[1], [0], [0], [1], [0, 0, 1, 1], [], []>} : vector<34x16xf32>, vector<16x136xf32>, vector<34x136xf32> -> vector<34x136xf32>
    %13 = arith.addf %6, %12 : vector<34x136xf32>
    %c2 = arith.constant 2 : index
    %c0_15 = arith.constant 0 : index
    %c0_16 = arith.constant 0 : index
    %14 = vector.load %arg1[%c2, %c0_15, %c0_16] : memref<6x34x96xf32, #tpu.memory_space<vmem>>, vector<1x34x96xf32>
    %15 = vector.shape_cast %14 : vector<1x34x96xf32> to vector<34x96xf32>
    %cst_17 = arith.constant dense<0.000000e+00> : vector<34x16xf32>
    %16 = tpu.matmul %15, %0, %cst_17 {dimension_numbers = #tpu.dot_dimension_numbers<[1], [0], [0], [1], [0, 0, 1, 1], [], []>} : vector<34x96xf32>, vector<96x16xf32>, vector<34x16xf32> -> vector<34x16xf32>
    %c2_18 = arith.constant 2 : index
    %c0_19 = arith.constant 0 : index
    %c0_20 = arith.constant 0 : index
    %17 = vector.load %arg2[%c2_18, %c0_19, %c0_20] : memref<6x16x136xf32, #tpu.memory_space<vmem>>, vector<1x16x136xf32>
    %18 = vector.shape_cast %17 : vector<1x16x136xf32> to vector<16x136xf32>
    %cst_21 = arith.constant dense<0.000000e+00> : vector<34x136xf32>
    %19 = tpu.matmul %16, %18, %cst_21 {dimension_numbers = #tpu.dot_dimension_numbers<[1], [0], [0], [1], [0, 0, 1, 1], [], []>} : vector<34x16xf32>, vector<16x136xf32>, vector<34x136xf32> -> vector<34x136xf32>
    %20 = arith.addf %13, %19 : vector<34x136xf32>
    %c3 = arith.constant 3 : index
    %c0_22 = arith.constant 0 : index
    %c0_23 = arith.constant 0 : index
    %21 = vector.load %arg1[%c3, %c0_22, %c0_23] : memref<6x34x96xf32, #tpu.memory_space<vmem>>, vector<1x34x96xf32>
    %22 = vector.shape_cast %21 : vector<1x34x96xf32> to vector<34x96xf32>
    %cst_24 = arith.constant dense<0.000000e+00> : vector<34x16xf32>
    %23 = tpu.matmul %22, %0, %cst_24 {dimension_numbers = #tpu.dot_dimension_numbers<[1], [0], [0], [1], [0, 0, 1, 1], [], []>} : vector<34x96xf32>, vector<96x16xf32>, vector<34x16xf32> -> vector<34x16xf32>
    %c3_25 = arith.constant 3 : index
    %c0_26 = arith.constant 0 : index
    %c0_27 = arith.constant 0 : index
    %24 = vector.load %arg2[%c3_25, %c0_26, %c0_27] : memref<6x16x136xf32, #tpu.memory_space<vmem>>, vector<1x16x136xf32>
    %25 = vector.shape_cast %24 : vector<1x16x136xf32> to vector<16x136xf32>
    %cst_28 = arith.constant dense<0.000000e+00> : vector<34x136xf32>
    %26 = tpu.matmul %23, %25, %cst_28 {dimension_numbers = #tpu.dot_dimension_numbers<[1], [0], [0], [1], [0, 0, 1, 1], [], []>} : vector<34x16xf32>, vector<16x136xf32>, vector<34x136xf32> -> vector<34x136xf32>
    %27 = arith.addf %20, %26 : vector<34x136xf32>
    %c4 = arith.constant 4 : index
    %c0_29 = arith.constant 0 : index
    %c0_30 = arith.constant 0 : index
    %28 = vector.load %arg1[%c4, %c0_29, %c0_30] : memref<6x34x96xf32, #tpu.memory_space<vmem>>, vector<1x34x96xf32>
    %29 = vector.shape_cast %28 : vector<1x34x96xf32> to vector<34x96xf32>
    %cst_31 = arith.constant dense<0.000000e+00> : vector<34x16xf32>
    %30 = tpu.matmul %29, %0, %cst_31 {dimension_numbers = #tpu.dot_dimension_numbers<[1], [0], [0], [1], [0, 0, 1, 1], [], []>} : vector<34x96xf32>, vector<96x16xf32>, vector<34x16xf32> -> vector<34x16xf32>
    %c4_32 = arith.constant 4 : index
    %c0_33 = arith.constant 0 : index
    %c0_34 = arith.constant 0 : index
    %31 = vector.load %arg2[%c4_32, %c0_33, %c0_34] : memref<6x16x136xf32, #tpu.memory_space<vmem>>, vector<1x16x136xf32>
    %32 = vector.shape_cast %31 : vector<1x16x136xf32> to vector<16x136xf32>
    %cst_35 = arith.constant dense<0.000000e+00> : vector<34x136xf32>
    %33 = tpu.matmul %30, %32, %cst_35 {dimension_numbers = #tpu.dot_dimension_numbers<[1], [0], [0], [1], [0, 0, 1, 1], [], []>} : vector<34x16xf32>, vector<16x136xf32>, vector<34x136xf32> -> vector<34x136xf32>
    %34 = arith.addf %27, %33 : vector<34x136xf32>
    %c5 = arith.constant 5 : index
    %c0_36 = arith.constant 0 : index
    %c0_37 = arith.constant 0 : index
    %35 = vector.load %arg1[%c5, %c0_36, %c0_37] : memref<6x34x96xf32, #tpu.memory_space<vmem>>, vector<1x34x96xf32>
    %36 = vector.shape_cast %35 : vector<1x34x96xf32> to vector<34x96xf32>
    %cst_38 = arith.constant dense<0.000000e+00> : vector<34x16xf32>
    %37 = tpu.matmul %36, %0, %cst_38 {dimension_numbers = #tpu.dot_dimension_numbers<[1], [0], [0], [1], [0, 0, 1, 1], [], []>} : vector<34x96xf32>, vector<96x16xf32>, vector<34x16xf32> -> vector<34x16xf32>
    %c5_39 = arith.constant 5 : index
    %c0_40 = arith.constant 0 : index
    %c0_41 = arith.constant 0 : index
    %38 = vector.load %arg2[%c5_39, %c0_40, %c0_41] : memref<6x16x136xf32, #tpu.memory_space<vmem>>, vector<1x16x136xf32>
    %39 = vector.shape_cast %38 : vector<1x16x136xf32> to vector<16x136xf32>
    %cst_42 = arith.constant dense<0.000000e+00> : vector<34x136xf32>
    %40 = tpu.matmul %37, %39, %cst_42 {dimension_numbers = #tpu.dot_dimension_numbers<[1], [0], [0], [1], [0, 0, 1, 1], [], []>} : vector<34x16xf32>, vector<16x136xf32>, vector<34x136xf32> -> vector<34x136xf32>
    %41 = arith.addf %34, %40 : vector<34x136xf32>
    %c0_43 = arith.constant 0 : index
    %c0_44 = arith.constant 0 : index
    %42 = vector.load %arg3[%c0_43, %c0_44] : memref<1x136xf32, #tpu.memory_space<vmem>>, vector<1x136xf32>
    %43 = vector.broadcast %42 : vector<1x136xf32> to vector<34x136xf32>
    %44 = arith.addf %41, %43 : vector<34x136xf32>
    %cst_45 = arith.constant 0.000000e+00 : f32
    %45 = vector.broadcast %cst_45 : f32 to vector<34x136xf32>
    %46 = arith.maximumf %44, %45 : vector<34x136xf32>
    %c0_46 = arith.constant 0 : index
    %c0_47 = arith.constant 0 : index
    %c0_48 = arith.constant 0 : index
    %47 = vector.load %arg4[%c0_46, %c0_47, %c0_48] : memref<2x16x34xf32, #tpu.memory_space<vmem>>, vector<1x16x34xf32>
    %48 = vector.shape_cast %47 : vector<1x16x34xf32> to vector<16x34xf32>
    %cst_49 = arith.constant dense<0.000000e+00> : vector<16x136xf32>
    %49 = tpu.matmul %48, %46, %cst_49 {dimension_numbers = #tpu.dot_dimension_numbers<[1], [0], [0], [1], [0, 0, 1, 1], [], []>} : vector<16x34xf32>, vector<34x136xf32>, vector<16x136xf32> -> vector<16x136xf32>
    %c1_50 = arith.constant 1 : index
    %c0_51 = arith.constant 0 : index
    %c0_52 = arith.constant 0 : index
    %50 = vector.load %arg4[%c1_50, %c0_51, %c0_52] : memref<2x16x34xf32, #tpu.memory_space<vmem>>, vector<1x16x34xf32>
    %51 = vector.shape_cast %50 : vector<1x16x34xf32> to vector<16x34xf32>
    %cst_53 = arith.constant dense<0.000000e+00> : vector<16x136xf32>
    %52 = tpu.matmul %51, %46, %cst_53 {dimension_numbers = #tpu.dot_dimension_numbers<[1], [0], [0], [1], [0, 0, 1, 1], [], []>} : vector<16x34xf32>, vector<34x136xf32>, vector<16x136xf32> -> vector<16x136xf32>
    %53 = arith.maximumf %49, %52 : vector<16x136xf32>
    %c0_54 = arith.constant 0 : index
    %c0_55 = arith.constant 0 : index
    %c0_56 = arith.constant 0 : index
    %54 = vector.load %arg5[%c0_54, %c0_55, %c0_56] : memref<2x136x64xf32, #tpu.memory_space<vmem>>, vector<1x136x64xf32>
    %55 = vector.shape_cast %54 : vector<1x136x64xf32> to vector<136x64xf32>
    %cst_57 = arith.constant dense<0.000000e+00> : vector<16x64xf32>
    %56 = tpu.matmul %53, %55, %cst_57 {dimension_numbers = #tpu.dot_dimension_numbers<[1], [0], [0], [1], [0, 0, 1, 1], [], []>} : vector<16x136xf32>, vector<136x64xf32>, vector<16x64xf32> -> vector<16x64xf32>
    %c1_58 = arith.constant 1 : index
    %c0_59 = arith.constant 0 : index
    %c0_60 = arith.constant 0 : index
    %57 = vector.load %arg5[%c1_58, %c0_59, %c0_60] : memref<2x136x64xf32, #tpu.memory_space<vmem>>, vector<1x136x64xf32>
    %58 = vector.shape_cast %57 : vector<1x136x64xf32> to vector<136x64xf32>
    %cst_61 = arith.constant dense<0.000000e+00> : vector<16x64xf32>
    %59 = tpu.matmul %53, %58, %cst_61 {dimension_numbers = #tpu.dot_dimension_numbers<[1], [0], [0], [1], [0, 0, 1, 1], [], []>} : vector<16x136xf32>, vector<136x64xf32>, vector<16x64xf32> -> vector<16x64xf32>
    %60 = arith.maximumf %56, %59 : vector<16x64xf32>
    %c0_62 = arith.constant 0 : index
    %c0_63 = arith.constant 0 : index
    %c0_64 = arith.constant 0 : index
    %61 = vector.load %arg6[%c0_62, %c0_63, %c0_64] : memref<2x18x16xf32, #tpu.memory_space<vmem>>, vector<1x18x16xf32>
    %62 = vector.shape_cast %61 : vector<1x18x16xf32> to vector<18x16xf32>
    %cst_65 = arith.constant dense<0.000000e+00> : vector<18x64xf32>
    %63 = tpu.matmul %62, %60, %cst_65 {dimension_numbers = #tpu.dot_dimension_numbers<[1], [0], [0], [1], [0, 0, 1, 1], [], []>} : vector<18x16xf32>, vector<16x64xf32>, vector<18x64xf32> -> vector<18x64xf32>
    %c0_66 = arith.constant 0 : index
    %c0_67 = arith.constant 0 : index
    %c0_68 = arith.constant 0 : index
    %64 = vector.load %arg7[%c0_66, %c0_67, %c0_68] : memref<2x64x144xf32, #tpu.memory_space<vmem>>, vector<1x64x144xf32>
    %65 = vector.shape_cast %64 : vector<1x64x144xf32> to vector<64x144xf32>
    %cst_69 = arith.constant dense<0.000000e+00> : vector<18x144xf32>
    %66 = tpu.matmul %63, %65, %cst_69 {dimension_numbers = #tpu.dot_dimension_numbers<[1], [0], [0], [1], [0, 0, 1, 1], [], []>} : vector<18x64xf32>, vector<64x144xf32>, vector<18x144xf32> -> vector<18x144xf32>
    %c1_70 = arith.constant 1 : index
    %c0_71 = arith.constant 0 : index
    %c0_72 = arith.constant 0 : index
    %67 = vector.load %arg6[%c1_70, %c0_71, %c0_72] : memref<2x18x16xf32, #tpu.memory_space<vmem>>, vector<1x18x16xf32>
    %68 = vector.shape_cast %67 : vector<1x18x16xf32> to vector<18x16xf32>
    %cst_73 = arith.constant dense<0.000000e+00> : vector<18x64xf32>
    %69 = tpu.matmul %68, %60, %cst_73 {dimension_numbers = #tpu.dot_dimension_numbers<[1], [0], [0], [1], [0, 0, 1, 1], [], []>} : vector<18x16xf32>, vector<16x64xf32>, vector<18x64xf32> -> vector<18x64xf32>
    %c1_74 = arith.constant 1 : index
    %c0_75 = arith.constant 0 : index
    %c0_76 = arith.constant 0 : index
    %70 = vector.load %arg7[%c1_74, %c0_75, %c0_76] : memref<2x64x144xf32, #tpu.memory_space<vmem>>, vector<1x64x144xf32>
    %71 = vector.shape_cast %70 : vector<1x64x144xf32> to vector<64x144xf32>
    %cst_77 = arith.constant dense<0.000000e+00> : vector<18x144xf32>
    %72 = tpu.matmul %69, %71, %cst_77 {dimension_numbers = #tpu.dot_dimension_numbers<[1], [0], [0], [1], [0, 0, 1, 1], [], []>} : vector<18x64xf32>, vector<64x144xf32>, vector<18x144xf32> -> vector<18x144xf32>
    %73 = arith.addf %66, %72 : vector<18x144xf32>
    %c0_78 = arith.constant 0 : index
    %c0_79 = arith.constant 0 : index
    %74 = vector.load %arg8[%c0_78, %c0_79] : memref<1x144xf32, #tpu.memory_space<vmem>>, vector<1x144xf32>
    %75 = vector.broadcast %74 : vector<1x144xf32> to vector<18x144xf32>
    %76 = arith.addf %73, %75 : vector<18x144xf32>
    %cst_80 = arith.constant 0.000000e+00 : f32
    %77 = vector.broadcast %cst_80 : f32 to vector<18x144xf32>
    %78 = arith.maximumf %76, %77 : vector<18x144xf32>
    %c0_81 = arith.constant 0 : index
    %c0_82 = arith.constant 0 : index
    %c0_83 = arith.constant 0 : index
    %79 = vector.load %arg9[%c0_81, %c0_82, %c0_83] : memref<2x8x18xf32, #tpu.memory_space<vmem>>, vector<1x8x18xf32>
    %80 = vector.shape_cast %79 : vector<1x8x18xf32> to vector<8x18xf32>
    %cst_84 = arith.constant dense<0.000000e+00> : vector<8x144xf32>
    %81 = tpu.matmul %80, %78, %cst_84 {dimension_numbers = #tpu.dot_dimension_numbers<[1], [0], [0], [1], [0, 0, 1, 1], [], []>} : vector<8x18xf32>, vector<18x144xf32>, vector<8x144xf32> -> vector<8x144xf32>
    %c1_85 = arith.constant 1 : index
    %c0_86 = arith.constant 0 : index
    %c0_87 = arith.constant 0 : index
    %82 = vector.load %arg9[%c1_85, %c0_86, %c0_87] : memref<2x8x18xf32, #tpu.memory_space<vmem>>, vector<1x8x18xf32>
    %83 = vector.shape_cast %82 : vector<1x8x18xf32> to vector<8x18xf32>
    %cst_88 = arith.constant dense<0.000000e+00> : vector<8x144xf32>
    %84 = tpu.matmul %83, %78, %cst_88 {dimension_numbers = #tpu.dot_dimension_numbers<[1], [0], [0], [1], [0, 0, 1, 1], [], []>} : vector<8x18xf32>, vector<18x144xf32>, vector<8x144xf32> -> vector<8x144xf32>
    %85 = arith.maximumf %81, %84 : vector<8x144xf32>
    %c0_89 = arith.constant 0 : index
    %c0_90 = arith.constant 0 : index
    %c0_91 = arith.constant 0 : index
    %86 = vector.load %arg10[%c0_89, %c0_90, %c0_91] : memref<2x144x64xf32, #tpu.memory_space<vmem>>, vector<1x144x64xf32>
    %87 = vector.shape_cast %86 : vector<1x144x64xf32> to vector<144x64xf32>
    %cst_92 = arith.constant dense<0.000000e+00> : vector<8x64xf32>
    %88 = tpu.matmul %85, %87, %cst_92 {dimension_numbers = #tpu.dot_dimension_numbers<[1], [0], [0], [1], [0, 0, 1, 1], [], []>} : vector<8x144xf32>, vector<144x64xf32>, vector<8x64xf32> -> vector<8x64xf32>
    %c1_93 = arith.constant 1 : index
    %c0_94 = arith.constant 0 : index
    %c0_95 = arith.constant 0 : index
    %89 = vector.load %arg10[%c1_93, %c0_94, %c0_95] : memref<2x144x64xf32, #tpu.memory_space<vmem>>, vector<1x144x64xf32>
    %90 = vector.shape_cast %89 : vector<1x144x64xf32> to vector<144x64xf32>
    %cst_96 = arith.constant dense<0.000000e+00> : vector<8x64xf32>
    %91 = tpu.matmul %85, %90, %cst_96 {dimension_numbers = #tpu.dot_dimension_numbers<[1], [0], [0], [1], [0, 0, 1, 1], [], []>} : vector<8x144xf32>, vector<144x64xf32>, vector<8x64xf32> -> vector<8x64xf32>
    %92 = arith.maximumf %88, %91 : vector<8x64xf32>
    %c0_97 = arith.constant 0 : index
    %c0_98 = arith.constant 0 : index
    %c0_99 = arith.constant 0 : index
    %93 = vector.load %arg11[%c0_97, %c0_98, %c0_99] : memref<2x10x8xf32, #tpu.memory_space<vmem>>, vector<1x10x8xf32>
    %94 = vector.shape_cast %93 : vector<1x10x8xf32> to vector<10x8xf32>
    %cst_100 = arith.constant dense<0.000000e+00> : vector<10x64xf32>
    %95 = tpu.matmul %94, %92, %cst_100 {dimension_numbers = #tpu.dot_dimension_numbers<[1], [0], [0], [1], [0, 0, 1, 1], [], []>} : vector<10x8xf32>, vector<8x64xf32>, vector<10x64xf32> -> vector<10x64xf32>
    %c0_101 = arith.constant 0 : index
    %c0_102 = arith.constant 0 : index
    %c0_103 = arith.constant 0 : index
    %96 = vector.load %arg12[%c0_101, %c0_102, %c0_103] : memref<2x64x160xf32, #tpu.memory_space<vmem>>, vector<1x64x160xf32>
    %97 = vector.shape_cast %96 : vector<1x64x160xf32> to vector<64x160xf32>
    %cst_104 = arith.constant dense<0.000000e+00> : vector<10x160xf32>
    %98 = tpu.matmul %95, %97, %cst_104 {dimension_numbers = #tpu.dot_dimension_numbers<[1], [0], [0], [1], [0, 0, 1, 1], [], []>} : vector<10x64xf32>, vector<64x160xf32>, vector<10x160xf32> -> vector<10x160xf32>
    %c1_105 = arith.constant 1 : index
    %c0_106 = arith.constant 0 : index
    %c0_107 = arith.constant 0 : index
    %99 = vector.load %arg11[%c1_105, %c0_106, %c0_107] : memref<2x10x8xf32, #tpu.memory_space<vmem>>, vector<1x10x8xf32>
    %100 = vector.shape_cast %99 : vector<1x10x8xf32> to vector<10x8xf32>
    %cst_108 = arith.constant dense<0.000000e+00> : vector<10x64xf32>
    %101 = tpu.matmul %100, %92, %cst_108 {dimension_numbers = #tpu.dot_dimension_numbers<[1], [0], [0], [1], [0, 0, 1, 1], [], []>} : vector<10x8xf32>, vector<8x64xf32>, vector<10x64xf32> -> vector<10x64xf32>
    %c1_109 = arith.constant 1 : index
    %c0_110 = arith.constant 0 : index
    %c0_111 = arith.constant 0 : index
    %102 = vector.load %arg12[%c1_109, %c0_110, %c0_111] : memref<2x64x160xf32, #tpu.memory_space<vmem>>, vector<1x64x160xf32>
    %103 = vector.shape_cast %102 : vector<1x64x160xf32> to vector<64x160xf32>
    %cst_112 = arith.constant dense<0.000000e+00> : vector<10x160xf32>
    %104 = tpu.matmul %101, %103, %cst_112 {dimension_numbers = #tpu.dot_dimension_numbers<[1], [0], [0], [1], [0, 0, 1, 1], [], []>} : vector<10x64xf32>, vector<64x160xf32>, vector<10x160xf32> -> vector<10x160xf32>
    %105 = arith.addf %98, %104 : vector<10x160xf32>
    %c0_113 = arith.constant 0 : index
    %c0_114 = arith.constant 0 : index
    %106 = vector.load %arg13[%c0_113, %c0_114] : memref<1x160xf32, #tpu.memory_space<vmem>>, vector<1x160xf32>
    %107 = vector.broadcast %106 : vector<1x160xf32> to vector<10x160xf32>
    %108 = arith.addf %105, %107 : vector<10x160xf32>
    %cst_115 = arith.constant 0.000000e+00 : f32
    %109 = vector.broadcast %cst_115 : f32 to vector<10x160xf32>
    %110 = arith.maximumf %108, %109 : vector<10x160xf32>
    %c0_116 = arith.constant 0 : index
    %c0_117 = arith.constant 0 : index
    %c0_118 = arith.constant 0 : index
    %111 = vector.load %arg14[%c0_116, %c0_117, %c0_118] : memref<2x4x10xf32, #tpu.memory_space<vmem>>, vector<1x4x10xf32>
    %112 = vector.shape_cast %111 : vector<1x4x10xf32> to vector<4x10xf32>
    %cst_119 = arith.constant dense<0.000000e+00> : vector<4x160xf32>
    %113 = tpu.matmul %112, %110, %cst_119 {dimension_numbers = #tpu.dot_dimension_numbers<[1], [0], [0], [1], [0, 0, 1, 1], [], []>} : vector<4x10xf32>, vector<10x160xf32>, vector<4x160xf32> -> vector<4x160xf32>
    %c1_120 = arith.constant 1 : index
    %c0_121 = arith.constant 0 : index
    %c0_122 = arith.constant 0 : index
    %114 = vector.load %arg14[%c1_120, %c0_121, %c0_122] : memref<2x4x10xf32, #tpu.memory_space<vmem>>, vector<1x4x10xf32>
    %115 = vector.shape_cast %114 : vector<1x4x10xf32> to vector<4x10xf32>
    %cst_123 = arith.constant dense<0.000000e+00> : vector<4x160xf32>
    %116 = tpu.matmul %115, %110, %cst_123 {dimension_numbers = #tpu.dot_dimension_numbers<[1], [0], [0], [1], [0, 0, 1, 1], [], []>} : vector<4x10xf32>, vector<10x160xf32>, vector<4x160xf32> -> vector<4x160xf32>
    %117 = arith.maximumf %113, %116 : vector<4x160xf32>
    %c0_124 = arith.constant 0 : index
    %c0_125 = arith.constant 0 : index
    %c0_126 = arith.constant 0 : index
    %118 = vector.load %arg15[%c0_124, %c0_125, %c0_126] : memref<2x160x64xf32, #tpu.memory_space<vmem>>, vector<1x160x64xf32>
    %119 = vector.shape_cast %118 : vector<1x160x64xf32> to vector<160x64xf32>
    %cst_127 = arith.constant dense<0.000000e+00> : vector<4x64xf32>
    %120 = tpu.matmul %117, %119, %cst_127 {dimension_numbers = #tpu.dot_dimension_numbers<[1], [0], [0], [1], [0, 0, 1, 1], [], []>} : vector<4x160xf32>, vector<160x64xf32>, vector<4x64xf32> -> vector<4x64xf32>
    %c1_128 = arith.constant 1 : index
    %c0_129 = arith.constant 0 : index
    %c0_130 = arith.constant 0 : index
    %121 = vector.load %arg15[%c1_128, %c0_129, %c0_130] : memref<2x160x64xf32, #tpu.memory_space<vmem>>, vector<1x160x64xf32>
    %122 = vector.shape_cast %121 : vector<1x160x64xf32> to vector<160x64xf32>
    %cst_131 = arith.constant dense<0.000000e+00> : vector<4x64xf32>
    %123 = tpu.matmul %117, %122, %cst_131 {dimension_numbers = #tpu.dot_dimension_numbers<[1], [0], [0], [1], [0, 0, 1, 1], [], []>} : vector<4x160xf32>, vector<160x64xf32>, vector<4x64xf32> -> vector<4x64xf32>
    %124 = arith.maximumf %120, %123 : vector<4x64xf32>
    %c0_132 = arith.constant 0 : index
    %c0_133 = arith.constant 0 : index
    %c0_134 = arith.constant 0 : index
    %125 = vector.load %arg16[%c0_132, %c0_133, %c0_134] : memref<1x6x4xf32, #tpu.memory_space<vmem>>, vector<1x6x4xf32>
    %126 = vector.shape_cast %125 : vector<1x6x4xf32> to vector<6x4xf32>
    %c0_135 = arith.constant 0 : index
    %c0_136 = arith.constant 0 : index
    %c0_137 = arith.constant 0 : index
    %127 = vector.load %arg17[%c0_135, %c0_136, %c0_137] : memref<1x64x48xf32, #tpu.memory_space<vmem>>, vector<1x64x48xf32>
    %128 = vector.shape_cast %127 : vector<1x64x48xf32> to vector<64x48xf32>
    %cst_138 = arith.constant dense<0.000000e+00> : vector<4x48xf32>
    %129 = tpu.matmul %124, %128, %cst_138 {dimension_numbers = #tpu.dot_dimension_numbers<[1], [0], [0], [1], [0, 0, 1, 1], [], []>} : vector<4x64xf32>, vector<64x48xf32>, vector<4x48xf32> -> vector<4x48xf32>
    %cst_139 = arith.constant dense<0.000000e+00> : vector<6x48xf32>
    %130 = tpu.matmul %126, %129, %cst_139 {dimension_numbers = #tpu.dot_dimension_numbers<[1], [0], [0], [1], [0, 0, 1, 1], [], []>} : vector<6x4xf32>, vector<4x48xf32>, vector<6x48xf32> -> vector<6x48xf32>
    %c0_140 = arith.constant 0 : index
    %c0_141 = arith.constant 0 : index
    %131 = vector.load %arg18[%c0_140, %c0_141] : memref<1x48xf32, #tpu.memory_space<vmem>>, vector<1x48xf32>
    %132 = vector.broadcast %131 : vector<1x48xf32> to vector<6x48xf32>
    %133 = arith.addf %130, %132 : vector<6x48xf32>
    %cst_142 = arith.constant 0.000000e+00 : f32
    %134 = vector.broadcast %cst_142 : f32 to vector<6x48xf32>
    %135 = arith.maximumf %133, %134 : vector<6x48xf32>
    %c0_143 = arith.constant 0 : index
    %c0_144 = arith.constant 0 : index
    %c0_145 = arith.constant 0 : index
    %136 = vector.load %arg19[%c0_143, %c0_144, %c0_145] : memref<3x14x6xf32, #tpu.memory_space<vmem>>, vector<1x14x6xf32>
    %137 = vector.shape_cast %136 : vector<1x14x6xf32> to vector<14x6xf32>
    %c0_146 = arith.constant 0 : index
    %c0_147 = arith.constant 0 : index
    %c0_148 = arith.constant 0 : index
    %138 = vector.load %arg20[%c0_146, %c0_147, %c0_148] : memref<3x48x56xf32, #tpu.memory_space<vmem>>, vector<1x48x56xf32>
    %139 = vector.shape_cast %138 : vector<1x48x56xf32> to vector<48x56xf32>
    %cst_149 = arith.constant dense<0.000000e+00> : vector<6x56xf32>
    %140 = tpu.matmul %135, %139, %cst_149 {dimension_numbers = #tpu.dot_dimension_numbers<[1], [0], [0], [1], [0, 0, 1, 1], [], []>} : vector<6x48xf32>, vector<48x56xf32>, vector<6x56xf32> -> vector<6x56xf32>
    %cst_150 = arith.constant dense<0.000000e+00> : vector<14x56xf32>
    %141 = tpu.matmul %137, %140, %cst_150 {dimension_numbers = #tpu.dot_dimension_numbers<[1], [0], [0], [1], [0, 0, 1, 1], [], []>} : vector<14x6xf32>, vector<6x56xf32>, vector<14x56xf32> -> vector<14x56xf32>
    %c1_151 = arith.constant 1 : index
    %c0_152 = arith.constant 0 : index
    %c0_153 = arith.constant 0 : index
    %142 = vector.load %arg19[%c1_151, %c0_152, %c0_153] : memref<3x14x6xf32, #tpu.memory_space<vmem>>, vector<1x14x6xf32>
    %143 = vector.shape_cast %142 : vector<1x14x6xf32> to vector<14x6xf32>
    %c1_154 = arith.constant 1 : index
    %c0_155 = arith.constant 0 : index
    %c0_156 = arith.constant 0 : index
    %144 = vector.load %arg20[%c1_154, %c0_155, %c0_156] : memref<3x48x56xf32, #tpu.memory_space<vmem>>, vector<1x48x56xf32>
    %145 = vector.shape_cast %144 : vector<1x48x56xf32> to vector<48x56xf32>
    %cst_157 = arith.constant dense<0.000000e+00> : vector<6x56xf32>
    %146 = tpu.matmul %135, %145, %cst_157 {dimension_numbers = #tpu.dot_dimension_numbers<[1], [0], [0], [1], [0, 0, 1, 1], [], []>} : vector<6x48xf32>, vector<48x56xf32>, vector<6x56xf32> -> vector<6x56xf32>
    %cst_158 = arith.constant dense<0.000000e+00> : vector<14x56xf32>
    %147 = tpu.matmul %143, %146, %cst_158 {dimension_numbers = #tpu.dot_dimension_numbers<[1], [0], [0], [1], [0, 0, 1, 1], [], []>} : vector<14x6xf32>, vector<6x56xf32>, vector<14x56xf32> -> vector<14x56xf32>
    %148 = arith.addf %141, %147 : vector<14x56xf32>
    %c2_159 = arith.constant 2 : index
    %c0_160 = arith.constant 0 : index
    %c0_161 = arith.constant 0 : index
    %149 = vector.load %arg19[%c2_159, %c0_160, %c0_161] : memref<3x14x6xf32, #tpu.memory_space<vmem>>, vector<1x14x6xf32>
    %150 = vector.shape_cast %149 : vector<1x14x6xf32> to vector<14x6xf32>
    %c2_162 = arith.constant 2 : index
    %c0_163 = arith.constant 0 : index
    %c0_164 = arith.constant 0 : index
    %151 = vector.load %arg20[%c2_162, %c0_163, %c0_164] : memref<3x48x56xf32, #tpu.memory_space<vmem>>, vector<1x48x56xf32>
    %152 = vector.shape_cast %151 : vector<1x48x56xf32> to vector<48x56xf32>
    %cst_165 = arith.constant dense<0.000000e+00> : vector<6x56xf32>
    %153 = tpu.matmul %135, %152, %cst_165 {dimension_numbers = #tpu.dot_dimension_numbers<[1], [0], [0], [1], [0, 0, 1, 1], [], []>} : vector<6x48xf32>, vector<48x56xf32>, vector<6x56xf32> -> vector<6x56xf32>
    %cst_166 = arith.constant dense<0.000000e+00> : vector<14x56xf32>
    %154 = tpu.matmul %150, %153, %cst_166 {dimension_numbers = #tpu.dot_dimension_numbers<[1], [0], [0], [1], [0, 0, 1, 1], [], []>} : vector<14x6xf32>, vector<6x56xf32>, vector<14x56xf32> -> vector<14x56xf32>
    %155 = arith.addf %148, %154 : vector<14x56xf32>
    %c0_167 = arith.constant 0 : index
    %c0_168 = arith.constant 0 : index
    %156 = vector.load %arg21[%c0_167, %c0_168] : memref<1x56xf32, #tpu.memory_space<vmem>>, vector<1x56xf32>
    %157 = vector.broadcast %156 : vector<1x56xf32> to vector<14x56xf32>
    %158 = arith.addf %155, %157 : vector<14x56xf32>
    %cst_169 = arith.constant 0.000000e+00 : f32
    %159 = vector.broadcast %cst_169 : f32 to vector<14x56xf32>
    %160 = arith.maximumf %158, %159 : vector<14x56xf32>
    %c0_170 = arith.constant 0 : index
    %c0_171 = arith.constant 0 : index
    %c0_172 = arith.constant 0 : index
    %161 = vector.load %arg22[%c0_170, %c0_171, %c0_172] : memref<6x84x14xf32, #tpu.memory_space<vmem>>, vector<1x84x14xf32>
    %162 = vector.shape_cast %161 : vector<1x84x14xf32> to vector<84x14xf32>
    %c0_173 = arith.constant 0 : index
    %c0_174 = arith.constant 0 : index
    %c0_175 = arith.constant 0 : index
    %163 = vector.load %arg23[%c0_173, %c0_174, %c0_175] : memref<6x56x14xf32, #tpu.memory_space<vmem>>, vector<1x56x14xf32>
    %164 = vector.shape_cast %163 : vector<1x56x14xf32> to vector<56x14xf32>
    %cst_176 = arith.constant dense<0.000000e+00> : vector<14x14xf32>
    %165 = tpu.matmul %160, %164, %cst_176 {dimension_numbers = #tpu.dot_dimension_numbers<[1], [0], [0], [1], [0, 0, 1, 1], [], []>} : vector<14x56xf32>, vector<56x14xf32>, vector<14x14xf32> -> vector<14x14xf32>
    %cst_177 = arith.constant dense<0.000000e+00> : vector<84x14xf32>
    %166 = tpu.matmul %162, %165, %cst_177 {dimension_numbers = #tpu.dot_dimension_numbers<[1], [0], [0], [1], [0, 0, 1, 1], [], []>} : vector<84x14xf32>, vector<14x14xf32>, vector<84x14xf32> -> vector<84x14xf32>
    %c1_178 = arith.constant 1 : index
    %c0_179 = arith.constant 0 : index
    %c0_180 = arith.constant 0 : index
    %167 = vector.load %arg22[%c1_178, %c0_179, %c0_180] : memref<6x84x14xf32, #tpu.memory_space<vmem>>, vector<1x84x14xf32>
    %168 = vector.shape_cast %167 : vector<1x84x14xf32> to vector<84x14xf32>
    %c1_181 = arith.constant 1 : index
    %c0_182 = arith.constant 0 : index
    %c0_183 = arith.constant 0 : index
    %169 = vector.load %arg23[%c1_181, %c0_182, %c0_183] : memref<6x56x14xf32, #tpu.memory_space<vmem>>, vector<1x56x14xf32>
    %170 = vector.shape_cast %169 : vector<1x56x14xf32> to vector<56x14xf32>
    %cst_184 = arith.constant dense<0.000000e+00> : vector<14x14xf32>
    %171 = tpu.matmul %160, %170, %cst_184 {dimension_numbers = #tpu.dot_dimension_numbers<[1], [0], [0], [1], [0, 0, 1, 1], [], []>} : vector<14x56xf32>, vector<56x14xf32>, vector<14x14xf32> -> vector<14x14xf32>
    %cst_185 = arith.constant dense<0.000000e+00> : vector<84x14xf32>
    %172 = tpu.matmul %168, %171, %cst_185 {dimension_numbers = #tpu.dot_dimension_numbers<[1], [0], [0], [1], [0, 0, 1, 1], [], []>} : vector<84x14xf32>, vector<14x14xf32>, vector<84x14xf32> -> vector<84x14xf32>
    %173 = arith.addf %166, %172 : vector<84x14xf32>
    %c2_186 = arith.constant 2 : index
    %c0_187 = arith.constant 0 : index
    %c0_188 = arith.constant 0 : index
    %174 = vector.load %arg22[%c2_186, %c0_187, %c0_188] : memref<6x84x14xf32, #tpu.memory_space<vmem>>, vector<1x84x14xf32>
    %175 = vector.shape_cast %174 : vector<1x84x14xf32> to vector<84x14xf32>
    %c2_189 = arith.constant 2 : index
    %c0_190 = arith.constant 0 : index
    %c0_191 = arith.constant 0 : index
    %176 = vector.load %arg23[%c2_189, %c0_190, %c0_191] : memref<6x56x14xf32, #tpu.memory_space<vmem>>, vector<1x56x14xf32>
    %177 = vector.shape_cast %176 : vector<1x56x14xf32> to vector<56x14xf32>
    %cst_192 = arith.constant dense<0.000000e+00> : vector<14x14xf32>
    %178 = tpu.matmul %160, %177, %cst_192 {dimension_numbers = #tpu.dot_dimension_numbers<[1], [0], [0], [1], [0, 0, 1, 1], [], []>} : vector<14x56xf32>, vector<56x14xf32>, vector<14x14xf32> -> vector<14x14xf32>
    %cst_193 = arith.constant dense<0.000000e+00> : vector<84x14xf32>
    %179 = tpu.matmul %175, %178, %cst_193 {dimension_numbers = #tpu.dot_dimension_numbers<[1], [0], [0], [1], [0, 0, 1, 1], [], []>} : vector<84x14xf32>, vector<14x14xf32>, vector<84x14xf32> -> vector<84x14xf32>
    %180 = arith.addf %173, %179 : vector<84x14xf32>
    %c3_194 = arith.constant 3 : index
    %c0_195 = arith.constant 0 : index
    %c0_196 = arith.constant 0 : index
    %181 = vector.load %arg22[%c3_194, %c0_195, %c0_196] : memref<6x84x14xf32, #tpu.memory_space<vmem>>, vector<1x84x14xf32>
    %182 = vector.shape_cast %181 : vector<1x84x14xf32> to vector<84x14xf32>
    %c3_197 = arith.constant 3 : index
    %c0_198 = arith.constant 0 : index
    %c0_199 = arith.constant 0 : index
    %183 = vector.load %arg23[%c3_197, %c0_198, %c0_199] : memref<6x56x14xf32, #tpu.memory_space<vmem>>, vector<1x56x14xf32>
    %184 = vector.shape_cast %183 : vector<1x56x14xf32> to vector<56x14xf32>
    %cst_200 = arith.constant dense<0.000000e+00> : vector<14x14xf32>
    %185 = tpu.matmul %160, %184, %cst_200 {dimension_numbers = #tpu.dot_dimension_numbers<[1], [0], [0], [1], [0, 0, 1, 1], [], []>} : vector<14x56xf32>, vector<56x14xf32>, vector<14x14xf32> -> vector<14x14xf32>
    %cst_201 = arith.constant dense<0.000000e+00> : vector<84x14xf32>
    %186 = tpu.matmul %182, %185, %cst_201 {dimension_numbers = #tpu.dot_dimension_numbers<[1], [0], [0], [1], [0, 0, 1, 1], [], []>} : vector<84x14xf32>, vector<14x14xf32>, vector<84x14xf32> -> vector<84x14xf32>
    %187 = arith.addf %180, %186 : vector<84x14xf32>
    %c4_202 = arith.constant 4 : index
    %c0_203 = arith.constant 0 : index
    %c0_204 = arith.constant 0 : index
    %188 = vector.load %arg22[%c4_202, %c0_203, %c0_204] : memref<6x84x14xf32, #tpu.memory_space<vmem>>, vector<1x84x14xf32>
    %189 = vector.shape_cast %188 : vector<1x84x14xf32> to vector<84x14xf32>
    %c4_205 = arith.constant 4 : index
    %c0_206 = arith.constant 0 : index
    %c0_207 = arith.constant 0 : index
    %190 = vector.load %arg23[%c4_205, %c0_206, %c0_207] : memref<6x56x14xf32, #tpu.memory_space<vmem>>, vector<1x56x14xf32>
    %191 = vector.shape_cast %190 : vector<1x56x14xf32> to vector<56x14xf32>
    %cst_208 = arith.constant dense<0.000000e+00> : vector<14x14xf32>
    %192 = tpu.matmul %160, %191, %cst_208 {dimension_numbers = #tpu.dot_dimension_numbers<[1], [0], [0], [1], [0, 0, 1, 1], [], []>} : vector<14x56xf32>, vector<56x14xf32>, vector<14x14xf32> -> vector<14x14xf32>
    %cst_209 = arith.constant dense<0.000000e+00> : vector<84x14xf32>
    %193 = tpu.matmul %189, %192, %cst_209 {dimension_numbers = #tpu.dot_dimension_numbers<[1], [0], [0], [1], [0, 0, 1, 1], [], []>} : vector<84x14xf32>, vector<14x14xf32>, vector<84x14xf32> -> vector<84x14xf32>
    %194 = arith.addf %187, %193 : vector<84x14xf32>
    %c5_210 = arith.constant 5 : index
    %c0_211 = arith.constant 0 : index
    %c0_212 = arith.constant 0 : index
    %195 = vector.load %arg22[%c5_210, %c0_211, %c0_212] : memref<6x84x14xf32, #tpu.memory_space<vmem>>, vector<1x84x14xf32>
    %196 = vector.shape_cast %195 : vector<1x84x14xf32> to vector<84x14xf32>
    %c5_213 = arith.constant 5 : index
    %c0_214 = arith.constant 0 : index
    %c0_215 = arith.constant 0 : index
    %197 = vector.load %arg23[%c5_213, %c0_214, %c0_215] : memref<6x56x14xf32, #tpu.memory_space<vmem>>, vector<1x56x14xf32>
    %198 = vector.shape_cast %197 : vector<1x56x14xf32> to vector<56x14xf32>
    %cst_216 = arith.constant dense<0.000000e+00> : vector<14x14xf32>
    %199 = tpu.matmul %160, %198, %cst_216 {dimension_numbers = #tpu.dot_dimension_numbers<[1], [0], [0], [1], [0, 0, 1, 1], [], []>} : vector<14x56xf32>, vector<56x14xf32>, vector<14x14xf32> -> vector<14x14xf32>
    %cst_217 = arith.constant dense<0.000000e+00> : vector<84x14xf32>
    %200 = tpu.matmul %196, %199, %cst_217 {dimension_numbers = #tpu.dot_dimension_numbers<[1], [0], [0], [1], [0, 0, 1, 1], [], []>} : vector<84x14xf32>, vector<14x14xf32>, vector<84x14xf32> -> vector<84x14xf32>
    %201 = arith.addf %194, %200 : vector<84x14xf32>
    %c0_218 = arith.constant 0 : index
    %c0_219 = arith.constant 0 : index
    %202 = vector.load %arg24[%c0_218, %c0_219] : memref<84x1xf32, #tpu.memory_space<vmem>>, vector<84x1xf32>
    %203 = vector.broadcast %202 : vector<84x1xf32> to vector<84x14xf32>
    %204 = arith.addf %201, %203 : vector<84x14xf32>
    %205 = arith.negf %204 : vector<84x14xf32>
    %206 = math.exp %205 : vector<84x14xf32>
    %cst_220 = arith.constant 1.000000e+00 : f32
    %207 = vector.broadcast %cst_220 : f32 to vector<84x14xf32>
    %208 = arith.addf %207, %206 : vector<84x14xf32>
    %209 = arith.divf %207, %208 : vector<84x14xf32>
    %c0_221 = arith.constant 0 : index
    %c0_222 = arith.constant 0 : index
    %210 = vector.load %arg25[%c0_221, %c0_222] : memref<84x14xf32, #tpu.memory_space<vmem>>, vector<84x14xf32>
    tpu.vector_store %arg25[%c0_221, %c0_222], %209 {strides = array<i32>} : memref<84x14xf32, #tpu.memory_space<vmem>>, vector<84x14xf32>,
    return
  }
}

</mosaic_0001>

<llo_original>
// kernel: autoencoder_forward.1
$region0: #{autoencoder_forward.1}
  #allocation0 [shape = 'u32[]', space=smem, size = 0x4, offset = 0x4, fixed_abs, tag = 'smem constant byte address 0x4 - core index']
  #allocation1 [shape = 'u32[144,128]{1,0:T(1,128)}', space=vmem, size = 0x12000, scoped, tag = 'internal scratch']
  %s0 = inlined_call_operand.vmem [shape: f32[96,16], index: 0, kind: input, shape index: {}]
  %s1 = inlined_call_operand.vmem [shape: f32[6,34,96], index: 1, kind: input, shape index: {}]
  %s2 = inlined_call_operand.vmem [shape: f32[6,16,136], index: 2, kind: input, shape index: {}]
  %s3 = inlined_call_operand.vmem [shape: f32[1,136], index: 3, kind: input, shape index: {}]
  %s4 = inlined_call_operand.vmem [shape: f32[2,16,34], index: 4, kind: input, shape index: {}]
  %s5 = inlined_call_operand.vmem [shape: f32[2,136,64], index: 5, kind: input, shape index: {}]
  %s6 = inlined_call_operand.vmem [shape: f32[2,18,16], index: 6, kind: input, shape index: {}]
  %s7 = inlined_call_operand.vmem [shape: f32[2,64,144], index: 7, kind: input, shape index: {}]
  %s8 = inlined_call_operand.vmem [shape: f32[1,144], index: 8, kind: input, shape index: {}]
  %s9 = inlined_call_operand.vmem [shape: f32[2,8,18], index: 9, kind: input, shape index: {}]
  %s10 = inlined_call_operand.vmem [shape: f32[2,144,64], index: 10, kind: input, shape index: {}]
  %s11 = inlined_call_operand.vmem [shape: f32[2,10,8], index: 11, kind: input, shape index: {}]
  %s12 = inlined_call_operand.vmem [shape: f32[2,64,160], index: 12, kind: input, shape index: {}]
  %s13 = inlined_call_operand.vmem [shape: f32[1,160], index: 13, kind: input, shape index: {}]
  %s14 = inlined_call_operand.vmem [shape: f32[2,4,10], index: 14, kind: input, shape index: {}]
  %s15 = inlined_call_operand.vmem [shape: f32[2,160,64], index: 15, kind: input, shape index: {}]
  %s16 = inlined_call_operand.vmem [shape: f32[1,6,4], index: 16, kind: input, shape index: {}]
  %s17 = inlined_call_operand.vmem [shape: f32[1,64,48], index: 17, kind: input, shape index: {}]
  %s18 = inlined_call_operand.vmem [shape: f32[1,48], index: 18, kind: input, shape index: {}]
  %s19 = inlined_call_operand.vmem [shape: f32[3,14,6], index: 19, kind: input, shape index: {}]
  %s20 = inlined_call_operand.vmem [shape: f32[3,48,56], index: 20, kind: input, shape index: {}]
  %s21 = inlined_call_operand.vmem [shape: f32[1,56], index: 21, kind: input, shape index: {}]
  %s22 = inlined_call_operand.vmem [shape: f32[6,84,14], index: 22, kind: input, shape index: {}]
  %s23 = inlined_call_operand.vmem [shape: f32[6,56,14], index: 23, kind: input, shape index: {}]
  %s24 = inlined_call_operand.vmem [shape: f32[84,1], index: 24, kind: input, shape index: {}]
  %s25 = inlined_call_operand.vmem [shape: f32[84,14], index: 25, kind: output, shape index: {}]
  %s26 = sld [smem:[#allocation0]]
  $region110: #{autoencoder_forward.1} parent=0
    _
  %s28 = ssub.s32 1, %s26
  %s29 = scalar_select 0, %s28, %s26
  // Predicated region
  $region2: #{autoencoder_forward.1} parent=0 // pred_check
    _
  $region3: #{autoencoder_forward.1} parent=0 // pred_check_branch
    %31 = sbr.rel (0) target = $region5
  $region4: #{autoencoder_forward.1} parent=0 // pred_region
    _
  $region5: #{autoencoder_forward.1} parent=0 // pred_fallthru
    _
  // Predicated region
  $region6: #{autoencoder_forward.1} parent=0 // pred_check
    _
  $region7: #{autoencoder_forward.1} parent=0 // pred_check_branch
    %33 = sbr.rel (0) target = $region9
  $region8: #{autoencoder_forward.1} parent=0 // pred_region
    _
  $region9: #{autoencoder_forward.1} parent=0 // pred_fallthru
    _
  // Predicated region
  $region10: #{autoencoder_forward.1} parent=0 // pred_check
    _
  $region11: #{autoencoder_forward.1} parent=0 // pred_check_branch
    %35 = sbr.rel (0) target = $region13
  $region12: #{autoencoder_forward.1} parent=0 // pred_region
    _
  $region13: #{autoencoder_forward.1} parent=0 // pred_fallthru
    _
  // Predicated region
  $region14: #{autoencoder_forward.1} parent=0 // pred_check
    _
  $region15: #{autoencoder_forward.1} parent=0 // pred_check_branch
    %37 = sbr.rel (0) target = $region17
  $region16: #{autoencoder_forward.1} parent=0 // pred_region
    _
  $region17: #{autoencoder_forward.1} parent=0 // pred_fallthru
    _
  // Predicated region
  $region18: #{autoencoder_forward.1} parent=0 // pred_check
    _
  $region19: #{autoencoder_forward.1} parent=0 // pred_check_branch
    %39 = sbr.rel (0) target = $region21
  $region20: #{autoencoder_forward.1} parent=0 // pred_region
    _
  $region21: #{autoencoder_forward.1} parent=0 // pred_fallthru
    _
  // Predicated region
  $region22: #{autoencoder_forward.1} parent=0 // pred_check
    _
  $region23: #{autoencoder_forward.1} parent=0 // pred_check_branch
    %41 = sbr.rel (0) target = $region25
  $region24: #{autoencoder_forward.1} parent=0 // pred_region
    _
  $region25: #{autoencoder_forward.1} parent=0 // pred_fallthru
    _
  // Predicated region
  $region26: #{autoencoder_forward.1} parent=0 // pred_check
    _
  $region27: #{autoencoder_forward.1} parent=0 // pred_check_branch
    %43 = sbr.rel (0) target = $region29
  $region28: #{autoencoder_forward.1} parent=0 // pred_region
    _
  $region29: #{autoencoder_forward.1} parent=0 // pred_fallthru
    _
  // Predicated region
  $region30: #{autoencoder_forward.1} parent=0 // pred_check
    _
  $region31: #{autoencoder_forward.1} parent=0 // pred_check_branch
    %45 = sbr.rel (0) target = $region33
  $region32: #{autoencoder_forward.1} parent=0 // pred_region
    _
  $region33: #{autoencoder_forward.1} parent=0 // pred_fallthru
    _
  // Predicated region
  $region34: #{autoencoder_forward.1} parent=0 // pred_check
    _
  $region35: #{autoencoder_forward.1} parent=0 // pred_check_branch
    %47 = sbr.rel (0) target = $region37
  $region36: #{autoencoder_forward.1} parent=0 // pred_region
    _
  $region37: #{autoencoder_forward.1} parent=0 // pred_fallthru
    _
  // Predicated region
  $region38: #{autoencoder_forward.1} parent=0 // pred_check
    _
  $region39: #{autoencoder_forward.1} parent=0 // pred_check_branch
    %49 = sbr.rel (0) target = $region41
  $region40: #{autoencoder_forward.1} parent=0 // pred_region
    _
  $region41: #{autoencoder_forward.1} parent=0 // pred_fallthru
    _
  // Predicated region
  $region42: #{autoencoder_forward.1} parent=0 // pred_check
    _
  $region43: #{autoencoder_forward.1} parent=0 // pred_check_branch
    %51 = sbr.rel (0) target = $region45
  $region44: #{autoencoder_forward.1} parent=0 // pred_region
    _
  $region45: #{autoencoder_forward.1} parent=0 // pred_fallthru
    _
  // Predicated region
  $region46: #{autoencoder_forward.1} parent=0 // pred_check
    _
  $region47: #{autoencoder_forward.1} parent=0 // pred_check_branch
    %53 = sbr.rel (0) target = $region49
  $region48: #{autoencoder_forward.1} parent=0 // pred_region
    _
  $region49: #{autoencoder_forward.1} parent=0 // pred_fallthru
    _
  // Predicated region
  $region50: #{autoencoder_forward.1} parent=0 // pred_check
    _
  $region51: #{autoencoder_forward.1} parent=0 // pred_check_branch
    %55 = sbr.rel (0) target = $region53
  $region52: #{autoencoder_forward.1} parent=0 // pred_region
    _
  $region53: #{autoencoder_forward.1} parent=0 // pred_fallthru
    _
  // Predicated region
  $region54: #{autoencoder_forward.1} parent=0 // pred_check
    _
  $region55: #{autoencoder_forward.1} parent=0 // pred_check_branch
    %57 = sbr.rel (0) target = $region57
  $region56: #{autoencoder_forward.1} parent=0 // pred_region
    _
  $region57: #{autoencoder_forward.1} parent=0 // pred_fallthru
    _
  // Predicated region
  $region58: #{autoencoder_forward.1} parent=0 // pred_check
    _
  $region59: #{autoencoder_forward.1} parent=0 // pred_check_branch
    %59 = sbr.rel (0) target = $region61
  $region60: #{autoencoder_forward.1} parent=0 // pred_region
    _
  $region61: #{autoencoder_forward.1} parent=0 // pred_fallthru
    _
  // Predicated region
  $region62: #{autoencoder_forward.1} parent=0 // pred_check
    _
  $region63: #{autoencoder_forward.1} parent=0 // pred_check_branch
    %61 = sbr.rel (0) target = $region65
  $region64: #{autoencoder_forward.1} parent=0 // pred_region
    _
  $region65: #{autoencoder_forward.1} parent=0 // pred_fallthru
    _
  // Predicated region
  $region66: #{autoencoder_forward.1} parent=0 // pred_check
    _
  $region67: #{autoencoder_forward.1} parent=0 // pred_check_branch
    %63 = sbr.rel (0) target = $region69
  $region68: #{autoencoder_forward.1} parent=0 // pred_region
    _
  $region69: #{autoencoder_forward.1} parent=0 // pred_fallthru
    _
  // Predicated region
  $region70: #{autoencoder_forward.1} parent=0 // pred_check
    _
  $region71: #{autoencoder_forward.1} parent=0 // pred_check_branch
    %65 = sbr.rel (0) target = $region73
  $region72: #{autoencoder_forward.1} parent=0 // pred_region
    _
  $region73: #{autoencoder_forward.1} parent=0 // pred_fallthru
    _
  // Predicated region
  $region74: #{autoencoder_forward.1} parent=0 // pred_check
    _
  $region75: #{autoencoder_forward.1} parent=0 // pred_check_branch
    %67 = sbr.rel (0) target = $region77
  $region76: #{autoencoder_forward.1} parent=0 // pred_region
    _
  $region77: #{autoencoder_forward.1} parent=0 // pred_fallthru
    _
  // Predicated region
  $region78: #{autoencoder_forward.1} parent=0 // pred_check
    _
  $region79: #{autoencoder_forward.1} parent=0 // pred_check_branch
    %69 = sbr.rel (0) target = $region81
  $region80: #{autoencoder_forward.1} parent=0 // pred_region
    _
  $region81: #{autoencoder_forward.1} parent=0 // pred_fallthru
    _
  // Predicated region
  $region82: #{autoencoder_forward.1} parent=0 // pred_check
    _
  $region83: #{autoencoder_forward.1} parent=0 // pred_check_branch
    %71 = sbr.rel (0) target = $region85
  $region84: #{autoencoder_forward.1} parent=0 // pred_region
    _
  $region85: #{autoencoder_forward.1} parent=0 // pred_fallthru
    _
  // Predicated region
  $region86: #{autoencoder_forward.1} parent=0 // pred_check
    _
  $region87: #{autoencoder_forward.1} parent=0 // pred_check_branch
    %73 = sbr.rel (0) target = $region89
  $region88: #{autoencoder_forward.1} parent=0 // pred_region
    _
  $region89: #{autoencoder_forward.1} parent=0 // pred_fallthru
    _
  // Predicated region
  $region90: #{autoencoder_forward.1} parent=0 // pred_check
    _
  $region91: #{autoencoder_forward.1} parent=0 // pred_check_branch
    %75 = sbr.rel (0) target = $region93
  $region92: #{autoencoder_forward.1} parent=0 // pred_region
    _
  $region93: #{autoencoder_forward.1} parent=0 // pred_fallthru
    _
  // Predicated region
  $region94: #{autoencoder_forward.1} parent=0 // pred_check
    _
  $region95: #{autoencoder_forward.1} parent=0 // pred_check_branch
    %77 = sbr.rel (0) target = $region97
  $region96: #{autoencoder_forward.1} parent=0 // pred_region
    _
  $region97: #{autoencoder_forward.1} parent=0 // pred_fallthru
    _
  // Predicated region
  $region98: #{autoencoder_forward.1} parent=0 // pred_check
    _
  $region99: #{autoencoder_forward.1} parent=0 // pred_check_branch
    %79 = sbr.rel (0) target = $region101
  $region100: #{autoencoder_forward.1} parent=0 // pred_region
    _
  $region101: #{autoencoder_forward.1} parent=0 // pred_fallthru
    _
  %v80 = vld [vmem:[%s0] sm:$0xff]
  %v81 = vld [vmem:[%s0 + $0x8] sm:$0xff]
  %v82 = vld [vmem:[%s0 + $0x10] sm:$0xff]
  %v83 = vld [vmem:[%s0 + $0x18] sm:$0xff]
  %v84 = vld [vmem:[%s0 + $0x20] sm:$0xff]
  %v85 = vld [vmem:[%s0 + $0x28] sm:$0xff]
  %v86 = vld [vmem:[%s0 + $0x30] sm:$0xff]
  %v87 = vld [vmem:[%s0 + $0x38] sm:$0xff]
  %v88 = vld [vmem:[%s0 + $0x40] sm:$0xff]
  %v89 = vld [vmem:[%s0 + $0x48] sm:$0xff]
  %v90 = vld [vmem:[%s0 + $0x50] sm:$0xff]
  %v91 = vld [vmem:[%s0 + $0x58] sm:$0xff]
  %v92 = vld [vmem:[%s1] sm:$0xff]
  %v93 = vld [vmem:[%s1 + $0x8] sm:$0xff]
  %v94 = vld [vmem:[%s1 + $0x10] sm:$0xff]
  %v95 = vld [vmem:[%s1 + $0x18] sm:$0xff]
  %v96 = vld [vmem:[%s1 + $0x20] sm:$0x3]
  %vm97 = vcmask 785408
  %v99 = vsel %vm97, %v92, 0
  %v102 = vsel %vm97, %v93, 0
  %v105 = vsel %vm97, %v94, 0
  %v108 = vsel %vm97, %v95, 0
  %v111 = vsel %vm97, %v96, 0
  %113 = vmatprep.subr.mxu0 0.0
  %114 = vmatpush1.msra.mxu0 0.0
  %115 = vmatprep.subr.mxu0 0.0
  %116 = vmatpush1.msra.mxu0 0.0
  %117 = vmatprep.subr.mxu0 0.0
  %118 = vmatpush1.msra.mxu0 0.0
  %119 = vmatprep.subr.mxu0 0.0
  %120 = vmatpush1.msra.mxu0 0.0
  %121 = vmatprep.subr.mxu0 0.0
  %122 = vmatpush1.msra.mxu0 %v91
  %123 = vmatprep.subr.mxu0 0.0
  %124 = vmatpush1.msra.mxu0 %v90
  %125 = vmatprep.subr.mxu0 0.0
  %126 = vmatpush1.msra.mxu0 %v89
  %127 = vmatprep.subr.mxu0 0.0
  %128 = vmatpush1.msra.mxu0 %v88
  %129 = vmatprep.subr.mxu0 0.0
  %130 = vmatpush1.msra.mxu0 %v87
  %131 = vmatprep.subr.mxu0 0.0
  %132 = vmatpush1.msra.mxu0 %v86
  %133 = vmatprep.subr.mxu0 0.0
  %134 = vmatpush1.msra.mxu0 %v85
  %135 = vmatprep.subr.mxu0 0.0
  %136 = vmatpush1.msra.mxu0 %v84
  %137 = vmatprep.subr.mxu0 0.0
  %138 = vmatpush1.msra.mxu0 %v83
  %139 = vmatprep.subr.mxu0 0.0
  %140 = vmatpush1.msra.mxu0 %v82
  %141 = vmatprep.subr.mxu0 0.0
  %142 = vmatpush1.msra.mxu0 %v81
  %143 = vmatprep.subr.mxu0 0.0
  %144 = vmatpush1.msra.mxu0 %v80
  %145 = vmatprep.subr.mxu0 0.0
  %146 = vmatpush2.msra.mxu0 0.0
  %147 = vmatprep.subr.mxu0 0.0
  %148 = vmatpush2.msra.mxu0 0.0
  %149 = vmatprep.subr.mxu0 0.0
  %150 = vmatpush2.msra.mxu0 0.0
  %151 = vmatprep.subr.mxu0 0.0
  %152 = vmatpush2.msra.mxu0 0.0
  %153 = vmatprep.subr.mxu0 0.0
  %154 = vmatpush2.msra.mxu0 0.0
  %155 = vmatprep.subr.mxu0 0.0
  %156 = vmatpush2.msra.mxu0 0.0
  %157 = vmatprep.subr.mxu0 0.0
  %158 = vmatpush2.msra.mxu0 0.0
  %159 = vmatprep.subr.mxu0 0.0
  %160 = vmatpush2.msra.mxu0 0.0
  %161 = vmatprep.subr.mxu0 0.0
  %162 = vmatpush2.msra.mxu0 0.0
  %163 = vmatprep.subr.mxu0 0.0
  %164 = vmatpush2.msra.mxu0 0.0
  %165 = vmatprep.subr.mxu0 0.0
  %166 = vmatpush2.msra.mxu0 0.0
  %167 = vmatprep.subr.mxu0 0.0
  %168 = vmatpush2.msra.mxu0 0.0
  %169 = vmatprep.subr.mxu0 0.0
  %170 = vmatpush2.msra.mxu0 0.0
  %171 = vmatprep.subr.mxu0 0.0
  %172 = vmatpush2.msra.mxu0 0.0
  %173 = vmatprep.subr.mxu0 0.0
  %174 = vmatpush2.msra.mxu0 0.0
  %175 = vmatprep.subr.mxu0 0.0
  %176 = vmatpush2.msra.mxu0 0.0
  %177 = vmatprep.mubr.f32.mxu0 0.0
  %178 = vmatmul.mubr.f32.gmra.mxu0 %v99
  %v179 = vpop.f32.mrf.mxu0
  %v180 = vadd.f32 0.0, %v179
  %v181 = vpop.f32.mrf.mxu0
  %182 = vmatprep.mubr.f32.mxu0 0.0
  %183 = vmatmul.mubr.f32.gmra.mxu0 %v102
  %v184 = vpop.f32.mrf.mxu0
  %v185 = vadd.f32 0.0, %v184
  %v186 = vpop.f32.mrf.mxu0
  %187 = vmatprep.mubr.f32.mxu0 0.0
  %188 = vmatmul.mubr.f32.gmra.mxu0 %v105
  %v189 = vpop.f32.mrf.mxu0
  %v190 = vadd.f32 0.0, %v189
  %v191 = vpop.f32.mrf.mxu0
  %192 = vmatprep.mubr.f32.mxu0 0.0
  %193 = vmatmul.mubr.f32.gmra.mxu0 %v108
  %v194 = vpop.f32.mrf.mxu0
  %v195 = vadd.f32 0.0, %v194
  %v196 = vpop.f32.mrf.mxu0
  %197 = vmatprep.mubr.f32.mxu0 0.0
  %198 = vmatmul.mubr.f32.gmra.mxu0 %v111
  %v199 = vpop.f32.mrf.mxu0
  %v200 = vadd.f32 0.0, %v199
  %v201 = vpop.f32.mrf.mxu0
  %202 = vdwg.mxu0
  %v203 = vld [vmem:[%s2] sm:$0xff]
  %v204 = vld [vmem:[%s2 + $0x8] sm:$0xff]
  %v205 = vld [vmem:[%s2 + $0x10] sm:$0xff]
  %v206 = vld [vmem:[%s2 + $0x18] sm:$0xff]
  %s207 = scalar_lea.vmem %s1, 40
  %v208 = vld [vmem:[%s207] sm:$0xff]
  %v209 = vld [vmem:[%s207 + $0x8] sm:$0xff]
  %v210 = vld [vmem:[%s207 + $0x10] sm:$0xff]
  %v211 = vld [vmem:[%s207 + $0x18] sm:$0xff]
  %v212 = vld [vmem:[%s207 + $0x20] sm:$0x3]
  %v214 = vsel %vm97, %v208, 0
  %v217 = vsel %vm97, %v209, 0
  %v220 = vsel %vm97, %v210, 0
  %v223 = vsel %vm97, %v211, 0
  %v226 = vsel %vm97, %v212, 0
  %228 = vmatprep.subr.mxu0 0.0
  %229 = vmatpush1.msra.mxu0 0.0
  %230 = vmatprep.subr.mxu0 0.0
  %231 = vmatpush1.msra.mxu0 0.0
  %232 = vmatprep.subr.mxu0 0.0
  %233 = vmatpush1.msra.mxu0 0.0
  %234 = vmatprep.subr.mxu0 0.0
  %235 = vmatpush1.msra.mxu0 0.0
  %236 = vmatprep.subr.mxu0 0.0
  %237 = vmatpush1.msra.mxu0 %v91
  %238 = vmatprep.subr.mxu0 0.0
  %239 = vmatpush1.msra.mxu0 %v90
  %240 = vmatprep.subr.mxu0 0.0
  %241 = vmatpush1.msra.mxu0 %v89
  %242 = vmatprep.subr.mxu0 0.0
  %243 = vmatpush1.msra.mxu0 %v88
  %244 = vmatprep.subr.mxu0 0.0
  %245 = vmatpush1.msra.mxu0 %v87
  %246 = vmatprep.subr.mxu0 0.0
  %247 = vmatpush1.msra.mxu0 %v86
  %248 = vmatprep.subr.mxu0 0.0
  %249 = vmatpush1.msra.mxu0 %v85
  %250 = vmatprep.subr.mxu0 0.0
  %251 = vmatpush1.msra.mxu0 %v84
  %252 = vmatprep.subr.mxu0 0.0
  %253 = vmatpush1.msra.mxu0 %v83
  %254 = vmatprep.subr.mxu0 0.0
  %255 = vmatpush1.msra.mxu0 %v82
  %256 = vmatprep.subr.mxu0 0.0
  %257 = vmatpush1.msra.mxu0 %v81
  %258 = vmatprep.subr.mxu0 0.0
  %259 = vmatpush1.msra.mxu0 %v80
  %260 = vmatprep.subr.mxu0 0.0
  %261 = vmatpush2.msra.mxu0 0.0
  %262 = vmatprep.subr.mxu0 0.0
  %263 = vmatpush2.msra.mxu0 0.0
  %264 = vmatprep.subr.mxu0 0.0
  %265 = vmatpush2.msra.mxu0 0.0
  %266 = vmatprep.subr.mxu0 0.0
  %267 = vmatpush2.msra.mxu0 0.0
  %268 = vmatprep.subr.mxu0 0.0
  %269 = vmatpush2.msra.mxu0 0.0
  %270 = vmatprep.subr.mxu0 0.0
  %271 = vmatpush2.msra.mxu0 0.0
  %272 = vmatprep.subr.mxu0 0.0
  %273 = vmatpush2.msra.mxu0 0.0
  %274 = vmatprep.subr.mxu0 0.0
  %275 = vmatpush2.msra.mxu0 0.0
  %276 = vmatprep.subr.mxu0 0.0
  %277 = vmatpush2.msra.mxu0 0.0
  %278 = vmatprep.subr.mxu0 0.0
  %279 = vmatpush2.msra.mxu0 0.0
  %280 = vmatprep.subr.mxu0 0.0
  %281 = vmatpush2.msra.mxu0 0.0
  %282 = vmatprep.subr.mxu0 0.0
  %283 = vmatpush2.msra.mxu0 0.0
  %284 = vmatprep.subr.mxu0 0.0
  %285 = vmatpush2.msra.mxu0 0.0
  %286 = vmatprep.subr.mxu0 0.0
  %287 = vmatpush2.msra.mxu0 0.0
  %288 = vmatprep.subr.mxu0 0.0
  %289 = vmatpush2.msra.mxu0 0.0
  %290 = vmatprep.subr.mxu0 0.0
  %291 = vmatpush2.msra.mxu0 0.0
  %292 = vmatprep.mubr.f32.mxu0 0.0
  %293 = vmatmul.mubr.f32.gmra.mxu0 %v214
  %v294 = vpop.f32.mrf.mxu0
  %v295 = vadd.f32 0.0, %v294
  %v296 = vpop.f32.mrf.mxu0
  %297 = vmatprep.mubr.f32.mxu0 0.0
  %298 = vmatmul.mubr.f32.gmra.mxu0 %v217
  %v299 = vpop.f32.mrf.mxu0
  %v300 = vadd.f32 0.0, %v299
  %v301 = vpop.f32.mrf.mxu0
  %302 = vmatprep.mubr.f32.mxu0 0.0
  %303 = vmatmul.mubr.f32.gmra.mxu0 %v220
  %v304 = vpop.f32.mrf.mxu0
  %v305 = vadd.f32 0.0, %v304
  %v306 = vpop.f32.mrf.mxu0
  %307 = vmatprep.mubr.f32.mxu0 0.0
  %308 = vmatmul.mubr.f32.gmra.mxu0 %v223
  %v309 = vpop.f32.mrf.mxu0
  %v310 = vadd.f32 0.0, %v309
  %v311 = vpop.f32.mrf.mxu0
  %312 = vmatprep.mubr.f32.mxu0 0.0
  %313 = vmatmul.mubr.f32.gmra.mxu0 %v226
  %v314 = vpop.f32.mrf.mxu0
  %v315 = vadd.f32 0.0, %v314
  %v316 = vpop.f32.mrf.mxu0
  %317 = vdwg.mxu0
  %s318 = scalar_lea.vmem %s2, 32
  %v319 = vld [vmem:[%s318] sm:$0xff]
  %v320 = vld [vmem:[%s318 + $0x8] sm:$0xff]
  %v321 = vld [vmem:[%s318 + $0x10] sm:$0xff]
  %v322 = vld [vmem:[%s318 + $0x18] sm:$0xff]
  %vm323 = vcmask 130048
  %v325 = vsel %vm323, %v295, 0
  %v328 = vsel %vm323, %v300, 0
  %v331 = vsel %vm323, %v305, 0
  %v334 = vsel %vm323, %v310, 0
  %v337 = vsel %vm323, %v315, 0
  %339 = vmatprep.subr.mxu0 0.0
  %340 = vmatpush1.msra.mxu0 0.0
  %341 = vmatprep.subr.mxu0 0.0
  %342 = vmatpush1.msra.mxu0 0.0
  %343 = vmatprep.subr.mxu0 0.0
  %344 = vmatpush1.msra.mxu0 0.0
  %345 = vmatprep.subr.mxu0 0.0
  %346 = vmatpush1.msra.mxu0 0.0
  %347 = vmatprep.subr.mxu0 0.0
  %348 = vmatpush1.msra.mxu0 0.0
  %349 = vmatprep.subr.mxu0 0.0
  %350 = vmatpush1.msra.mxu0 0.0
  %351 = vmatprep.subr.mxu0 0.0
  %352 = vmatpush1.msra.mxu0 0.0
  %353 = vmatprep.subr.mxu0 0.0
  %354 = vmatpush1.msra.mxu0 0.0
  %355 = vmatprep.subr.mxu0 0.0
  %356 = vmatpush1.msra.mxu0 0.0
  %357 = vmatprep.subr.mxu0 0.0
  %358 = vmatpush1.msra.mxu0 0.0
  %359 = vmatprep.subr.mxu0 0.0
  %360 = vmatpush1.msra.mxu0 0.0
  %361 = vmatprep.subr.mxu0 0.0
  %362 = vmatpush1.msra.mxu0 0.0
  %363 = vmatprep.subr.mxu0 0.0
  %364 = vmatpush1.msra.mxu0 0.0
  %365 = vmatprep.subr.mxu0 0.0
  %366 = vmatpush1.msra.mxu0 0.0
  %367 = vmatprep.subr.mxu0 %v322
  %368 = vmatpush1.msra.mxu0 %v321
  %369 = vmatprep.subr.mxu0 %v320
  %370 = vmatpush1.msra.mxu0 %v319
  %371 = vmatprep.subr.mxu0 0.0
  %372 = vmatpush2.msra.mxu0 0.0
  %373 = vmatprep.subr.mxu0 0.0
  %374 = vmatpush2.msra.mxu0 0.0
  %375 = vmatprep.subr.mxu0 0.0
  %376 = vmatpush2.msra.mxu0 0.0
  %377 = vmatprep.subr.mxu0 0.0
  %378 = vmatpush2.msra.mxu0 0.0
  %379 = vmatprep.subr.mxu0 0.0
  %380 = vmatpush2.msra.mxu0 0.0
  %381 = vmatprep.subr.mxu0 0.0
  %382 = vmatpush2.msra.mxu0 0.0
  %383 = vmatprep.subr.mxu0 0.0
  %384 = vmatpush2.msra.mxu0 0.0
  %385 = vmatprep.subr.mxu0 0.0
  %386 = vmatpush2.msra.mxu0 0.0
  %387 = vmatprep.subr.mxu0 0.0
  %388 = vmatpush2.msra.mxu0 0.0
  %389 = vmatprep.subr.mxu0 0.0
  %390 = vmatpush2.msra.mxu0 0.0
  %391 = vmatprep.subr.mxu0 0.0
  %392 = vmatpush2.msra.mxu0 0.0
  %393 = vmatprep.subr.mxu0 0.0
  %394 = vmatpush2.msra.mxu0 0.0
  %395 = vmatprep.subr.mxu0 0.0
  %396 = vmatpush2.msra.mxu0 0.0
  %397 = vmatprep.subr.mxu0 0.0
  %398 = vmatpush2.msra.mxu0 0.0
  %399 = vmatprep.subr.mxu0 0.0
  %400 = vmatpush2.msra.mxu0 0.0
  %401 = vmatprep.subr.mxu0 0.0
  %402 = vmatpush2.msra.mxu0 0.0
  %403 = vmatprep.mubr.f32.mxu0 0.0
  %404 = vmatmul.mubr.f32.gmra.mxu0 %v325
  %v405 = vpop.f32.mrf.mxu0
  %v406 = vadd.f32 0.0, %v405
  %v407 = vpop.f32.mrf.mxu0
  %v408 = vadd.f32 0.0, %v407
  %409 = vmatprep.mubr.f32.mxu0 0.0
  %410 = vmatmul.mubr.f32.gmra.mxu0 %v328
  %v411 = vpop.f32.mrf.mxu0
  %v412 = vadd.f32 0.0, %v411
  %v413 = vpop.f32.mrf.mxu0
  %v414 = vadd.f32 0.0, %v413
  %415 = vmatprep.mubr.f32.mxu0 0.0
  %416 = vmatmul.mubr.f32.gmra.mxu0 %v331
  %v417 = vpop.f32.mrf.mxu0
  %v418 = vadd.f32 0.0, %v417
  %v419 = vpop.f32.mrf.mxu0
  %v420 = vadd.f32 0.0, %v419
  %421 = vmatprep.mubr.f32.mxu0 0.0
  %422 = vmatmul.mubr.f32.gmra.mxu0 %v334
  %v423 = vpop.f32.mrf.mxu0
  %v424 = vadd.f32 0.0, %v423
  %v425 = vpop.f32.mrf.mxu0
  %v426 = vadd.f32 0.0, %v425
  %427 = vmatprep.mubr.f32.mxu0 0.0
  %428 = vmatmul.mubr.f32.gmra.mxu0 %v337
  %v429 = vpop.f32.mrf.mxu0
  %v430 = vadd.f32 0.0, %v429
  %v431 = vpop.f32.mrf.mxu0
  %v432 = vadd.f32 0.0, %v431
  %433 = vdwg.mxu0
  %v435 = vsel %vm323, %v180, 0
  %v438 = vsel %vm323, %v185, 0
  %v441 = vsel %vm323, %v190, 0
  %v444 = vsel %vm323, %v195, 0
  %v447 = vsel %vm323, %v200, 0
  %449 = vmatprep.subr.mxu0 0.0
  %450 = vmatpush1.msra.mxu0 0.0
  %451 = vmatprep.subr.mxu0 0.0
  %452 = vmatpush1.msra.mxu0 0.0
  %453 = vmatprep.subr.mxu0 0.0
  %454 = vmatpush1.msra.mxu0 0.0
  %455 = vmatprep.subr.mxu0 0.0
  %456 = vmatpush1.msra.mxu0 0.0
  %457 = vmatprep.subr.mxu0 0.0
  %458 = vmatpush1.msra.mxu0 0.0
  %459 = vmatprep.subr.mxu0 0.0
  %460 = vmatpush1.msra.mxu0 0.0
  %461 = vmatprep.subr.mxu0 0.0
  %462 = vmatpush1.msra.mxu0 0.0
  %463 = vmatprep.subr.mxu0 0.0
  %464 = vmatpush1.msra.mxu0 0.0
  %465 = vmatprep.subr.mxu0 0.0
  %466 = vmatpush1.msra.mxu0 0.0
  %467 = vmatprep.subr.mxu0 0.0
  %468 = vmatpush1.msra.mxu0 0.0
  %469 = vmatprep.subr.mxu0 0.0
  %470 = vmatpush1.msra.mxu0 0.0
  %471 = vmatprep.subr.mxu0 0.0
  %472 = vmatpush1.msra.mxu0 0.0
  %473 = vmatprep.subr.mxu0 0.0
  %474 = vmatpush1.msra.mxu0 0.0
  %475 = vmatprep.subr.mxu0 0.0
  %476 = vmatpush1.msra.mxu0 0.0
  %477 = vmatprep.subr.mxu0 %v206
  %478 = vmatpush1.msra.mxu0 %v205
  %479 = vmatprep.subr.mxu0 %v204
  %480 = vmatpush1.msra.mxu0 %v203
  %481 = vmatprep.subr.mxu0 0.0
  %482 = vmatpush2.msra.mxu0 0.0
  %483 = vmatprep.subr.mxu0 0.0
  %484 = vmatpush2.msra.mxu0 0.0
  %485 = vmatprep.subr.mxu0 0.0
  %486 = vmatpush2.msra.mxu0 0.0
  %487 = vmatprep.subr.mxu0 0.0
  %488 = vmatpush2.msra.mxu0 0.0
  %489 = vmatprep.subr.mxu0 0.0
  %490 = vmatpush2.msra.mxu0 0.0
  %491 = vmatprep.subr.mxu0 0.0
  %492 = vmatpush2.msra.mxu0 0.0
  %493 = vmatprep.subr.mxu0 0.0
  %494 = vmatpush2.msra.mxu0 0.0
  %495 = vmatprep.subr.mxu0 0.0
  %496 = vmatpush2.msra.mxu0 0.0
  %497 = vmatprep.subr.mxu0 0.0
  %498 = vmatpush2.msra.mxu0 0.0
  %499 = vmatprep.subr.mxu0 0.0
  %500 = vmatpush2.msra.mxu0 0.0
  %501 = vmatprep.subr.mxu0 0.0
  %502 = vmatpush2.msra.mxu0 0.0
  %503 = vmatprep.subr.mxu0 0.0
  %504 = vmatpush2.msra.mxu0 0.0
  %505 = vmatprep.subr.mxu0 0.0
  %506 = vmatpush2.msra.mxu0 0.0
  %507 = vmatprep.subr.mxu0 0.0
  %508 = vmatpush2.msra.mxu0 0.0
  %509 = vmatprep.subr.mxu0 0.0
  %510 = vmatpush2.msra.mxu0 0.0
  %511 = vmatprep.subr.mxu0 0.0
  %512 = vmatpush2.msra.mxu0 0.0
  %513 = vmatprep.mubr.f32.mxu0 0.0
  %514 = vmatmul.mubr.f32.gmra.mxu0 %v435
  %v515 = vpop.f32.mrf.mxu0
  %v516 = vadd.f32 %v406, %v515
  %v517 = vpop.f32.mrf.mxu0
  %v518 = vadd.f32 %v408, %v517
  %519 = vmatprep.mubr.f32.mxu0 0.0
  %520 = vmatmul.mubr.f32.gmra.mxu0 %v438
  %v521 = vpop.f32.mrf.mxu0
  %v522 = vadd.f32 %v412, %v521
  %v523 = vpop.f32.mrf.mxu0
  %v524 = vadd.f32 %v414, %v523
  %525 = vmatprep.mubr.f32.mxu0 0.0
  %526 = vmatmul.mubr.f32.gmra.mxu0 %v441
  %v527 = vpop.f32.mrf.mxu0
  %v528 = vadd.f32 %v418, %v527
  %v529 = vpop.f32.mrf.mxu0
  %v530 = vadd.f32 %v420, %v529
  %531 = vmatprep.mubr.f32.mxu0 0.0
  %532 = vmatmul.mubr.f32.gmra.mxu0 %v444
  %v533 = vpop.f32.mrf.mxu0
  %v534 = vadd.f32 %v424, %v533
  %v535 = vpop.f32.mrf.mxu0
  %v536 = vadd.f32 %v426, %v535
  %537 = vmatprep.mubr.f32.mxu0 0.0
  %538 = vmatmul.mubr.f32.gmra.mxu0 %v447
  %v539 = vpop.f32.mrf.mxu0
  %v540 = vadd.f32 %v430, %v539
  %v541 = vpop.f32.mrf.mxu0
  %v542 = vadd.f32 %v432, %v541
  %543 = vdwg.mxu0
  %s544 = scalar_lea.vmem %s1, 80
  %v545 = vld [vmem:[%s544] sm:$0xff]
  %v546 = vld [vmem:[%s544 + $0x8] sm:$0xff]
  %v547 = vld [vmem:[%s544 + $0x10] sm:$0xff]
  %v548 = vld [vmem:[%s544 + $0x18] sm:$0xff]
  %v549 = vld [vmem:[%s544 + $0x20] sm:$0x3]
  %v551 = vsel %vm97, %v545, 0
  %v554 = vsel %vm97, %v546, 0
  %v557 = vsel %vm97, %v547, 0
  %v560 = vsel %vm97, %v548, 0
  %v563 = vsel %vm97, %v549, 0
  %565 = vmatprep.subr.mxu0 0.0
  %566 = vmatpush1.msra.mxu0 0.0
  %567 = vmatprep.subr.mxu0 0.0
  %568 = vmatpush1.msra.mxu0 0.0
  %569 = vmatprep.subr.mxu0 0.0
  %570 = vmatpush1.msra.mxu0 0.0
  %571 = vmatprep.subr.mxu0 0.0
  %572 = vmatpush1.msra.mxu0 0.0
  %573 = vmatprep.subr.mxu0 0.0
  %574 = vmatpush1.msra.mxu0 %v91
  %575 = vmatprep.subr.mxu0 0.0
  %576 = vmatpush1.msra.mxu0 %v90
  %577 = vmatprep.subr.mxu0 0.0
  %578 = vmatpush1.msra.mxu0 %v89
  %579 = vmatprep.subr.mxu0 0.0
  %580 = vmatpush1.msra.mxu0 %v88
  %581 = vmatprep.subr.mxu0 0.0
  %582 = vmatpush1.msra.mxu0 %v87
  %583 = vmatprep.subr.mxu0 0.0
  %584 = vmatpush1.msra.mxu0 %v86
  %585 = vmatprep.subr.mxu0 0.0
  %586 = vmatpush1.msra.mxu0 %v85
  %587 = vmatprep.subr.mxu0 0.0
  %588 = vmatpush1.msra.mxu0 %v84
  %589 = vmatprep.subr.mxu0 0.0
  %590 = vmatpush1.msra.mxu0 %v83
  %591 = vmatprep.subr.mxu0 0.0
  %592 = vmatpush1.msra.mxu0 %v82
  %593 = vmatprep.subr.mxu0 0.0
  %594 = vmatpush1.msra.mxu0 %v81
  %595 = vmatprep.subr.mxu0 0.0
  %596 = vmatpush1.msra.mxu0 %v80
  %597 = vmatprep.subr.mxu0 0.0
  %598 = vmatpush2.msra.mxu0 0.0
  %599 = vmatprep.subr.mxu0 0.0
  %600 = vmatpush2.msra.mxu0 0.0
  %601 = vmatprep.subr.mxu0 0.0
  %602 = vmatpush2.msra.mxu0 0.0
  %603 = vmatprep.subr.mxu0 0.0
  %604 = vmatpush2.msra.mxu0 0.0
  %605 = vmatprep.subr.mxu0 0.0
  %606 = vmatpush2.msra.mxu0 0.0
  %607 = vmatprep.subr.mxu0 0.0
  %608 = vmatpush2.msra.mxu0 0.0
  %609 = vmatprep.subr.mxu0 0.0
  %610 = vmatpush2.msra.mxu0 0.0
  %611 = vmatprep.subr.mxu0 0.0
  %612 = vmatpush2.msra.mxu0 0.0
  %613 = vmatprep.subr.mxu0 0.0
  %614 = vmatpush2.msra.mxu0 0.0
  %615 = vmatprep.subr.mxu0 0.0
  %616 = vmatpush2.msra.mxu0 0.0
  %617 = vmatprep.subr.mxu0 0.0
  %618 = vmatpush2.msra.mxu0 0.0
  %619 = vmatprep.subr.mxu0 0.0
  %620 = vmatpush2.msra.mxu0 0.0
  %621 = vmatprep.subr.mxu0 0.0
  %622 = vmatpush2.msra.mxu0 0.0
  %623 = vmatprep.subr.mxu0 0.0
  %624 = vmatpush2.msra.mxu0 0.0
  %625 = vmatprep.subr.mxu0 0.0
  %626 = vmatpush2.msra.mxu0 0.0
  %627 = vmatprep.subr.mxu0 0.0
  %628 = vmatpush2.msra.mxu0 0.0
  %629 = vmatprep.mubr.f32.mxu0 0.0
  %630 = vmatmul.mubr.f32.gmra.mxu0 %v551
  %v631 = vpop.f32.mrf.mxu0
  %v632 = vadd.f32 0.0, %v631
  %v633 = vpop.f32.mrf.mxu0
  %634 = vmatprep.mubr.f32.mxu0 0.0
  %635 = vmatmul.mubr.f32.gmra.mxu0 %v554
  %v636 = vpop.f32.mrf.mxu0
  %v637 = vadd.f32 0.0, %v636
  %v638 = vpop.f32.mrf.mxu0
  %639 = vmatprep.mubr.f32.mxu0 0.0
  %640 = vmatmul.mubr.f32.gmra.mxu0 %v557
  %v641 = vpop.f32.mrf.mxu0
  %v642 = vadd.f32 0.0, %v641
  %v643 = vpop.f32.mrf.mxu0
  %644 = vmatprep.mubr.f32.mxu0 0.0
  %645 = vmatmul.mubr.f32.gmra.mxu0 %v560
  %v646 = vpop.f32.mrf.mxu0
  %v647 = vadd.f32 0.0, %v646
  %v648 = vpop.f32.mrf.mxu0
  %649 = vmatprep.mubr.f32.mxu0 0.0
  %650 = vmatmul.mubr.f32.gmra.mxu0 %v563
  %v651 = vpop.f32.mrf.mxu0
  %v652 = vadd.f32 0.0, %v651
  %v653 = vpop.f32.mrf.mxu0
  %654 = vdwg.mxu0
  %s655 = scalar_lea.vmem %s2, 64
  %v656 = vld [vmem:[%s655] sm:$0xff]
  %v657 = vld [vmem:[%s655 + $0x8] sm:$0xff]
  %v658 = vld [vmem:[%s655 + $0x10] sm:$0xff]
  %v659 = vld [vmem:[%s655 + $0x18] sm:$0xff]
  %v661 = vsel %vm323, %v632, 0
  %v664 = vsel %vm323, %v637, 0
  %v667 = vsel %vm323, %v642, 0
  %v670 = vsel %vm323, %v647, 0
  %v673 = vsel %vm323, %v652, 0
  %675 = vmatprep.subr.mxu0 0.0
  %676 = vmatpush1.msra.mxu0 0.0
  %677 = vmatprep.subr.mxu0 0.0
  %678 = vmatpush1.msra.mxu0 0.0
  %679 = vmatprep.subr.mxu0 0.0
  %680 = vmatpush1.msra.mxu0 0.0
  %681 = vmatprep.subr.mxu0 0.0
  %682 = vmatpush1.msra.mxu0 0.0
  %683 = vmatprep.subr.mxu0 0.0
  %684 = vmatpush1.msra.mxu0 0.0
  %685 = vmatprep.subr.mxu0 0.0
  %686 = vmatpush1.msra.mxu0 0.0
  %687 = vmatprep.subr.mxu0 0.0
  %688 = vmatpush1.msra.mxu0 0.0
  %689 = vmatprep.subr.mxu0 0.0
  %690 = vmatpush1.msra.mxu0 0.0
  %691 = vmatprep.subr.mxu0 0.0
  %692 = vmatpush1.msra.mxu0 0.0
  %693 = vmatprep.subr.mxu0 0.0
  %694 = vmatpush1.msra.mxu0 0.0
  %695 = vmatprep.subr.mxu0 0.0
  %696 = vmatpush1.msra.mxu0 0.0
  %697 = vmatprep.subr.mxu0 0.0
  %698 = vmatpush1.msra.mxu0 0.0
  %699 = vmatprep.subr.mxu0 0.0
  %700 = vmatpush1.msra.mxu0 0.0
  %701 = vmatprep.subr.mxu0 0.0
  %702 = vmatpush1.msra.mxu0 0.0
  %703 = vmatprep.subr.mxu0 %v659
  %704 = vmatpush1.msra.mxu0 %v658
  %705 = vmatprep.subr.mxu0 %v657
  %706 = vmatpush1.msra.mxu0 %v656
  %707 = vmatprep.subr.mxu0 0.0
  %708 = vmatpush2.msra.mxu0 0.0
  %709 = vmatprep.subr.mxu0 0.0
  %710 = vmatpush2.msra.mxu0 0.0
  %711 = vmatprep.subr.mxu0 0.0
  %712 = vmatpush2.msra.mxu0 0.0
  %713 = vmatprep.subr.mxu0 0.0
  %714 = vmatpush2.msra.mxu0 0.0
  %715 = vmatprep.subr.mxu0 0.0
  %716 = vmatpush2.msra.mxu0 0.0
  %717 = vmatprep.subr.mxu0 0.0
  %718 = vmatpush2.msra.mxu0 0.0
  %719 = vmatprep.subr.mxu0 0.0
  %720 = vmatpush2.msra.mxu0 0.0
  %721 = vmatprep.subr.mxu0 0.0
  %722 = vmatpush2.msra.mxu0 0.0
  %723 = vmatprep.subr.mxu0 0.0
  %724 = vmatpush2.msra.mxu0 0.0
  %725 = vmatprep.subr.mxu0 0.0
  %726 = vmatpush2.msra.mxu0 0.0
  %727 = vmatprep.subr.mxu0 0.0
  %728 = vmatpush2.msra.mxu0 0.0
  %729 = vmatprep.subr.mxu0 0.0
  %730 = vmatpush2.msra.mxu0 0.0
  %731 = vmatprep.subr.mxu0 0.0
  %732 = vmatpush2.msra.mxu0 0.0
  %733 = vmatprep.subr.mxu0 0.0
  %734 = vmatpush2.msra.mxu0 0.0
  %735 = vmatprep.subr.mxu0 0.0
  %736 = vmatpush2.msra.mxu0 0.0
  %737 = vmatprep.subr.mxu0 0.0
  %738 = vmatpush2.msra.mxu0 0.0
  %739 = vmatprep.mubr.f32.mxu0 0.0
  %740 = vmatmul.mubr.f32.gmra.mxu0 %v661
  %v741 = vpop.f32.mrf.mxu0
  %v742 = vadd.f32 0.0, %v741
  %v743 = vpop.f32.mrf.mxu0
  %v744 = vadd.f32 0.0, %v743
  %745 = vmatprep.mubr.f32.mxu0 0.0
  %746 = vmatmul.mubr.f32.gmra.mxu0 %v664
  %v747 = vpop.f32.mrf.mxu0
  %v748 = vadd.f32 0.0, %v747
  %v749 = vpop.f32.mrf.mxu0
  %v750 = vadd.f32 0.0, %v749
  %751 = vmatprep.mubr.f32.mxu0 0.0
  %752 = vmatmul.mubr.f32.gmra.mxu0 %v667
  %v753 = vpop.f32.mrf.mxu0
  %v754 = vadd.f32 0.0, %v753
  %v755 = vpop.f32.mrf.mxu0
  %v756 = vadd.f32 0.0, %v755
  %757 = vmatprep.mubr.f32.mxu0 0.0
  %758 = vmatmul.mubr.f32.gmra.mxu0 %v670
  %v759 = vpop.f32.mrf.mxu0
  %v760 = vadd.f32 0.0, %v759
  %v761 = vpop.f32.mrf.mxu0
  %v762 = vadd.f32 0.0, %v761
  %763 = vmatprep.mubr.f32.mxu0 0.0
  %764 = vmatmul.mubr.f32.gmra.mxu0 %v673
  %v765 = vpop.f32.mrf.mxu0
  %v766 = vadd.f32 0.0, %v765
  %v767 = vpop.f32.mrf.mxu0
  %v768 = vadd.f32 0.0, %v767
  %769 = vdwg.mxu0
  %v770 = vadd.f32 %v516, %v742
  %v771 = vadd.f32 %v518, %v744
  %v772 = vadd.f32 %v522, %v748
  %v773 = vadd.f32 %v524, %v750
  %v774 = vadd.f32 %v528, %v754
  %v775 = vadd.f32 %v530, %v756
  %v776 = vadd.f32 %v534, %v760
  %v777 = vadd.f32 %v536, %v762
  %v778 = vadd.f32 %v540, %v766
  %v779 = vadd.f32 %v542, %v768
  %s780 = scalar_lea.vmem %s1, 120
  %v781 = vld [vmem:[%s780] sm:$0xff]
  %v782 = vld [vmem:[%s780 + $0x8] sm:$0xff]
  %v783 = vld [vmem:[%s780 + $0x10] sm:$0xff]
  %v784 = vld [vmem:[%s780 + $0x18] sm:$0xff]
  %v785 = vld [vmem:[%s780 + $0x20] sm:$0x3]
  %v787 = vsel %vm97, %v781, 0
  %v790 = vsel %vm97, %v782, 0
  %v793 = vsel %vm97, %v783, 0
  %v796 = vsel %vm97, %v784, 0
  %v799 = vsel %vm97, %v785, 0
  %801 = vmatprep.subr.mxu0 0.0
  %802 = vmatpush1.msra.mxu0 0.0
  %803 = vmatprep.subr.mxu0 0.0
  %804 = vmatpush1.msra.mxu0 0.0
  %805 = vmatprep.subr.mxu0 0.0
  %806 = vmatpush1.msra.mxu0 0.0
  %807 = vmatprep.subr.mxu0 0.0
  %808 = vmatpush1.msra.mxu0 0.0
  %809 = vmatprep.subr.mxu0 0.0
  %810 = vmatpush1.msra.mxu0 %v91
  %811 = vmatprep.subr.mxu0 0.0
  %812 = vmatpush1.msra.mxu0 %v90
  %813 = vmatprep.subr.mxu0 0.0
  %814 = vmatpush1.msra.mxu0 %v89
  %815 = vmatprep.subr.mxu0 0.0
  %816 = vmatpush1.msra.mxu0 %v88
  %817 = vmatprep.subr.mxu0 0.0
  %818 = vmatpush1.msra.mxu0 %v87
  %819 = vmatprep.subr.mxu0 0.0
  %820 = vmatpush1.msra.mxu0 %v86
  %821 = vmatprep.subr.mxu0 0.0
  %822 = vmatpush1.msra.mxu0 %v85
  %823 = vmatprep.subr.mxu0 0.0
  %824 = vmatpush1.msra.mxu0 %v84
  %825 = vmatprep.subr.mxu0 0.0
  %826 = vmatpush1.msra.mxu0 %v83
  %827 = vmatprep.subr.mxu0 0.0
  %828 = vmatpush1.msra.mxu0 %v82
  %829 = vmatprep.subr.mxu0 0.0
  %830 = vmatpush1.msra.mxu0 %v81
  %831 = vmatprep.subr.mxu0 0.0
  %832 = vmatpush1.msra.mxu0 %v80
  %833 = vmatprep.subr.mxu0 0.0
  %834 = vmatpush2.msra.mxu0 0.0
  %835 = vmatprep.subr.mxu0 0.0
  %836 = vmatpush2.msra.mxu0 0.0
  %837 = vmatprep.subr.mxu0 0.0
  %838 = vmatpush2.msra.mxu0 0.0
  %839 = vmatprep.subr.mxu0 0.0
  %840 = vmatpush2.msra.mxu0 0.0
  %841 = vmatprep.subr.mxu0 0.0
  %842 = vmatpush2.msra.mxu0 0.0
  %843 = vmatprep.subr.mxu0 0.0
  %844 = vmatpush2.msra.mxu0 0.0
  %845 = vmatprep.subr.mxu0 0.0
  %846 = vmatpush2.msra.mxu0 0.0
  %847 = vmatprep.subr.mxu0 0.0
  %848 = vmatpush2.msra.mxu0 0.0
  %849 = vmatprep.subr.mxu0 0.0
  %850 = vmatpush2.msra.mxu0 0.0
  %851 = vmatprep.subr.mxu0 0.0
  %852 = vmatpush2.msra.mxu0 0.0
  %853 = vmatprep.subr.mxu0 0.0
  %854 = vmatpush2.msra.mxu0 0.0
  %855 = vmatprep.subr.mxu0 0.0
  %856 = vmatpush2.msra.mxu0 0.0
  %857 = vmatprep.subr.mxu0 0.0
  %858 = vmatpush2.msra.mxu0 0.0
  %859 = vmatprep.subr.mxu0 0.0
  %860 = vmatpush2.msra.mxu0 0.0
  %861 = vmatprep.subr.mxu0 0.0
  %862 = vmatpush2.msra.mxu0 0.0
  %863 = vmatprep.subr.mxu0 0.0
  %864 = vmatpush2.msra.mxu0 0.0
  %865 = vmatprep.mubr.f32.mxu0 0.0
  %866 = vmatmul.mubr.f32.gmra.mxu0 %v787
  %v867 = vpop.f32.mrf.mxu0
  %v868 = vadd.f32 0.0, %v867
  %v869 = vpop.f32.mrf.mxu0
  %870 = vmatprep.mubr.f32.mxu0 0.0
  %871 = vmatmul.mubr.f32.gmra.mxu0 %v790
  %v872 = vpop.f32.mrf.mxu0
  %v873 = vadd.f32 0.0, %v872
  %v874 = vpop.f32.mrf.mxu0
  %875 = vmatprep.mubr.f32.mxu0 0.0
  %876 = vmatmul.mubr.f32.gmra.mxu0 %v793
  %v877 = vpop.f32.mrf.mxu0
  %v878 = vadd.f32 0.0, %v877
  %v879 = vpop.f32.mrf.mxu0
  %880 = vmatprep.mubr.f32.mxu0 0.0
  %881 = vmatmul.mubr.f32.gmra.mxu0 %v796
  %v882 = vpop.f32.mrf.mxu0
  %v883 = vadd.f32 0.0, %v882
  %v884 = vpop.f32.mrf.mxu0
  %885 = vmatprep.mubr.f32.mxu0 0.0
  %886 = vmatmul.mubr.f32.gmra.mxu0 %v799
  %v887 = vpop.f32.mrf.mxu0
  %v888 = vadd.f32 0.0, %v887
  %v889 = vpop.f32.mrf.mxu0
  %890 = vdwg.mxu0
  %s891 = scalar_lea.vmem %s2, 96
  %v892 = vld [vmem:[%s891] sm:$0xff]
  %v893 = vld [vmem:[%s891 + $0x8] sm:$0xff]
  %v894 = vld [vmem:[%s891 + $0x10] sm:$0xff]
  %v895 = vld [vmem:[%s891 + $0x18] sm:$0xff]
  %v897 = vsel %vm323, %v868, 0
  %v900 = vsel %vm323, %v873, 0
  %v903 = vsel %vm323, %v878, 0
  %v906 = vsel %vm323, %v883, 0
  %v909 = vsel %vm323, %v888, 0
  %911 = vmatprep.subr.mxu0 0.0
  %912 = vmatpush1.msra.mxu0 0.0
  %913 = vmatprep.subr.mxu0 0.0
  %914 = vmatpush1.msra.mxu0 0.0
  %915 = vmatprep.subr.mxu0 0.0
  %916 = vmatpush1.msra.mxu0 0.0
  %917 = vmatprep.subr.mxu0 0.0
  %918 = vmatpush1.msra.mxu0 0.0
  %919 = vmatprep.subr.mxu0 0.0
  %920 = vmatpush1.msra.mxu0 0.0
  %921 = vmatprep.subr.mxu0 0.0
  %922 = vmatpush1.msra.mxu0 0.0
  %923 = vmatprep.subr.mxu0 0.0
  %924 = vmatpush1.msra.mxu0 0.0
  %925 = vmatprep.subr.mxu0 0.0
  %926 = vmatpush1.msra.mxu0 0.0
  %927 = vmatprep.subr.mxu0 0.0
  %928 = vmatpush1.msra.mxu0 0.0
  %929 = vmatprep.subr.mxu0 0.0
  %930 = vmatpush1.msra.mxu0 0.0
  %931 = vmatprep.subr.mxu0 0.0
  %932 = vmatpush1.msra.mxu0 0.0
  %933 = vmatprep.subr.mxu0 0.0
  %934 = vmatpush1.msra.mxu0 0.0
  %935 = vmatprep.subr.mxu0 0.0
  %936 = vmatpush1.msra.mxu0 0.0
  %937 = vmatprep.subr.mxu0 0.0
  %938 = vmatpush1.msra.mxu0 0.0
  %939 = vmatprep.subr.mxu0 %v895
  %940 = vmatpush1.msra.mxu0 %v894
  %941 = vmatprep.subr.mxu0 %v893
  %942 = vmatpush1.msra.mxu0 %v892
  %943 = vmatprep.subr.mxu0 0.0
  %944 = vmatpush2.msra.mxu0 0.0
  %945 = vmatprep.subr.mxu0 0.0
  %946 = vmatpush2.msra.mxu0 0.0
  %947 = vmatprep.subr.mxu0 0.0
  %948 = vmatpush2.msra.mxu0 0.0
  %949 = vmatprep.subr.mxu0 0.0
  %950 = vmatpush2.msra.mxu0 0.0
  %951 = vmatprep.subr.mxu0 0.0
  %952 = vmatpush2.msra.mxu0 0.0
  %953 = vmatprep.subr.mxu0 0.0
  %954 = vmatpush2.msra.mxu0 0.0
  %955 = vmatprep.subr.mxu0 0.0
  %956 = vmatpush2.msra.mxu0 0.0
  %957 = vmatprep.subr.mxu0 0.0
  %958 = vmatpush2.msra.mxu0 0.0
  %959 = vmatprep.subr.mxu0 0.0
  %960 = vmatpush2.msra.mxu0 0.0
  %961 = vmatprep.subr.mxu0 0.0
  %962 = vmatpush2.msra.mxu0 0.0
  %963 = vmatprep.subr.mxu0 0.0
  %964 = vmatpush2.msra.mxu0 0.0
  %965 = vmatprep.subr.mxu0 0.0
  %966 = vmatpush2.msra.mxu0 0.0
  %967 = vmatprep.subr.mxu0 0.0
  %968 = vmatpush2.msra.mxu0 0.0
  %969 = vmatprep.subr.mxu0 0.0
  %970 = vmatpush2.msra.mxu0 0.0
  %971 = vmatprep.subr.mxu0 0.0
  %972 = vmatpush2.msra.mxu0 0.0
  %973 = vmatprep.subr.mxu0 0.0
  %974 = vmatpush2.msra.mxu0 0.0
  %975 = vmatprep.mubr.f32.mxu0 0.0
  %976 = vmatmul.mubr.f32.gmra.mxu0 %v897
  %v977 = vpop.f32.mrf.mxu0
  %v978 = vadd.f32 0.0, %v977
  %v979 = vpop.f32.mrf.mxu0
  %v980 = vadd.f32 0.0, %v979
  %981 = vmatprep.mubr.f32.mxu0 0.0
  %982 = vmatmul.mubr.f32.gmra.mxu0 %v900
  %v983 = vpop.f32.mrf.mxu0
  %v984 = vadd.f32 0.0, %v983
  %v985 = vpop.f32.mrf.mxu0
  %v986 = vadd.f32 0.0, %v985
  %987 = vmatprep.mubr.f32.mxu0 0.0
  %988 = vmatmul.mubr.f32.gmra.mxu0 %v903
  %v989 = vpop.f32.mrf.mxu0
  %v990 = vadd.f32 0.0, %v989
  %v991 = vpop.f32.mrf.mxu0
  %v992 = vadd.f32 0.0, %v991
  %993 = vmatprep.mubr.f32.mxu0 0.0
  %994 = vmatmul.mubr.f32.gmra.mxu0 %v906
  %v995 = vpop.f32.mrf.mxu0
  %v996 = vadd.f32 0.0, %v995
  %v997 = vpop.f32.mrf.mxu0
  %v998 = vadd.f32 0.0, %v997
  %999 = vmatprep.mubr.f32.mxu0 0.0
  %1000 = vmatmul.mubr.f32.gmra.mxu0 %v909
  %v1001 = vpop.f32.mrf.mxu0
  %v1002 = vadd.f32 0.0, %v1001
  %v1003 = vpop.f32.mrf.mxu0
  %v1004 = vadd.f32 0.0, %v1003
  %1005 = vdwg.mxu0
  %v1006 = vadd.f32 %v770, %v978
  %v1007 = vadd.f32 %v771, %v980
  %v1008 = vadd.f32 %v772, %v984
  %v1009 = vadd.f32 %v773, %v986
  %v1010 = vadd.f32 %v774, %v990
  %v1011 = vadd.f32 %v775, %v992
  %v1012 = vadd.f32 %v776, %v996
  %v1013 = vadd.f32 %v777, %v998
  %v1014 = vadd.f32 %v778, %v1002
  %v1015 = vadd.f32 %v779, %v1004
  %s1016 = scalar_lea.vmem %s1, 160
  %v1017 = vld [vmem:[%s1016] sm:$0xff]
  %v1018 = vld [vmem:[%s1016 + $0x8] sm:$0xff]
  %v1019 = vld [vmem:[%s1016 + $0x10] sm:$0xff]
  %v1020 = vld [vmem:[%s1016 + $0x18] sm:$0xff]
  %v1021 = vld [vmem:[%s1016 + $0x20] sm:$0x3]
  %v1023 = vsel %vm97, %v1017, 0
  %v1026 = vsel %vm97, %v1018, 0
  %v1029 = vsel %vm97, %v1019, 0
  %v1032 = vsel %vm97, %v1020, 0
  %v1035 = vsel %vm97, %v1021, 0
  %1037 = vmatprep.subr.mxu0 0.0
  %1038 = vmatpush1.msra.mxu0 0.0
  %1039 = vmatprep.subr.mxu0 0.0
  %1040 = vmatpush1.msra.mxu0 0.0
  %1041 = vmatprep.subr.mxu0 0.0
  %1042 = vmatpush1.msra.mxu0 0.0
  %1043 = vmatprep.subr.mxu0 0.0
  %1044 = vmatpush1.msra.mxu0 0.0
  %1045 = vmatprep.subr.mxu0 0.0
  %1046 = vmatpush1.msra.mxu0 %v91
  %1047 = vmatprep.subr.mxu0 0.0
  %1048 = vmatpush1.msra.mxu0 %v90
  %1049 = vmatprep.subr.mxu0 0.0
  %1050 = vmatpush1.msra.mxu0 %v89
  %1051 = vmatprep.subr.mxu0 0.0
  %1052 = vmatpush1.msra.mxu0 %v88
  %1053 = vmatprep.subr.mxu0 0.0
  %1054 = vmatpush1.msra.mxu0 %v87
  %1055 = vmatprep.subr.mxu0 0.0
  %1056 = vmatpush1.msra.mxu0 %v86
  %1057 = vmatprep.subr.mxu0 0.0
  %1058 = vmatpush1.msra.mxu0 %v85
  %1059 = vmatprep.subr.mxu0 0.0
  %1060 = vmatpush1.msra.mxu0 %v84
  %1061 = vmatprep.subr.mxu0 0.0
  %1062 = vmatpush1.msra.mxu0 %v83
  %1063 = vmatprep.subr.mxu0 0.0
  %1064 = vmatpush1.msra.mxu0 %v82
  %1065 = vmatprep.subr.mxu0 0.0
  %1066 = vmatpush1.msra.mxu0 %v81
  %1067 = vmatprep.subr.mxu0 0.0
  %1068 = vmatpush1.msra.mxu0 %v80
  %1069 = vmatprep.subr.mxu0 0.0
  %1070 = vmatpush2.msra.mxu0 0.0
  %1071 = vmatprep.subr.mxu0 0.0
  %1072 = vmatpush2.msra.mxu0 0.0
  %1073 = vmatprep.subr.mxu0 0.0
  %1074 = vmatpush2.msra.mxu0 0.0
  %1075 = vmatprep.subr.mxu0 0.0
  %1076 = vmatpush2.msra.mxu0 0.0
  %1077 = vmatprep.subr.mxu0 0.0
  %1078 = vmatpush2.msra.mxu0 0.0
  %1079 = vmatprep.subr.mxu0 0.0
  %1080 = vmatpush2.msra.mxu0 0.0
  %1081 = vmatprep.subr.mxu0 0.0
  %1082 = vmatpush2.msra.mxu0 0.0
  %1083 = vmatprep.subr.mxu0 0.0
  %1084 = vmatpush2.msra.mxu0 0.0
  %1085 = vmatprep.subr.mxu0 0.0
  %1086 = vmatpush2.msra.mxu0 0.0
  %1087 = vmatprep.subr.mxu0 0.0
  %1088 = vmatpush2.msra.mxu0 0.0
  %1089 = vmatprep.subr.mxu0 0.0
  %1090 = vmatpush2.msra.mxu0 0.0
  %1091 = vmatprep.subr.mxu0 0.0
  %1092 = vmatpush2.msra.mxu0 0.0
  %1093 = vmatprep.subr.mxu0 0.0
  %1094 = vmatpush2.msra.mxu0 0.0
  %1095 = vmatprep.subr.mxu0 0.0
  %1096 = vmatpush2.msra.mxu0 0.0
  %1097 = vmatprep.subr.mxu0 0.0
  %1098 = vmatpush2.msra.mxu0 0.0
  %1099 = vmatprep.subr.mxu0 0.0
  %1100 = vmatpush2.msra.mxu0 0.0
  %1101 = vmatprep.mubr.f32.mxu0 0.0
  %1102 = vmatmul.mubr.f32.gmra.mxu0 %v1023
  %v1103 = vpop.f32.mrf.mxu0
  %v1104 = vadd.f32 0.0, %v1103
  %v1105 = vpop.f32.mrf.mxu0
  %1106 = vmatprep.mubr.f32.mxu0 0.0
  %1107 = vmatmul.mubr.f32.gmra.mxu0 %v1026
  %v1108 = vpop.f32.mrf.mxu0
  %v1109 = vadd.f32 0.0, %v1108
  %v1110 = vpop.f32.mrf.mxu0
  %1111 = vmatprep.mubr.f32.mxu0 0.0
  %1112 = vmatmul.mubr.f32.gmra.mxu0 %v1029
  %v1113 = vpop.f32.mrf.mxu0
  %v1114 = vadd.f32 0.0, %v1113
  %v1115 = vpop.f32.mrf.mxu0
  %1116 = vmatprep.mubr.f32.mxu0 0.0
  %1117 = vmatmul.mubr.f32.gmra.mxu0 %v1032
  %v1118 = vpop.f32.mrf.mxu0
  %v1119 = vadd.f32 0.0, %v1118
  %v1120 = vpop.f32.mrf.mxu0
  %1121 = vmatprep.mubr.f32.mxu0 0.0
  %1122 = vmatmul.mubr.f32.gmra.mxu0 %v1035
  %v1123 = vpop.f32.mrf.mxu0
  %v1124 = vadd.f32 0.0, %v1123
  %v1125 = vpop.f32.mrf.mxu0
  %1126 = vdwg.mxu0
  %s1127 = scalar_lea.vmem %s2, 128
  %v1128 = vld [vmem:[%s1127] sm:$0xff]
  %v1129 = vld [vmem:[%s1127 + $0x8] sm:$0xff]
  %v1130 = vld [vmem:[%s1127 + $0x10] sm:$0xff]
  %v1131 = vld [vmem:[%s1127 + $0x18] sm:$0xff]
  %v1133 = vsel %vm323, %v1104, 0
  %v1136 = vsel %vm323, %v1109, 0
  %v1139 = vsel %vm323, %v1114, 0
  %v1142 = vsel %vm323, %v1119, 0
  %v1145 = vsel %vm323, %v1124, 0
  %1147 = vmatprep.subr.mxu0 0.0
  %1148 = vmatpush1.msra.mxu0 0.0
  %1149 = vmatprep.subr.mxu0 0.0
  %1150 = vmatpush1.msra.mxu0 0.0
  %1151 = vmatprep.subr.mxu0 0.0
  %1152 = vmatpush1.msra.mxu0 0.0
  %1153 = vmatprep.subr.mxu0 0.0
  %1154 = vmatpush1.msra.mxu0 0.0
  %1155 = vmatprep.subr.mxu0 0.0
  %1156 = vmatpush1.msra.mxu0 0.0
  %1157 = vmatprep.subr.mxu0 0.0
  %1158 = vmatpush1.msra.mxu0 0.0
  %1159 = vmatprep.subr.mxu0 0.0
  %1160 = vmatpush1.msra.mxu0 0.0
  %1161 = vmatprep.subr.mxu0 0.0
  %1162 = vmatpush1.msra.mxu0 0.0
  %1163 = vmatprep.subr.mxu0 0.0
  %1164 = vmatpush1.msra.mxu0 0.0
  %1165 = vmatprep.subr.mxu0 0.0
  %1166 = vmatpush1.msra.mxu0 0.0
  %1167 = vmatprep.subr.mxu0 0.0
  %1168 = vmatpush1.msra.mxu0 0.0
  %1169 = vmatprep.subr.mxu0 0.0
  %1170 = vmatpush1.msra.mxu0 0.0
  %1171 = vmatprep.subr.mxu0 0.0
  %1172 = vmatpush1.msra.mxu0 0.0
  %1173 = vmatprep.subr.mxu0 0.0
  %1174 = vmatpush1.msra.mxu0 0.0
  %1175 = vmatprep.subr.mxu0 %v1131
  %1176 = vmatpush1.msra.mxu0 %v1130
  %1177 = vmatprep.subr.mxu0 %v1129
  %1178 = vmatpush1.msra.mxu0 %v1128
  %1179 = vmatprep.subr.mxu0 0.0
  %1180 = vmatpush2.msra.mxu0 0.0
  %1181 = vmatprep.subr.mxu0 0.0
  %1182 = vmatpush2.msra.mxu0 0.0
  %1183 = vmatprep.subr.mxu0 0.0
  %1184 = vmatpush2.msra.mxu0 0.0
  %1185 = vmatprep.subr.mxu0 0.0
  %1186 = vmatpush2.msra.mxu0 0.0
  %1187 = vmatprep.subr.mxu0 0.0
  %1188 = vmatpush2.msra.mxu0 0.0
  %1189 = vmatprep.subr.mxu0 0.0
  %1190 = vmatpush2.msra.mxu0 0.0
  %1191 = vmatprep.subr.mxu0 0.0
  %1192 = vmatpush2.msra.mxu0 0.0
  %1193 = vmatprep.subr.mxu0 0.0
  %1194 = vmatpush2.msra.mxu0 0.0
  %1195 = vmatprep.subr.mxu0 0.0
  %1196 = vmatpush2.msra.mxu0 0.0
  %1197 = vmatprep.subr.mxu0 0.0
  %1198 = vmatpush2.msra.mxu0 0.0
  %1199 = vmatprep.subr.mxu0 0.0
  %1200 = vmatpush2.msra.mxu0 0.0
  %1201 = vmatprep.subr.mxu0 0.0
  %1202 = vmatpush2.msra.mxu0 0.0
  %1203 = vmatprep.subr.mxu0 0.0
  %1204 = vmatpush2.msra.mxu0 0.0
  %1205 = vmatprep.subr.mxu0 0.0
  %1206 = vmatpush2.msra.mxu0 0.0
  %1207 = vmatprep.subr.mxu0 0.0
  %1208 = vmatpush2.msra.mxu0 0.0
  %1209 = vmatprep.subr.mxu0 0.0
  %1210 = vmatpush2.msra.mxu0 0.0
  %1211 = vmatprep.mubr.f32.mxu0 0.0
  %1212 = vmatmul.mubr.f32.gmra.mxu0 %v1133
  %v1213 = vpop.f32.mrf.mxu0
  %v1214 = vadd.f32 0.0, %v1213
  %v1215 = vpop.f32.mrf.mxu0
  %v1216 = vadd.f32 0.0, %v1215
  %1217 = vmatprep.mubr.f32.mxu0 0.0
  %1218 = vmatmul.mubr.f32.gmra.mxu0 %v1136
  %v1219 = vpop.f32.mrf.mxu0
  %v1220 = vadd.f32 0.0, %v1219
  %v1221 = vpop.f32.mrf.mxu0
  %v1222 = vadd.f32 0.0, %v1221
  %1223 = vmatprep.mubr.f32.mxu0 0.0
  %1224 = vmatmul.mubr.f32.gmra.mxu0 %v1139
  %v1225 = vpop.f32.mrf.mxu0
  %v1226 = vadd.f32 0.0, %v1225
  %v1227 = vpop.f32.mrf.mxu0
  %v1228 = vadd.f32 0.0, %v1227
  %1229 = vmatprep.mubr.f32.mxu0 0.0
  %1230 = vmatmul.mubr.f32.gmra.mxu0 %v1142
  %v1231 = vpop.f32.mrf.mxu0
  %v1232 = vadd.f32 0.0, %v1231
  %v1233 = vpop.f32.mrf.mxu0
  %v1234 = vadd.f32 0.0, %v1233
  %1235 = vmatprep.mubr.f32.mxu0 0.0
  %1236 = vmatmul.mubr.f32.gmra.mxu0 %v1145
  %v1237 = vpop.f32.mrf.mxu0
  %v1238 = vadd.f32 0.0, %v1237
  %v1239 = vpop.f32.mrf.mxu0
  %v1240 = vadd.f32 0.0, %v1239
  %1241 = vdwg.mxu0
  %v1242 = vadd.f32 %v1006, %v1214
  %v1243 = vadd.f32 %v1007, %v1216
  %v1244 = vadd.f32 %v1008, %v1220
  %v1245 = vadd.f32 %v1009, %v1222
  %v1246 = vadd.f32 %v1010, %v1226
  %v1247 = vadd.f32 %v1011, %v1228
  %v1248 = vadd.f32 %v1012, %v1232
  %v1249 = vadd.f32 %v1013, %v1234
  %v1250 = vadd.f32 %v1014, %v1238
  %v1251 = vadd.f32 %v1015, %v1240
  %s1252 = scalar_lea.vmem %s1, 200
  %v1253 = vld [vmem:[%s1252] sm:$0xff]
  %v1254 = vld [vmem:[%s1252 + $0x8] sm:$0xff]
  %v1255 = vld [vmem:[%s1252 + $0x10] sm:$0xff]
  %v1256 = vld [vmem:[%s1252 + $0x18] sm:$0xff]
  %v1257 = vld [vmem:[%s1252 + $0x20] sm:$0x3]
  %v1259 = vsel %vm97, %v1253, 0
  %v1262 = vsel %vm97, %v1254, 0
  %v1265 = vsel %vm97, %v1255, 0
  %v1268 = vsel %vm97, %v1256, 0
  %v1271 = vsel %vm97, %v1257, 0
  %1273 = vmatprep.subr.mxu0 0.0
  %1274 = vmatpush1.msra.mxu0 0.0
  %1275 = vmatprep.subr.mxu0 0.0
  %1276 = vmatpush1.msra.mxu0 0.0
  %1277 = vmatprep.subr.mxu0 0.0
  %1278 = vmatpush1.msra.mxu0 0.0
  %1279 = vmatprep.subr.mxu0 0.0
  %1280 = vmatpush1.msra.mxu0 0.0
  %1281 = vmatprep.subr.mxu0 0.0
  %1282 = vmatpush1.msra.mxu0 %v91
  %1283 = vmatprep.subr.mxu0 0.0
  %1284 = vmatpush1.msra.mxu0 %v90
  %1285 = vmatprep.subr.mxu0 0.0
  %1286 = vmatpush1.msra.mxu0 %v89
  %1287 = vmatprep.subr.mxu0 0.0
  %1288 = vmatpush1.msra.mxu0 %v88
  %1289 = vmatprep.subr.mxu0 0.0
  %1290 = vmatpush1.msra.mxu0 %v87
  %1291 = vmatprep.subr.mxu0 0.0
  %1292 = vmatpush1.msra.mxu0 %v86
  %1293 = vmatprep.subr.mxu0 0.0
  %1294 = vmatpush1.msra.mxu0 %v85
  %1295 = vmatprep.subr.mxu0 0.0
  %1296 = vmatpush1.msra.mxu0 %v84
  %1297 = vmatprep.subr.mxu0 0.0
  %1298 = vmatpush1.msra.mxu0 %v83
  %1299 = vmatprep.subr.mxu0 0.0
  %1300 = vmatpush1.msra.mxu0 %v82
  %1301 = vmatprep.subr.mxu0 0.0
  %1302 = vmatpush1.msra.mxu0 %v81
  %1303 = vmatprep.subr.mxu0 0.0
  %1304 = vmatpush1.msra.mxu0 %v80
  %1305 = vmatprep.subr.mxu0 0.0
  %1306 = vmatpush2.msra.mxu0 0.0
  %1307 = vmatprep.subr.mxu0 0.0
  %1308 = vmatpush2.msra.mxu0 0.0
  %1309 = vmatprep.subr.mxu0 0.0
  %1310 = vmatpush2.msra.mxu0 0.0
  %1311 = vmatprep.subr.mxu0 0.0
  %1312 = vmatpush2.msra.mxu0 0.0
  %1313 = vmatprep.subr.mxu0 0.0
  %1314 = vmatpush2.msra.mxu0 0.0
  %1315 = vmatprep.subr.mxu0 0.0
  %1316 = vmatpush2.msra.mxu0 0.0
  %1317 = vmatprep.subr.mxu0 0.0
  %1318 = vmatpush2.msra.mxu0 0.0
  %1319 = vmatprep.subr.mxu0 0.0
  %1320 = vmatpush2.msra.mxu0 0.0
  %1321 = vmatprep.subr.mxu0 0.0
  %1322 = vmatpush2.msra.mxu0 0.0
  %1323 = vmatprep.subr.mxu0 0.0
  %1324 = vmatpush2.msra.mxu0 0.0
  %1325 = vmatprep.subr.mxu0 0.0
  %1326 = vmatpush2.msra.mxu0 0.0
  %1327 = vmatprep.subr.mxu0 0.0
  %1328 = vmatpush2.msra.mxu0 0.0
  %1329 = vmatprep.subr.mxu0 0.0
  %1330 = vmatpush2.msra.mxu0 0.0
  %1331 = vmatprep.subr.mxu0 0.0
  %1332 = vmatpush2.msra.mxu0 0.0
  %1333 = vmatprep.subr.mxu0 0.0
  %1334 = vmatpush2.msra.mxu0 0.0
  %1335 = vmatprep.subr.mxu0 0.0
  %1336 = vmatpush2.msra.mxu0 0.0
  %1337 = vmatprep.mubr.f32.mxu0 0.0
  %1338 = vmatmul.mubr.f32.gmra.mxu0 %v1259
  %v1339 = vpop.f32.mrf.mxu0
  %v1340 = vadd.f32 0.0, %v1339
  %v1341 = vpop.f32.mrf.mxu0
  %1342 = vmatprep.mubr.f32.mxu0 0.0
  %1343 = vmatmul.mubr.f32.gmra.mxu0 %v1262
  %v1344 = vpop.f32.mrf.mxu0
  %v1345 = vadd.f32 0.0, %v1344
  %v1346 = vpop.f32.mrf.mxu0
  %1347 = vmatprep.mubr.f32.mxu0 0.0
  %1348 = vmatmul.mubr.f32.gmra.mxu0 %v1265
  %v1349 = vpop.f32.mrf.mxu0
  %v1350 = vadd.f32 0.0, %v1349
  %v1351 = vpop.f32.mrf.mxu0
  %1352 = vmatprep.mubr.f32.mxu0 0.0
  %1353 = vmatmul.mubr.f32.gmra.mxu0 %v1268
  %v1354 = vpop.f32.mrf.mxu0
  %v1355 = vadd.f32 0.0, %v1354
  %v1356 = vpop.f32.mrf.mxu0
  %1357 = vmatprep.mubr.f32.mxu0 0.0
  %1358 = vmatmul.mubr.f32.gmra.mxu0 %v1271
  %v1359 = vpop.f32.mrf.mxu0
  %v1360 = vadd.f32 0.0, %v1359
  %v1361 = vpop.f32.mrf.mxu0
  %1362 = vdwg.mxu0
  %s1363 = scalar_lea.vmem %s2, 160
  %v1364 = vld [vmem:[%s1363] sm:$0xff]
  %v1365 = vld [vmem:[%s1363 + $0x8] sm:$0xff]
  %v1366 = vld [vmem:[%s1363 + $0x10] sm:$0xff]
  %v1367 = vld [vmem:[%s1363 + $0x18] sm:$0xff]
  %v1369 = vsel %vm323, %v1340, 0
  %v1372 = vsel %vm323, %v1345, 0
  %v1375 = vsel %vm323, %v1350, 0
  %v1378 = vsel %vm323, %v1355, 0
  %v1381 = vsel %vm323, %v1360, 0
  %1383 = vmatprep.subr.mxu0 0.0
  %1384 = vmatpush1.msra.mxu0 0.0
  %1385 = vmatprep.subr.mxu0 0.0
  %1386 = vmatpush1.msra.mxu0 0.0
  %1387 = vmatprep.subr.mxu0 0.0
  %1388 = vmatpush1.msra.mxu0 0.0
  %1389 = vmatprep.subr.mxu0 0.0
  %1390 = vmatpush1.msra.mxu0 0.0
  %1391 = vmatprep.subr.mxu0 0.0
  %1392 = vmatpush1.msra.mxu0 0.0
  %1393 = vmatprep.subr.mxu0 0.0
  %1394 = vmatpush1.msra.mxu0 0.0
  %1395 = vmatprep.subr.mxu0 0.0
  %1396 = vmatpush1.msra.mxu0 0.0
  %1397 = vmatprep.subr.mxu0 0.0
  %1398 = vmatpush1.msra.mxu0 0.0
  %1399 = vmatprep.subr.mxu0 0.0
  %1400 = vmatpush1.msra.mxu0 0.0
  %1401 = vmatprep.subr.mxu0 0.0
  %1402 = vmatpush1.msra.mxu0 0.0
  %1403 = vmatprep.subr.mxu0 0.0
  %1404 = vmatpush1.msra.mxu0 0.0
  %1405 = vmatprep.subr.mxu0 0.0
  %1406 = vmatpush1.msra.mxu0 0.0
  %1407 = vmatprep.subr.mxu0 0.0
  %1408 = vmatpush1.msra.mxu0 0.0
  %1409 = vmatprep.subr.mxu0 0.0
  %1410 = vmatpush1.msra.mxu0 0.0
  %1411 = vmatprep.subr.mxu0 %v1367
  %1412 = vmatpush1.msra.mxu0 %v1366
  %1413 = vmatprep.subr.mxu0 %v1365
  %1414 = vmatpush1.msra.mxu0 %v1364
  %1415 = vmatprep.subr.mxu0 0.0
  %1416 = vmatpush2.msra.mxu0 0.0
  %1417 = vmatprep.subr.mxu0 0.0
  %1418 = vmatpush2.msra.mxu0 0.0
  %1419 = vmatprep.subr.mxu0 0.0
  %1420 = vmatpush2.msra.mxu0 0.0
  %1421 = vmatprep.subr.mxu0 0.0
  %1422 = vmatpush2.msra.mxu0 0.0
  %1423 = vmatprep.subr.mxu0 0.0
  %1424 = vmatpush2.msra.mxu0 0.0
  %1425 = vmatprep.subr.mxu0 0.0
  %1426 = vmatpush2.msra.mxu0 0.0
  %1427 = vmatprep.subr.mxu0 0.0
  %1428 = vmatpush2.msra.mxu0 0.0
  %1429 = vmatprep.subr.mxu0 0.0
  %1430 = vmatpush2.msra.mxu0 0.0
  %1431 = vmatprep.subr.mxu0 0.0
  %1432 = vmatpush2.msra.mxu0 0.0
  %1433 = vmatprep.subr.mxu0 0.0
  %1434 = vmatpush2.msra.mxu0 0.0
  %1435 = vmatprep.subr.mxu0 0.0
  %1436 = vmatpush2.msra.mxu0 0.0
  %1437 = vmatprep.subr.mxu0 0.0
  %1438 = vmatpush2.msra.mxu0 0.0
  %1439 = vmatprep.subr.mxu0 0.0
  %1440 = vmatpush2.msra.mxu0 0.0
  %1441 = vmatprep.subr.mxu0 0.0
  %1442 = vmatpush2.msra.mxu0 0.0
  %1443 = vmatprep.subr.mxu0 0.0
  %1444 = vmatpush2.msra.mxu0 0.0
  %1445 = vmatprep.subr.mxu0 0.0
  %1446 = vmatpush2.msra.mxu0 0.0
  %1447 = vmatprep.mubr.f32.mxu0 0.0
  %1448 = vmatmul.mubr.f32.gmra.mxu0 %v1369
  %v1449 = vpop.f32.mrf.mxu0
  %v1450 = vadd.f32 0.0, %v1449
  %v1451 = vpop.f32.mrf.mxu0
  %v1452 = vadd.f32 0.0, %v1451
  %1453 = vmatprep.mubr.f32.mxu0 0.0
  %1454 = vmatmul.mubr.f32.gmra.mxu0 %v1372
  %v1455 = vpop.f32.mrf.mxu0
  %v1456 = vadd.f32 0.0, %v1455
  %v1457 = vpop.f32.mrf.mxu0
  %v1458 = vadd.f32 0.0, %v1457
  %1459 = vmatprep.mubr.f32.mxu0 0.0
  %1460 = vmatmul.mubr.f32.gmra.mxu0 %v1375
  %v1461 = vpop.f32.mrf.mxu0
  %v1462 = vadd.f32 0.0, %v1461
  %v1463 = vpop.f32.mrf.mxu0
  %v1464 = vadd.f32 0.0, %v1463
  %1465 = vmatprep.mubr.f32.mxu0 0.0
  %1466 = vmatmul.mubr.f32.gmra.mxu0 %v1378
  %v1467 = vpop.f32.mrf.mxu0
  %v1468 = vadd.f32 0.0, %v1467
  %v1469 = vpop.f32.mrf.mxu0
  %v1470 = vadd.f32 0.0, %v1469
  %1471 = vmatprep.mubr.f32.mxu0 0.0
  %1472 = vmatmul.mubr.f32.gmra.mxu0 %v1381
  %v1473 = vpop.f32.mrf.mxu0
  %v1474 = vadd.f32 0.0, %v1473
  %v1475 = vpop.f32.mrf.mxu0
  %v1476 = vadd.f32 0.0, %v1475
  %1477 = vdwg.mxu0
  %v1478 = vadd.f32 %v1242, %v1450
  %v1479 = vadd.f32 %v1243, %v1452
  %v1480 = vadd.f32 %v1244, %v1456
  %v1481 = vadd.f32 %v1245, %v1458
  %v1482 = vadd.f32 %v1246, %v1462
  %v1483 = vadd.f32 %v1247, %v1464
  %v1484 = vadd.f32 %v1248, %v1468
  %v1485 = vadd.f32 %v1249, %v1470
  %v1486 = vadd.f32 %v1250, %v1474
  %v1487 = vadd.f32 %v1251, %v1476
  %v1488 = vld [vmem:[%s3] sm:$0x3]
  %v1490 = vlaneseq
  %v1491 = vshrl.u32 %v1490, 7
  %v1492 = vsub.s32 0, %v1491
  %v1493 = vrot.slane %v1488, %v1492
  %v1494 = vlaneseq
  %v1495 = vshrl.u32 %v1494, 7
  %v1496 = vsub.s32 1, %v1495
  %v1497 = vrot.slane %v1488, %v1496
  %v1500 = vadd.f32 %v1478, %v1493
  %v1501 = vadd.f32 %v1479, %v1497
  %v1502 = vadd.f32 %v1480, %v1493
  %v1503 = vadd.f32 %v1481, %v1497
  %v1504 = vadd.f32 %v1482, %v1493
  %v1505 = vadd.f32 %v1483, %v1497
  %v1506 = vadd.f32 %v1484, %v1493
  %v1507 = vadd.f32 %v1485, %v1497
  %v1508 = vadd.f32 %v1486, %v1493
  %v1509 = vadd.f32 %v1487, %v1497
  %v1510 = vmax.f32 %v1500, 0.0
  %v1511 = vmax.f32 %v1501, 0.0
  %v1512 = vmax.f32 %v1502, 0.0
  %v1513 = vmax.f32 %v1503, 0.0
  %v1514 = vmax.f32 %v1504, 0.0
  %v1515 = vmax.f32 %v1505, 0.0
  %v1516 = vmax.f32 %v1506, 0.0
  %v1517 = vmax.f32 %v1507, 0.0
  %v1518 = vmax.f32 %v1508, 0.0
  %v1519 = vmax.f32 %v1509, 0.0
  %v1520 = vld [vmem:[%s4] sm:$0xff]
  %v1521 = vld [vmem:[%s4 + $0x8] sm:$0xff]
  %vm1522 = vcmask 277504
  %v1524 = vsel %vm1522, %v1520, 0
  %v1527 = vsel %vm1522, %v1521, 0
  %vm1529 = vcmask 1041408
  %v1531 = vsel %vm1529, %v1518, 0
  %v1534 = vsel %vm1529, %v1519, 0
  %1536 = vmatprep.subr.mxu0 0.0
  %1537 = vmatpush1.msra.mxu0 0.0
  %1538 = vmatprep.subr.mxu0 0.0
  %1539 = vmatpush1.msra.mxu0 0.0
  %1540 = vmatprep.subr.mxu0 0.0
  %1541 = vmatpush1.msra.mxu0 0.0
  %1542 = vmatprep.subr.mxu0 0.0
  %1543 = vmatpush1.msra.mxu0 0.0
  %1544 = vmatprep.subr.mxu0 0.0
  %1545 = vmatpush1.msra.mxu0 0.0
  %1546 = vmatprep.subr.mxu0 0.0
  %1547 = vmatpush1.msra.mxu0 0.0
  %1548 = vmatprep.subr.mxu0 0.0
  %1549 = vmatpush1.msra.mxu0 0.0
  %1550 = vmatprep.subr.mxu0 0.0
  %1551 = vmatpush1.msra.mxu0 0.0
  %1552 = vmatprep.subr.mxu0 0.0
  %1553 = vmatpush1.msra.mxu0 0.0
  %1554 = vmatprep.subr.mxu0 0.0
  %1555 = vmatpush1.msra.mxu0 0.0
  %1556 = vmatprep.subr.mxu0 0.0
  %1557 = vmatpush1.msra.mxu0 0.0
  %1558 = vmatprep.subr.mxu0 %v1534
  %1559 = vmatpush1.msra.mxu0 %v1531
  %1560 = vmatprep.subr.mxu0 %v1517
  %1561 = vmatpush1.msra.mxu0 %v1516
  %1562 = vmatprep.subr.mxu0 %v1515
  %1563 = vmatpush1.msra.mxu0 %v1514
  %1564 = vmatprep.subr.mxu0 %v1513
  %1565 = vmatpush1.msra.mxu0 %v1512
  %1566 = vmatprep.subr.mxu0 %v1511
  %1567 = vmatpush1.msra.mxu0 %v1510
  %1568 = vmatprep.subr.mxu0 0.0
  %1569 = vmatpush2.msra.mxu0 0.0
  %1570 = vmatprep.subr.mxu0 0.0
  %1571 = vmatpush2.msra.mxu0 0.0
  %1572 = vmatprep.subr.mxu0 0.0
  %1573 = vmatpush2.msra.mxu0 0.0
  %1574 = vmatprep.subr.mxu0 0.0
  %1575 = vmatpush2.msra.mxu0 0.0
  %1576 = vmatprep.subr.mxu0 0.0
  %1577 = vmatpush2.msra.mxu0 0.0
  %1578 = vmatprep.subr.mxu0 0.0
  %1579 = vmatpush2.msra.mxu0 0.0
  %1580 = vmatprep.subr.mxu0 0.0
  %1581 = vmatpush2.msra.mxu0 0.0
  %1582 = vmatprep.subr.mxu0 0.0
  %1583 = vmatpush2.msra.mxu0 0.0
  %1584 = vmatprep.subr.mxu0 0.0
  %1585 = vmatpush2.msra.mxu0 0.0
  %1586 = vmatprep.subr.mxu0 0.0
  %1587 = vmatpush2.msra.mxu0 0.0
  %1588 = vmatprep.subr.mxu0 0.0
  %1589 = vmatpush2.msra.mxu0 0.0
  %1590 = vmatprep.subr.mxu0 0.0
  %1591 = vmatpush2.msra.mxu0 0.0
  %1592 = vmatprep.subr.mxu0 0.0
  %1593 = vmatpush2.msra.mxu0 0.0
  %1594 = vmatprep.subr.mxu0 0.0
  %1595 = vmatpush2.msra.mxu0 0.0
  %1596 = vmatprep.subr.mxu0 0.0
  %1597 = vmatpush2.msra.mxu0 0.0
  %1598 = vmatprep.subr.mxu0 0.0
  %1599 = vmatpush2.msra.mxu0 0.0
  %1600 = vmatprep.mubr.f32.mxu0 0.0
  %1601 = vmatmul.mubr.f32.gmra.mxu0 %v1524
  %v1602 = vpop.f32.mrf.mxu0
  %v1603 = vadd.f32 0.0, %v1602
  %v1604 = vpop.f32.mrf.mxu0
  %v1605 = vadd.f32 0.0, %v1604
  %1606 = vmatprep.mubr.f32.mxu0 0.0
  %1607 = vmatmul.mubr.f32.gmra.mxu0 %v1527
  %v1608 = vpop.f32.mrf.mxu0
  %v1609 = vadd.f32 0.0, %v1608
  %v1610 = vpop.f32.mrf.mxu0
  %v1611 = vadd.f32 0.0, %v1610
  %1612 = vdwg.mxu0
  %s1613 = scalar_lea.vmem %s4, 16
  %v1614 = vld [vmem:[%s1613] sm:$0xff]
  %v1615 = vld [vmem:[%s1613 + $0x8] sm:$0xff]
  %v1617 = vsel %vm1522, %v1614, 0
  %v1620 = vsel %vm1522, %v1615, 0
  %1622 = vmatprep.subr.mxu0 0.0
  %1623 = vmatpush1.msra.mxu0 0.0
  %1624 = vmatprep.subr.mxu0 0.0
  %1625 = vmatpush1.msra.mxu0 0.0
  %1626 = vmatprep.subr.mxu0 0.0
  %1627 = vmatpush1.msra.mxu0 0.0
  %1628 = vmatprep.subr.mxu0 0.0
  %1629 = vmatpush1.msra.mxu0 0.0
  %1630 = vmatprep.subr.mxu0 0.0
  %1631 = vmatpush1.msra.mxu0 0.0
  %1632 = vmatprep.subr.mxu0 0.0
  %1633 = vmatpush1.msra.mxu0 0.0
  %1634 = vmatprep.subr.mxu0 0.0
  %1635 = vmatpush1.msra.mxu0 0.0
  %1636 = vmatprep.subr.mxu0 0.0
  %1637 = vmatpush1.msra.mxu0 0.0
  %1638 = vmatprep.subr.mxu0 0.0
  %1639 = vmatpush1.msra.mxu0 0.0
  %1640 = vmatprep.subr.mxu0 0.0
  %1641 = vmatpush1.msra.mxu0 0.0
  %1642 = vmatprep.subr.mxu0 0.0
  %1643 = vmatpush1.msra.mxu0 0.0
  %1644 = vmatprep.subr.mxu0 %v1534
  %1645 = vmatpush1.msra.mxu0 %v1531
  %1646 = vmatprep.subr.mxu0 %v1517
  %1647 = vmatpush1.msra.mxu0 %v1516
  %1648 = vmatprep.subr.mxu0 %v1515
  %1649 = vmatpush1.msra.mxu0 %v1514
  %1650 = vmatprep.subr.mxu0 %v1513
  %1651 = vmatpush1.msra.mxu0 %v1512
  %1652 = vmatprep.subr.mxu0 %v1511
  %1653 = vmatpush1.msra.mxu0 %v1510
  %1654 = vmatprep.subr.mxu0 0.0
  %1655 = vmatpush2.msra.mxu0 0.0
  %1656 = vmatprep.subr.mxu0 0.0
  %1657 = vmatpush2.msra.mxu0 0.0
  %1658 = vmatprep.subr.mxu0 0.0
  %1659 = vmatpush2.msra.mxu0 0.0
  %1660 = vmatprep.subr.mxu0 0.0
  %1661 = vmatpush2.msra.mxu0 0.0
  %1662 = vmatprep.subr.mxu0 0.0
  %1663 = vmatpush2.msra.mxu0 0.0
  %1664 = vmatprep.subr.mxu0 0.0
  %1665 = vmatpush2.msra.mxu0 0.0
  %1666 = vmatprep.subr.mxu0 0.0
  %1667 = vmatpush2.msra.mxu0 0.0
  %1668 = vmatprep.subr.mxu0 0.0
  %1669 = vmatpush2.msra.mxu0 0.0
  %1670 = vmatprep.subr.mxu0 0.0
  %1671 = vmatpush2.msra.mxu0 0.0
  %1672 = vmatprep.subr.mxu0 0.0
  %1673 = vmatpush2.msra.mxu0 0.0
  %1674 = vmatprep.subr.mxu0 0.0
  %1675 = vmatpush2.msra.mxu0 0.0
  %1676 = vmatprep.subr.mxu0 0.0
  %1677 = vmatpush2.msra.mxu0 0.0
  %1678 = vmatprep.subr.mxu0 0.0
  %1679 = vmatpush2.msra.mxu0 0.0
  %1680 = vmatprep.subr.mxu0 0.0
  %1681 = vmatpush2.msra.mxu0 0.0
  %1682 = vmatprep.subr.mxu0 0.0
  %1683 = vmatpush2.msra.mxu0 0.0
  %1684 = vmatprep.subr.mxu0 0.0
  %1685 = vmatpush2.msra.mxu0 0.0
  %1686 = vmatprep.mubr.f32.mxu0 0.0
  %1687 = vmatmul.mubr.f32.gmra.mxu0 %v1617
  %v1688 = vpop.f32.mrf.mxu0
  %v1689 = vadd.f32 0.0, %v1688
  %v1690 = vpop.f32.mrf.mxu0
  %v1691 = vadd.f32 0.0, %v1690
  %1692 = vmatprep.mubr.f32.mxu0 0.0
  %1693 = vmatmul.mubr.f32.gmra.mxu0 %v1620
  %v1694 = vpop.f32.mrf.mxu0
  %v1695 = vadd.f32 0.0, %v1694
  %v1696 = vpop.f32.mrf.mxu0
  %v1697 = vadd.f32 0.0, %v1696
  %1698 = vdwg.mxu0
  %v1699 = vmax.f32 %v1603, %v1689
  %v1700 = vmax.f32 %v1605, %v1691
  %v1701 = vmax.f32 %v1609, %v1695
  %v1702 = vmax.f32 %v1611, %v1697
  %v1703 = vld [vmem:[%s5] sm:$0xff]
  %v1704 = vld [vmem:[%s5 + $0x8] sm:$0xff]
  %v1705 = vld [vmem:[%s5 + $0x10] sm:$0xff]
  %v1706 = vld [vmem:[%s5 + $0x18] sm:$0xff]
  %v1707 = vld [vmem:[%s5 + $0x20] sm:$0xff]
  %v1708 = vld [vmem:[%s5 + $0x28] sm:$0xff]
  %v1709 = vld [vmem:[%s5 + $0x30] sm:$0xff]
  %v1710 = vld [vmem:[%s5 + $0x38] sm:$0xff]
  %v1711 = vld [vmem:[%s5 + $0x40] sm:$0xff]
  %v1712 = vld [vmem:[%s5 + $0x48] sm:$0xff]
  %v1713 = vld [vmem:[%s5 + $0x50] sm:$0xff]
  %v1714 = vld [vmem:[%s5 + $0x58] sm:$0xff]
  %v1715 = vld [vmem:[%s5 + $0x60] sm:$0xff]
  %v1716 = vld [vmem:[%s5 + $0x68] sm:$0xff]
  %v1717 = vld [vmem:[%s5 + $0x70] sm:$0xff]
  %v1718 = vld [vmem:[%s5 + $0x78] sm:$0xff]
  %v1719 = vld [vmem:[%s5 + $0x80] sm:$0xff]
  %vm1720 = vcmask 64512
  %v1722 = vsel %vm1720, %v1700, 0
  %v1725 = vsel %vm1720, %v1702, 0
  %1727 = vmatprep.subr.mxu0 0.0
  %1728 = vmatpush1.msra.mxu0 %v1718
  %1729 = vmatprep.subr.mxu0 0.0
  %1730 = vmatpush1.msra.mxu0 %v1717
  %1731 = vmatprep.subr.mxu0 0.0
  %1732 = vmatpush1.msra.mxu0 %v1716
  %1733 = vmatprep.subr.mxu0 0.0
  %1734 = vmatpush1.msra.mxu0 %v1715
  %1735 = vmatprep.subr.mxu0 0.0
  %1736 = vmatpush1.msra.mxu0 %v1714
  %1737 = vmatprep.subr.mxu0 0.0
  %1738 = vmatpush1.msra.mxu0 %v1713
  %1739 = vmatprep.subr.mxu0 0.0
  %1740 = vmatpush1.msra.mxu0 %v1712
  %1741 = vmatprep.subr.mxu0 0.0
  %1742 = vmatpush1.msra.mxu0 %v1711
  %1743 = vmatprep.subr.mxu0 0.0
  %1744 = vmatpush1.msra.mxu0 %v1710
  %1745 = vmatprep.subr.mxu0 0.0
  %1746 = vmatpush1.msra.mxu0 %v1709
  %1747 = vmatprep.subr.mxu0 0.0
  %1748 = vmatpush1.msra.mxu0 %v1708
  %1749 = vmatprep.subr.mxu0 0.0
  %1750 = vmatpush1.msra.mxu0 %v1707
  %1751 = vmatprep.subr.mxu0 0.0
  %1752 = vmatpush1.msra.mxu0 %v1706
  %1753 = vmatprep.subr.mxu0 0.0
  %1754 = vmatpush1.msra.mxu0 %v1705
  %1755 = vmatprep.subr.mxu0 0.0
  %1756 = vmatpush1.msra.mxu0 %v1704
  %1757 = vmatprep.subr.mxu0 0.0
  %1758 = vmatpush1.msra.mxu0 %v1703
  %1759 = vmatprep.subr.mxu0 0.0
  %1760 = vmatpush2.msra.mxu0 0.0
  %1761 = vmatprep.subr.mxu0 0.0
  %1762 = vmatpush2.msra.mxu0 0.0
  %1763 = vmatprep.subr.mxu0 0.0
  %1764 = vmatpush2.msra.mxu0 0.0
  %1765 = vmatprep.subr.mxu0 0.0
  %1766 = vmatpush2.msra.mxu0 0.0
  %1767 = vmatprep.subr.mxu0 0.0
  %1768 = vmatpush2.msra.mxu0 0.0
  %1769 = vmatprep.subr.mxu0 0.0
  %1770 = vmatpush2.msra.mxu0 0.0
  %1771 = vmatprep.subr.mxu0 0.0
  %1772 = vmatpush2.msra.mxu0 0.0
  %1773 = vmatprep.subr.mxu0 0.0
  %1774 = vmatpush2.msra.mxu0 0.0
  %1775 = vmatprep.subr.mxu0 0.0
  %1776 = vmatpush2.msra.mxu0 0.0
  %1777 = vmatprep.subr.mxu0 0.0
  %1778 = vmatpush2.msra.mxu0 0.0
  %1779 = vmatprep.subr.mxu0 0.0
  %1780 = vmatpush2.msra.mxu0 0.0
  %1781 = vmatprep.subr.mxu0 0.0
  %1782 = vmatpush2.msra.mxu0 0.0
  %1783 = vmatprep.subr.mxu0 0.0
  %1784 = vmatpush2.msra.mxu0 0.0
  %1785 = vmatprep.subr.mxu0 0.0
  %1786 = vmatpush2.msra.mxu0 0.0
  %1787 = vmatprep.subr.mxu0 0.0
  %1788 = vmatpush2.msra.mxu0 0.0
  %1789 = vmatprep.subr.mxu0 0.0
  %1790 = vmatpush2.msra.mxu0 %v1719
  %1791 = vmatprep.mubr.f32.mxu0 %v1722
  %1792 = vmatmul.mubr.f32.gmra.mxu0 %v1699
  %v1793 = vpop.f32.mrf.mxu0
  %v1794 = vadd.f32 0.0, %v1793
  %v1795 = vpop.f32.mrf.mxu0
  %1796 = vmatprep.mubr.f32.mxu0 %v1725
  %1797 = vmatmul.mubr.f32.gmra.mxu0 %v1701
  %v1798 = vpop.f32.mrf.mxu0
  %v1799 = vadd.f32 0.0, %v1798
  %v1800 = vpop.f32.mrf.mxu0
  %1801 = vdwg.mxu0
  %s1802 = scalar_lea.vmem %s5, 136
  %v1803 = vld [vmem:[%s1802] sm:$0xff]
  %v1804 = vld [vmem:[%s1802 + $0x8] sm:$0xff]
  %v1805 = vld [vmem:[%s1802 + $0x10] sm:$0xff]
  %v1806 = vld [vmem:[%s1802 + $0x18] sm:$0xff]
  %v1807 = vld [vmem:[%s1802 + $0x20] sm:$0xff]
  %v1808 = vld [vmem:[%s1802 + $0x28] sm:$0xff]
  %v1809 = vld [vmem:[%s1802 + $0x30] sm:$0xff]
  %v1810 = vld [vmem:[%s1802 + $0x38] sm:$0xff]
  %v1811 = vld [vmem:[%s1802 + $0x40] sm:$0xff]
  %v1812 = vld [vmem:[%s1802 + $0x48] sm:$0xff]
  %v1813 = vld [vmem:[%s1802 + $0x50] sm:$0xff]
  %v1814 = vld [vmem:[%s1802 + $0x58] sm:$0xff]
  %v1815 = vld [vmem:[%s1802 + $0x60] sm:$0xff]
  %v1816 = vld [vmem:[%s1802 + $0x68] sm:$0xff]
  %v1817 = vld [vmem:[%s1802 + $0x70] sm:$0xff]
  %v1818 = vld [vmem:[%s1802 + $0x78] sm:$0xff]
  %v1819 = vld [vmem:[%s1802 + $0x80] sm:$0xff]
  %1820 = vmatprep.subr.mxu0 0.0
  %1821 = vmatpush1.msra.mxu0 %v1818
  %1822 = vmatprep.subr.mxu0 0.0
  %1823 = vmatpush1.msra.mxu0 %v1817
  %1824 = vmatprep.subr.mxu0 0.0
  %1825 = vmatpush1.msra.mxu0 %v1816
  %1826 = vmatprep.subr.mxu0 0.0
  %1827 = vmatpush1.msra.mxu0 %v1815
  %1828 = vmatprep.subr.mxu0 0.0
  %1829 = vmatpush1.msra.mxu0 %v1814
  %1830 = vmatprep.subr.mxu0 0.0
  %1831 = vmatpush1.msra.mxu0 %v1813
  %1832 = vmatprep.subr.mxu0 0.0
  %1833 = vmatpush1.msra.mxu0 %v1812
  %1834 = vmatprep.subr.mxu0 0.0
  %1835 = vmatpush1.msra.mxu0 %v1811
  %1836 = vmatprep.subr.mxu0 0.0
  %1837 = vmatpush1.msra.mxu0 %v1810
  %1838 = vmatprep.subr.mxu0 0.0
  %1839 = vmatpush1.msra.mxu0 %v1809
  %1840 = vmatprep.subr.mxu0 0.0
  %1841 = vmatpush1.msra.mxu0 %v1808
  %1842 = vmatprep.subr.mxu0 0.0
  %1843 = vmatpush1.msra.mxu0 %v1807
  %1844 = vmatprep.subr.mxu0 0.0
  %1845 = vmatpush1.msra.mxu0 %v1806
  %1846 = vmatprep.subr.mxu0 0.0
  %1847 = vmatpush1.msra.mxu0 %v1805
  %1848 = vmatprep.subr.mxu0 0.0
  %1849 = vmatpush1.msra.mxu0 %v1804
  %1850 = vmatprep.subr.mxu0 0.0
  %1851 = vmatpush1.msra.mxu0 %v1803
  %1852 = vmatprep.subr.mxu0 0.0
  %1853 = vmatpush2.msra.mxu0 0.0
  %1854 = vmatprep.subr.mxu0 0.0
  %1855 = vmatpush2.msra.mxu0 0.0
  %1856 = vmatprep.subr.mxu0 0.0
  %1857 = vmatpush2.msra.mxu0 0.0
  %1858 = vmatprep.subr.mxu0 0.0
  %1859 = vmatpush2.msra.mxu0 0.0
  %1860 = vmatprep.subr.mxu0 0.0
  %1861 = vmatpush2.msra.mxu0 0.0
  %1862 = vmatprep.subr.mxu0 0.0
  %1863 = vmatpush2.msra.mxu0 0.0
  %1864 = vmatprep.subr.mxu0 0.0
  %1865 = vmatpush2.msra.mxu0 0.0
  %1866 = vmatprep.subr.mxu0 0.0
  %1867 = vmatpush2.msra.mxu0 0.0
  %1868 = vmatprep.subr.mxu0 0.0
  %1869 = vmatpush2.msra.mxu0 0.0
  %1870 = vmatprep.subr.mxu0 0.0
  %1871 = vmatpush2.msra.mxu0 0.0
  %1872 = vmatprep.subr.mxu0 0.0
  %1873 = vmatpush2.msra.mxu0 0.0
  %1874 = vmatprep.subr.mxu0 0.0
  %1875 = vmatpush2.msra.mxu0 0.0
  %1876 = vmatprep.subr.mxu0 0.0
  %1877 = vmatpush2.msra.mxu0 0.0
  %1878 = vmatprep.subr.mxu0 0.0
  %1879 = vmatpush2.msra.mxu0 0.0
  %1880 = vmatprep.subr.mxu0 0.0
  %1881 = vmatpush2.msra.mxu0 0.0
  %1882 = vmatprep.subr.mxu0 0.0
  %1883 = vmatpush2.msra.mxu0 %v1819
  %1884 = vmatprep.mubr.f32.mxu0 %v1722
  %1885 = vmatmul.mubr.f32.gmra.mxu0 %v1699
  %v1886 = vpop.f32.mrf.mxu0
  %v1887 = vadd.f32 0.0, %v1886
  %v1888 = vpop.f32.mrf.mxu0
  %1889 = vmatprep.mubr.f32.mxu0 %v1725
  %1890 = vmatmul.mubr.f32.gmra.mxu0 %v1701
  %v1891 = vpop.f32.mrf.mxu0
  %v1892 = vadd.f32 0.0, %v1891
  %v1893 = vpop.f32.mrf.mxu0
  %1894 = vdwg.mxu0
  %v1895 = vmax.f32 %v1794, %v1887
  %v1896 = vmax.f32 %v1799, %v1892
  %v1897 = vld [vmem:[%s6] sm:$0xff]
  %v1898 = vld [vmem:[%s6 + $0x8] sm:$0xff]
  %v1899 = vld [vmem:[%s6 + $0x10] sm:$0x3]
  %v1901 = vsel %vm323, %v1897, 0
  %v1904 = vsel %vm323, %v1898, 0
  %v1907 = vsel %vm323, %v1899, 0
  %1909 = vmatprep.subr.mxu0 0.0
  %1910 = vmatpush1.msra.mxu0 0.0
  %1911 = vmatprep.subr.mxu0 0.0
  %1912 = vmatpush1.msra.mxu0 0.0
  %1913 = vmatprep.subr.mxu0 0.0
  %1914 = vmatpush1.msra.mxu0 0.0
  %1915 = vmatprep.subr.mxu0 0.0
  %1916 = vmatpush1.msra.mxu0 0.0
  %1917 = vmatprep.subr.mxu0 0.0
  %1918 = vmatpush1.msra.mxu0 0.0
  %1919 = vmatprep.subr.mxu0 0.0
  %1920 = vmatpush1.msra.mxu0 0.0
  %1921 = vmatprep.subr.mxu0 0.0
  %1922 = vmatpush1.msra.mxu0 0.0
  %1923 = vmatprep.subr.mxu0 0.0
  %1924 = vmatpush1.msra.mxu0 0.0
  %1925 = vmatprep.subr.mxu0 0.0
  %1926 = vmatpush1.msra.mxu0 0.0
  %1927 = vmatprep.subr.mxu0 0.0
  %1928 = vmatpush1.msra.mxu0 0.0
  %1929 = vmatprep.subr.mxu0 0.0
  %1930 = vmatpush1.msra.mxu0 0.0
  %1931 = vmatprep.subr.mxu0 0.0
  %1932 = vmatpush1.msra.mxu0 0.0
  %1933 = vmatprep.subr.mxu0 0.0
  %1934 = vmatpush1.msra.mxu0 0.0
  %1935 = vmatprep.subr.mxu0 0.0
  %1936 = vmatpush1.msra.mxu0 0.0
  %1937 = vmatprep.subr.mxu0 0.0
  %1938 = vmatpush1.msra.mxu0 %v1896
  %1939 = vmatprep.subr.mxu0 0.0
  %1940 = vmatpush1.msra.mxu0 %v1895
  %1941 = vmatprep.subr.mxu0 0.0
  %1942 = vmatpush2.msra.mxu0 0.0
  %1943 = vmatprep.subr.mxu0 0.0
  %1944 = vmatpush2.msra.mxu0 0.0
  %1945 = vmatprep.subr.mxu0 0.0
  %1946 = vmatpush2.msra.mxu0 0.0
  %1947 = vmatprep.subr.mxu0 0.0
  %1948 = vmatpush2.msra.mxu0 0.0
  %1949 = vmatprep.subr.mxu0 0.0
  %1950 = vmatpush2.msra.mxu0 0.0
  %1951 = vmatprep.subr.mxu0 0.0
  %1952 = vmatpush2.msra.mxu0 0.0
  %1953 = vmatprep.subr.mxu0 0.0
  %1954 = vmatpush2.msra.mxu0 0.0
  %1955 = vmatprep.subr.mxu0 0.0
  %1956 = vmatpush2.msra.mxu0 0.0
  %1957 = vmatprep.subr.mxu0 0.0
  %1958 = vmatpush2.msra.mxu0 0.0
  %1959 = vmatprep.subr.mxu0 0.0
  %1960 = vmatpush2.msra.mxu0 0.0
  %1961 = vmatprep.subr.mxu0 0.0
  %1962 = vmatpush2.msra.mxu0 0.0
  %1963 = vmatprep.subr.mxu0 0.0
  %1964 = vmatpush2.msra.mxu0 0.0
  %1965 = vmatprep.subr.mxu0 0.0
  %1966 = vmatpush2.msra.mxu0 0.0
  %1967 = vmatprep.subr.mxu0 0.0
  %1968 = vmatpush2.msra.mxu0 0.0
  %1969 = vmatprep.subr.mxu0 0.0
  %1970 = vmatpush2.msra.mxu0 0.0
  %1971 = vmatprep.subr.mxu0 0.0
  %1972 = vmatpush2.msra.mxu0 0.0
  %1973 = vmatprep.mubr.f32.mxu0 0.0
  %1974 = vmatmul.mubr.f32.gmra.mxu0 %v1901
  %v1975 = vpop.f32.mrf.mxu0
  %v1976 = vadd.f32 0.0, %v1975
  %v1977 = vpop.f32.mrf.mxu0
  %1978 = vmatprep.mubr.f32.mxu0 0.0
  %1979 = vmatmul.mubr.f32.gmra.mxu0 %v1904
  %v1980 = vpop.f32.mrf.mxu0
  %v1981 = vadd.f32 0.0, %v1980
  %v1982 = vpop.f32.mrf.mxu0
  %1983 = vmatprep.mubr.f32.mxu0 0.0
  %1984 = vmatmul.mubr.f32.gmra.mxu0 %v1907
  %v1985 = vpop.f32.mrf.mxu0
  %v1986 = vadd.f32 0.0, %v1985
  %v1987 = vpop.f32.mrf.mxu0
  %1988 = vdwg.mxu0
  %v1989 = vld [vmem:[%s7] sm:$0xff]
  %v1990 = vld [vmem:[%s7 + $0x8] sm:$0xff]
  %v1991 = vld [vmem:[%s7 + $0x10] sm:$0xff]
  %v1992 = vld [vmem:[%s7 + $0x18] sm:$0xff]
  %v1993 = vld [vmem:[%s7 + $0x20] sm:$0xff]
  %v1994 = vld [vmem:[%s7 + $0x28] sm:$0xff]
  %v1995 = vld [vmem:[%s7 + $0x30] sm:$0xff]
  %v1996 = vld [vmem:[%s7 + $0x38] sm:$0xff]
  %v1997 = vld [vmem:[%s7 + $0x40] sm:$0xff]
  %v1998 = vld [vmem:[%s7 + $0x48] sm:$0xff]
  %v1999 = vld [vmem:[%s7 + $0x50] sm:$0xff]
  %v2000 = vld [vmem:[%s7 + $0x58] sm:$0xff]
  %v2001 = vld [vmem:[%s7 + $0x60] sm:$0xff]
  %v2002 = vld [vmem:[%s7 + $0x68] sm:$0xff]
  %v2003 = vld [vmem:[%s7 + $0x70] sm:$0xff]
  %v2004 = vld [vmem:[%s7 + $0x78] sm:$0xff]
  %s2005 = scalar_lea.vmem %s6, 24
  %v2006 = vld [vmem:[%s2005] sm:$0xff]
  %v2007 = vld [vmem:[%s2005 + $0x8] sm:$0xff]
  %v2008 = vld [vmem:[%s2005 + $0x10] sm:$0x3]
  %v2010 = vsel %vm323, %v2006, 0
  %v2013 = vsel %vm323, %v2007, 0
  %v2016 = vsel %vm323, %v2008, 0
  %2018 = vmatprep.subr.mxu0 0.0
  %2019 = vmatpush1.msra.mxu0 0.0
  %2020 = vmatprep.subr.mxu0 0.0
  %2021 = vmatpush1.msra.mxu0 0.0
  %2022 = vmatprep.subr.mxu0 0.0
  %2023 = vmatpush1.msra.mxu0 0.0
  %2024 = vmatprep.subr.mxu0 0.0
  %2025 = vmatpush1.msra.mxu0 0.0
  %2026 = vmatprep.subr.mxu0 0.0
  %2027 = vmatpush1.msra.mxu0 0.0
  %2028 = vmatprep.subr.mxu0 0.0
  %2029 = vmatpush1.msra.mxu0 0.0
  %2030 = vmatprep.subr.mxu0 0.0
  %2031 = vmatpush1.msra.mxu0 0.0
  %2032 = vmatprep.subr.mxu0 0.0
  %2033 = vmatpush1.msra.mxu0 0.0
  %2034 = vmatprep.subr.mxu0 0.0
  %2035 = vmatpush1.msra.mxu0 0.0
  %2036 = vmatprep.subr.mxu0 0.0
  %2037 = vmatpush1.msra.mxu0 0.0
  %2038 = vmatprep.subr.mxu0 0.0
  %2039 = vmatpush1.msra.mxu0 0.0
  %2040 = vmatprep.subr.mxu0 0.0
  %2041 = vmatpush1.msra.mxu0 0.0
  %2042 = vmatprep.subr.mxu0 0.0
  %2043 = vmatpush1.msra.mxu0 0.0
  %2044 = vmatprep.subr.mxu0 0.0
  %2045 = vmatpush1.msra.mxu0 0.0
  %2046 = vmatprep.subr.mxu0 0.0
  %2047 = vmatpush1.msra.mxu0 %v1896
  %2048 = vmatprep.subr.mxu0 0.0
  %2049 = vmatpush1.msra.mxu0 %v1895
  %2050 = vmatprep.subr.mxu0 0.0
  %2051 = vmatpush2.msra.mxu0 0.0
  %2052 = vmatprep.subr.mxu0 0.0
  %2053 = vmatpush2.msra.mxu0 0.0
  %2054 = vmatprep.subr.mxu0 0.0
  %2055 = vmatpush2.msra.mxu0 0.0
  %2056 = vmatprep.subr.mxu0 0.0
  %2057 = vmatpush2.msra.mxu0 0.0
  %2058 = vmatprep.subr.mxu0 0.0
  %2059 = vmatpush2.msra.mxu0 0.0
  %2060 = vmatprep.subr.mxu0 0.0
  %2061 = vmatpush2.msra.mxu0 0.0
  %2062 = vmatprep.subr.mxu0 0.0
  %2063 = vmatpush2.msra.mxu0 0.0
  %2064 = vmatprep.subr.mxu0 0.0
  %2065 = vmatpush2.msra.mxu0 0.0
  %2066 = vmatprep.subr.mxu0 0.0
  %2067 = vmatpush2.msra.mxu0 0.0
  %2068 = vmatprep.subr.mxu0 0.0
  %2069 = vmatpush2.msra.mxu0 0.0
  %2070 = vmatprep.subr.mxu0 0.0
  %2071 = vmatpush2.msra.mxu0 0.0
  %2072 = vmatprep.subr.mxu0 0.0
  %2073 = vmatpush2.msra.mxu0 0.0
  %2074 = vmatprep.subr.mxu0 0.0
  %2075 = vmatpush2.msra.mxu0 0.0
  %2076 = vmatprep.subr.mxu0 0.0
  %2077 = vmatpush2.msra.mxu0 0.0
  %2078 = vmatprep.subr.mxu0 0.0
  %2079 = vmatpush2.msra.mxu0 0.0
  %2080 = vmatprep.subr.mxu0 0.0
  %2081 = vmatpush2.msra.mxu0 0.0
  %2082 = vmatprep.mubr.f32.mxu0 0.0
  %2083 = vmatmul.mubr.f32.gmra.mxu0 %v2010
  %v2084 = vpop.f32.mrf.mxu0
  %v2085 = vadd.f32 0.0, %v2084
  %v2086 = vpop.f32.mrf.mxu0
  %2087 = vmatprep.mubr.f32.mxu0 0.0
  %2088 = vmatmul.mubr.f32.gmra.mxu0 %v2013
  %v2089 = vpop.f32.mrf.mxu0
  %v2090 = vadd.f32 0.0, %v2089
  %v2091 = vpop.f32.mrf.mxu0
  %2092 = vmatprep.mubr.f32.mxu0 0.0
  %2093 = vmatmul.mubr.f32.gmra.mxu0 %v2016
  %v2094 = vpop.f32.mrf.mxu0
  %v2095 = vadd.f32 0.0, %v2094
  %v2096 = vpop.f32.mrf.mxu0
  %2097 = vdwg.mxu0
  %s2098 = scalar_lea.vmem %s7, 128
  %v2099 = vld [vmem:[%s2098] sm:$0xff]
  %v2100 = vld [vmem:[%s2098 + $0x8] sm:$0xff]
  %v2101 = vld [vmem:[%s2098 + $0x10] sm:$0xff]
  %v2102 = vld [vmem:[%s2098 + $0x18] sm:$0xff]
  %v2103 = vld [vmem:[%s2098 + $0x20] sm:$0xff]
  %v2104 = vld [vmem:[%s2098 + $0x28] sm:$0xff]
  %v2105 = vld [vmem:[%s2098 + $0x30] sm:$0xff]
  %v2106 = vld [vmem:[%s2098 + $0x38] sm:$0xff]
  %v2107 = vld [vmem:[%s2098 + $0x40] sm:$0xff]
  %v2108 = vld [vmem:[%s2098 + $0x48] sm:$0xff]
  %v2109 = vld [vmem:[%s2098 + $0x50] sm:$0xff]
  %v2110 = vld [vmem:[%s2098 + $0x58] sm:$0xff]
  %v2111 = vld [vmem:[%s2098 + $0x60] sm:$0xff]
  %v2112 = vld [vmem:[%s2098 + $0x68] sm:$0xff]
  %v2113 = vld [vmem:[%s2098 + $0x70] sm:$0xff]
  %v2114 = vld [vmem:[%s2098 + $0x78] sm:$0xff]
  %vm2115 = vcmask 523264
  %v2117 = vsel %vm2115, %v2085, 0
  %v2120 = vsel %vm2115, %v2090, 0
  %v2123 = vsel %vm2115, %v2095, 0
  %2125 = vmatprep.subr.mxu0 0.0
  %2126 = vmatpush1.msra.mxu0 0.0
  %2127 = vmatprep.subr.mxu0 0.0
  %2128 = vmatpush1.msra.mxu0 0.0
  %2129 = vmatprep.subr.mxu0 0.0
  %2130 = vmatpush1.msra.mxu0 0.0
  %2131 = vmatprep.subr.mxu0 0.0
  %2132 = vmatpush1.msra.mxu0 0.0
  %2133 = vmatprep.subr.mxu0 0.0
  %2134 = vmatpush1.msra.mxu0 0.0
  %2135 = vmatprep.subr.mxu0 0.0
  %2136 = vmatpush1.msra.mxu0 0.0
  %2137 = vmatprep.subr.mxu0 0.0
  %2138 = vmatpush1.msra.mxu0 0.0
  %2139 = vmatprep.subr.mxu0 0.0
  %2140 = vmatpush1.msra.mxu0 0.0
  %2141 = vmatprep.subr.mxu0 %v2114
  %2142 = vmatpush1.msra.mxu0 %v2113
  %2143 = vmatprep.subr.mxu0 %v2112
  %2144 = vmatpush1.msra.mxu0 %v2111
  %2145 = vmatprep.subr.mxu0 %v2110
  %2146 = vmatpush1.msra.mxu0 %v2109
  %2147 = vmatprep.subr.mxu0 %v2108
  %2148 = vmatpush1.msra.mxu0 %v2107
  %2149 = vmatprep.subr.mxu0 %v2106
  %2150 = vmatpush1.msra.mxu0 %v2105
  %2151 = vmatprep.subr.mxu0 %v2104
  %2152 = vmatpush1.msra.mxu0 %v2103
  %2153 = vmatprep.subr.mxu0 %v2102
  %2154 = vmatpush1.msra.mxu0 %v2101
  %2155 = vmatprep.subr.mxu0 %v2100
  %2156 = vmatpush1.msra.mxu0 %v2099
  %2157 = vmatprep.subr.mxu0 0.0
  %2158 = vmatpush2.msra.mxu0 0.0
  %2159 = vmatprep.subr.mxu0 0.0
  %2160 = vmatpush2.msra.mxu0 0.0
  %2161 = vmatprep.subr.mxu0 0.0
  %2162 = vmatpush2.msra.mxu0 0.0
  %2163 = vmatprep.subr.mxu0 0.0
  %2164 = vmatpush2.msra.mxu0 0.0
  %2165 = vmatprep.subr.mxu0 0.0
  %2166 = vmatpush2.msra.mxu0 0.0
  %2167 = vmatprep.subr.mxu0 0.0
  %2168 = vmatpush2.msra.mxu0 0.0
  %2169 = vmatprep.subr.mxu0 0.0
  %2170 = vmatpush2.msra.mxu0 0.0
  %2171 = vmatprep.subr.mxu0 0.0
  %2172 = vmatpush2.msra.mxu0 0.0
  %2173 = vmatprep.subr.mxu0 0.0
  %2174 = vmatpush2.msra.mxu0 0.0
  %2175 = vmatprep.subr.mxu0 0.0
  %2176 = vmatpush2.msra.mxu0 0.0
  %2177 = vmatprep.subr.mxu0 0.0
  %2178 = vmatpush2.msra.mxu0 0.0
  %2179 = vmatprep.subr.mxu0 0.0
  %2180 = vmatpush2.msra.mxu0 0.0
  %2181 = vmatprep.subr.mxu0 0.0
  %2182 = vmatpush2.msra.mxu0 0.0
  %2183 = vmatprep.subr.mxu0 0.0
  %2184 = vmatpush2.msra.mxu0 0.0
  %2185 = vmatprep.subr.mxu0 0.0
  %2186 = vmatpush2.msra.mxu0 0.0
  %2187 = vmatprep.subr.mxu0 0.0
  %2188 = vmatpush2.msra.mxu0 0.0
  %2189 = vmatprep.mubr.f32.mxu0 0.0
  %2190 = vmatmul.mubr.f32.gmra.mxu0 %v2117
  %v2191 = vpop.f32.mrf.mxu0
  %v2192 = vadd.f32 0.0, %v2191
  %v2193 = vpop.f32.mrf.mxu0
  %v2194 = vadd.f32 0.0, %v2193
  %2195 = vmatprep.mubr.f32.mxu0 0.0
  %2196 = vmatmul.mubr.f32.gmra.mxu0 %v2120
  %v2197 = vpop.f32.mrf.mxu0
  %v2198 = vadd.f32 0.0, %v2197
  %v2199 = vpop.f32.mrf.mxu0
  %v2200 = vadd.f32 0.0, %v2199
  %2201 = vmatprep.mubr.f32.mxu0 0.0
  %2202 = vmatmul.mubr.f32.gmra.mxu0 %v2123
  %v2203 = vpop.f32.mrf.mxu0
  %v2204 = vadd.f32 0.0, %v2203
  %v2205 = vpop.f32.mrf.mxu0
  %v2206 = vadd.f32 0.0, %v2205
  %2207 = vdwg.mxu0
  %v2209 = vsel %vm2115, %v1976, 0
  %v2212 = vsel %vm2115, %v1981, 0
  %v2215 = vsel %vm2115, %v1986, 0
  %2217 = vmatprep.subr.mxu0 0.0
  %2218 = vmatpush1.msra.mxu0 0.0
  %2219 = vmatprep.subr.mxu0 0.0
  %2220 = vmatpush1.msra.mxu0 0.0
  %2221 = vmatprep.subr.mxu0 0.0
  %2222 = vmatpush1.msra.mxu0 0.0
  %2223 = vmatprep.subr.mxu0 0.0
  %2224 = vmatpush1.msra.mxu0 0.0
  %2225 = vmatprep.subr.mxu0 0.0
  %2226 = vmatpush1.msra.mxu0 0.0
  %2227 = vmatprep.subr.mxu0 0.0
  %2228 = vmatpush1.msra.mxu0 0.0
  %2229 = vmatprep.subr.mxu0 0.0
  %2230 = vmatpush1.msra.mxu0 0.0
  %2231 = vmatprep.subr.mxu0 0.0
  %2232 = vmatpush1.msra.mxu0 0.0
  %2233 = vmatprep.subr.mxu0 %v2004
  %2234 = vmatpush1.msra.mxu0 %v2003
  %2235 = vmatprep.subr.mxu0 %v2002
  %2236 = vmatpush1.msra.mxu0 %v2001
  %2237 = vmatprep.subr.mxu0 %v2000
  %2238 = vmatpush1.msra.mxu0 %v1999
  %2239 = vmatprep.subr.mxu0 %v1998
  %2240 = vmatpush1.msra.mxu0 %v1997
  %2241 = vmatprep.subr.mxu0 %v1996
  %2242 = vmatpush1.msra.mxu0 %v1995
  %2243 = vmatprep.subr.mxu0 %v1994
  %2244 = vmatpush1.msra.mxu0 %v1993
  %2245 = vmatprep.subr.mxu0 %v1992
  %2246 = vmatpush1.msra.mxu0 %v1991
  %2247 = vmatprep.subr.mxu0 %v1990
  %2248 = vmatpush1.msra.mxu0 %v1989
  %2249 = vmatprep.subr.mxu0 0.0
  %2250 = vmatpush2.msra.mxu0 0.0
  %2251 = vmatprep.subr.mxu0 0.0
  %2252 = vmatpush2.msra.mxu0 0.0
  %2253 = vmatprep.subr.mxu0 0.0
  %2254 = vmatpush2.msra.mxu0 0.0
  %2255 = vmatprep.subr.mxu0 0.0
  %2256 = vmatpush2.msra.mxu0 0.0
  %2257 = vmatprep.subr.mxu0 0.0
  %2258 = vmatpush2.msra.mxu0 0.0
  %2259 = vmatprep.subr.mxu0 0.0
  %2260 = vmatpush2.msra.mxu0 0.0
  %2261 = vmatprep.subr.mxu0 0.0
  %2262 = vmatpush2.msra.mxu0 0.0
  %2263 = vmatprep.subr.mxu0 0.0
  %2264 = vmatpush2.msra.mxu0 0.0
  %2265 = vmatprep.subr.mxu0 0.0
  %2266 = vmatpush2.msra.mxu0 0.0
  %2267 = vmatprep.subr.mxu0 0.0
  %2268 = vmatpush2.msra.mxu0 0.0
  %2269 = vmatprep.subr.mxu0 0.0
  %2270 = vmatpush2.msra.mxu0 0.0
  %2271 = vmatprep.subr.mxu0 0.0
  %2272 = vmatpush2.msra.mxu0 0.0
  %2273 = vmatprep.subr.mxu0 0.0
  %2274 = vmatpush2.msra.mxu0 0.0
  %2275 = vmatprep.subr.mxu0 0.0
  %2276 = vmatpush2.msra.mxu0 0.0
  %2277 = vmatprep.subr.mxu0 0.0
  %2278 = vmatpush2.msra.mxu0 0.0
  %2279 = vmatprep.subr.mxu0 0.0
  %2280 = vmatpush2.msra.mxu0 0.0
  %2281 = vmatprep.mubr.f32.mxu0 0.0
  %2282 = vmatmul.mubr.f32.gmra.mxu0 %v2209
  %v2283 = vpop.f32.mrf.mxu0
  %v2284 = vadd.f32 %v2192, %v2283
  %v2285 = vpop.f32.mrf.mxu0
  %v2286 = vadd.f32 %v2194, %v2285
  %2287 = vmatprep.mubr.f32.mxu0 0.0
  %2288 = vmatmul.mubr.f32.gmra.mxu0 %v2212
  %v2289 = vpop.f32.mrf.mxu0
  %v2290 = vadd.f32 %v2198, %v2289
  %v2291 = vpop.f32.mrf.mxu0
  %v2292 = vadd.f32 %v2200, %v2291
  %2293 = vmatprep.mubr.f32.mxu0 0.0
  %2294 = vmatmul.mubr.f32.gmra.mxu0 %v2215
  %v2295 = vpop.f32.mrf.mxu0
  %v2296 = vadd.f32 %v2204, %v2295
  %v2297 = vpop.f32.mrf.mxu0
  %v2298 = vadd.f32 %v2206, %v2297
  %2299 = vdwg.mxu0
  %v2300 = vld [vmem:[%s8] sm:$0x3]
  %v2302 = vlaneseq
  %v2303 = vshrl.u32 %v2302, 7
  %v2304 = vsub.s32 0, %v2303
  %v2305 = vrot.slane %v2300, %v2304
  %v2306 = vlaneseq
  %v2307 = vshrl.u32 %v2306, 7
  %v2308 = vsub.s32 1, %v2307
  %v2309 = vrot.slane %v2300, %v2308
  %v2312 = vadd.f32 %v2284, %v2305
  %v2313 = vadd.f32 %v2286, %v2309
  %v2314 = vadd.f32 %v2290, %v2305
  %v2315 = vadd.f32 %v2292, %v2309
  %v2316 = vadd.f32 %v2296, %v2305
  %v2317 = vadd.f32 %v2298, %v2309
  %v2318 = vmax.f32 %v2312, 0.0
  %v2319 = vmax.f32 %v2313, 0.0
  %v2320 = vmax.f32 %v2314, 0.0
  %v2321 = vmax.f32 %v2315, 0.0
  %v2322 = vmax.f32 %v2316, 0.0
  %v2323 = vmax.f32 %v2317, 0.0
  %v2324 = vld [vmem:[%s9] sm:$0xff]
  %vm2325 = vcmask 146432
  %v2327 = vsel %vm2325, %v2324, 0
  %v2330 = vsel %vm1529, %v2322, 0
  %v2333 = vsel %vm1529, %v2323, 0
  %2335 = vmatprep.subr.mxu0 0.0
  %2336 = vmatpush1.msra.mxu0 0.0
  %2337 = vmatprep.subr.mxu0 0.0
  %2338 = vmatpush1.msra.mxu0 0.0
  %2339 = vmatprep.subr.mxu0 0.0
  %2340 = vmatpush1.msra.mxu0 0.0
  %2341 = vmatprep.subr.mxu0 0.0
  %2342 = vmatpush1.msra.mxu0 0.0
  %2343 = vmatprep.subr.mxu0 0.0
  %2344 = vmatpush1.msra.mxu0 0.0
  %2345 = vmatprep.subr.mxu0 0.0
  %2346 = vmatpush1.msra.mxu0 0.0
  %2347 = vmatprep.subr.mxu0 0.0
  %2348 = vmatpush1.msra.mxu0 0.0
  %2349 = vmatprep.subr.mxu0 0.0
  %2350 = vmatpush1.msra.mxu0 0.0
  %2351 = vmatprep.subr.mxu0 0.0
  %2352 = vmatpush1.msra.mxu0 0.0
  %2353 = vmatprep.subr.mxu0 0.0
  %2354 = vmatpush1.msra.mxu0 0.0
  %2355 = vmatprep.subr.mxu0 0.0
  %2356 = vmatpush1.msra.mxu0 0.0
  %2357 = vmatprep.subr.mxu0 0.0
  %2358 = vmatpush1.msra.mxu0 0.0
  %2359 = vmatprep.subr.mxu0 0.0
  %2360 = vmatpush1.msra.mxu0 0.0
  %2361 = vmatprep.subr.mxu0 %v2333
  %2362 = vmatpush1.msra.mxu0 %v2330
  %2363 = vmatprep.subr.mxu0 %v2321
  %2364 = vmatpush1.msra.mxu0 %v2320
  %2365 = vmatprep.subr.mxu0 %v2319
  %2366 = vmatpush1.msra.mxu0 %v2318
  %2367 = vmatprep.subr.mxu0 0.0
  %2368 = vmatpush2.msra.mxu0 0.0
  %2369 = vmatprep.subr.mxu0 0.0
  %2370 = vmatpush2.msra.mxu0 0.0
  %2371 = vmatprep.subr.mxu0 0.0
  %2372 = vmatpush2.msra.mxu0 0.0
  %2373 = vmatprep.subr.mxu0 0.0
  %2374 = vmatpush2.msra.mxu0 0.0
  %2375 = vmatprep.subr.mxu0 0.0
  %2376 = vmatpush2.msra.mxu0 0.0
  %2377 = vmatprep.subr.mxu0 0.0
  %2378 = vmatpush2.msra.mxu0 0.0
  %2379 = vmatprep.subr.mxu0 0.0
  %2380 = vmatpush2.msra.mxu0 0.0
  %2381 = vmatprep.subr.mxu0 0.0
  %2382 = vmatpush2.msra.mxu0 0.0
  %2383 = vmatprep.subr.mxu0 0.0
  %2384 = vmatpush2.msra.mxu0 0.0
  %2385 = vmatprep.subr.mxu0 0.0
  %2386 = vmatpush2.msra.mxu0 0.0
  %2387 = vmatprep.subr.mxu0 0.0
  %2388 = vmatpush2.msra.mxu0 0.0
  %2389 = vmatprep.subr.mxu0 0.0
  %2390 = vmatpush2.msra.mxu0 0.0
  %2391 = vmatprep.subr.mxu0 0.0
  %2392 = vmatpush2.msra.mxu0 0.0
  %2393 = vmatprep.subr.mxu0 0.0
  %2394 = vmatpush2.msra.mxu0 0.0
  %2395 = vmatprep.subr.mxu0 0.0
  %2396 = vmatpush2.msra.mxu0 0.0
  %2397 = vmatprep.subr.mxu0 0.0
  %2398 = vmatpush2.msra.mxu0 0.0
  %2399 = vmatprep.mubr.f32.mxu0 0.0
  %2400 = vmatmul.mubr.f32.gmra.mxu0 %v2327
  %v2401 = vpop.f32.mrf.mxu0
  %v2402 = vadd.f32 0.0, %v2401
  %v2403 = vpop.f32.mrf.mxu0
  %v2404 = vadd.f32 0.0, %v2403
  %2405 = vdwg.mxu0
  %s2406 = scalar_lea.vmem %s9, 8
  %v2407 = vld [vmem:[%s2406] sm:$0xff]
  %v2409 = vsel %vm2325, %v2407, 0
  %2411 = vmatprep.subr.mxu0 0.0
  %2412 = vmatpush1.msra.mxu0 0.0
  %2413 = vmatprep.subr.mxu0 0.0
  %2414 = vmatpush1.msra.mxu0 0.0
  %2415 = vmatprep.subr.mxu0 0.0
  %2416 = vmatpush1.msra.mxu0 0.0
  %2417 = vmatprep.subr.mxu0 0.0
  %2418 = vmatpush1.msra.mxu0 0.0
  %2419 = vmatprep.subr.mxu0 0.0
  %2420 = vmatpush1.msra.mxu0 0.0
  %2421 = vmatprep.subr.mxu0 0.0
  %2422 = vmatpush1.msra.mxu0 0.0
  %2423 = vmatprep.subr.mxu0 0.0
  %2424 = vmatpush1.msra.mxu0 0.0
  %2425 = vmatprep.subr.mxu0 0.0
  %2426 = vmatpush1.msra.mxu0 0.0
  %2427 = vmatprep.subr.mxu0 0.0
  %2428 = vmatpush1.msra.mxu0 0.0
  %2429 = vmatprep.subr.mxu0 0.0
  %2430 = vmatpush1.msra.mxu0 0.0
  %2431 = vmatprep.subr.mxu0 0.0
  %2432 = vmatpush1.msra.mxu0 0.0
  %2433 = vmatprep.subr.mxu0 0.0
  %2434 = vmatpush1.msra.mxu0 0.0
  %2435 = vmatprep.subr.mxu0 0.0
  %2436 = vmatpush1.msra.mxu0 0.0
  %2437 = vmatprep.subr.mxu0 %v2333
  %2438 = vmatpush1.msra.mxu0 %v2330
  %2439 = vmatprep.subr.mxu0 %v2321
  %2440 = vmatpush1.msra.mxu0 %v2320
  %2441 = vmatprep.subr.mxu0 %v2319
  %2442 = vmatpush1.msra.mxu0 %v2318
  %2443 = vmatprep.subr.mxu0 0.0
  %2444 = vmatpush2.msra.mxu0 0.0
  %2445 = vmatprep.subr.mxu0 0.0
  %2446 = vmatpush2.msra.mxu0 0.0
  %2447 = vmatprep.subr.mxu0 0.0
  %2448 = vmatpush2.msra.mxu0 0.0
  %2449 = vmatprep.subr.mxu0 0.0
  %2450 = vmatpush2.msra.mxu0 0.0
  %2451 = vmatprep.subr.mxu0 0.0
  %2452 = vmatpush2.msra.mxu0 0.0
  %2453 = vmatprep.subr.mxu0 0.0
  %2454 = vmatpush2.msra.mxu0 0.0
  %2455 = vmatprep.subr.mxu0 0.0
  %2456 = vmatpush2.msra.mxu0 0.0
  %2457 = vmatprep.subr.mxu0 0.0
  %2458 = vmatpush2.msra.mxu0 0.0
  %2459 = vmatprep.subr.mxu0 0.0
  %2460 = vmatpush2.msra.mxu0 0.0
  %2461 = vmatprep.subr.mxu0 0.0
  %2462 = vmatpush2.msra.mxu0 0.0
  %2463 = vmatprep.subr.mxu0 0.0
  %2464 = vmatpush2.msra.mxu0 0.0
  %2465 = vmatprep.subr.mxu0 0.0
  %2466 = vmatpush2.msra.mxu0 0.0
  %2467 = vmatprep.subr.mxu0 0.0
  %2468 = vmatpush2.msra.mxu0 0.0
  %2469 = vmatprep.subr.mxu0 0.0
  %2470 = vmatpush2.msra.mxu0 0.0
  %2471 = vmatprep.subr.mxu0 0.0
  %2472 = vmatpush2.msra.mxu0 0.0
  %2473 = vmatprep.subr.mxu0 0.0
  %2474 = vmatpush2.msra.mxu0 0.0
  %2475 = vmatprep.mubr.f32.mxu0 0.0
  %2476 = vmatmul.mubr.f32.gmra.mxu0 %v2409
  %v2477 = vpop.f32.mrf.mxu0
  %v2478 = vadd.f32 0.0, %v2477
  %v2479 = vpop.f32.mrf.mxu0
  %v2480 = vadd.f32 0.0, %v2479
  %2481 = vdwg.mxu0
  %v2482 = vmax.f32 %v2402, %v2478
  %v2483 = vmax.f32 %v2404, %v2480
  %v2484 = vld [vmem:[%s10] sm:$0xff]
  %v2485 = vld [vmem:[%s10 + $0x8] sm:$0xff]
  %v2486 = vld [vmem:[%s10 + $0x10] sm:$0xff]
  %v2487 = vld [vmem:[%s10 + $0x18] sm:$0xff]
  %v2488 = vld [vmem:[%s10 + $0x20] sm:$0xff]
  %v2489 = vld [vmem:[%s10 + $0x28] sm:$0xff]
  %v2490 = vld [vmem:[%s10 + $0x30] sm:$0xff]
  %v2491 = vld [vmem:[%s10 + $0x38] sm:$0xff]
  %v2492 = vld [vmem:[%s10 + $0x40] sm:$0xff]
  %v2493 = vld [vmem:[%s10 + $0x48] sm:$0xff]
  %v2494 = vld [vmem:[%s10 + $0x50] sm:$0xff]
  %v2495 = vld [vmem:[%s10 + $0x58] sm:$0xff]
  %v2496 = vld [vmem:[%s10 + $0x60] sm:$0xff]
  %v2497 = vld [vmem:[%s10 + $0x68] sm:$0xff]
  %v2498 = vld [vmem:[%s10 + $0x70] sm:$0xff]
  %v2499 = vld [vmem:[%s10 + $0x78] sm:$0xff]
  %v2500 = vld [vmem:[%s10 + $0x80] sm:$0xff]
  %v2501 = vld [vmem:[%s10 + $0x88] sm:$0xff]
  %v2503 = vsel %vm323, %v2483, 0
  %2505 = vmatprep.subr.mxu0 0.0
  %2506 = vmatpush1.msra.mxu0 %v2499
  %2507 = vmatprep.subr.mxu0 0.0
  %2508 = vmatpush1.msra.mxu0 %v2498
  %2509 = vmatprep.subr.mxu0 0.0
  %2510 = vmatpush1.msra.mxu0 %v2497
  %2511 = vmatprep.subr.mxu0 0.0
  %2512 = vmatpush1.msra.mxu0 %v2496
  %2513 = vmatprep.subr.mxu0 0.0
  %2514 = vmatpush1.msra.mxu0 %v2495
  %2515 = vmatprep.subr.mxu0 0.0
  %2516 = vmatpush1.msra.mxu0 %v2494
  %2517 = vmatprep.subr.mxu0 0.0
  %2518 = vmatpush1.msra.mxu0 %v2493
  %2519 = vmatprep.subr.mxu0 0.0
  %2520 = vmatpush1.msra.mxu0 %v2492
  %2521 = vmatprep.subr.mxu0 0.0
  %2522 = vmatpush1.msra.mxu0 %v2491
  %2523 = vmatprep.subr.mxu0 0.0
  %2524 = vmatpush1.msra.mxu0 %v2490
  %2525 = vmatprep.subr.mxu0 0.0
  %2526 = vmatpush1.msra.mxu0 %v2489
  %2527 = vmatprep.subr.mxu0 0.0
  %2528 = vmatpush1.msra.mxu0 %v2488
  %2529 = vmatprep.subr.mxu0 0.0
  %2530 = vmatpush1.msra.mxu0 %v2487
  %2531 = vmatprep.subr.mxu0 0.0
  %2532 = vmatpush1.msra.mxu0 %v2486
  %2533 = vmatprep.subr.mxu0 0.0
  %2534 = vmatpush1.msra.mxu0 %v2485
  %2535 = vmatprep.subr.mxu0 0.0
  %2536 = vmatpush1.msra.mxu0 %v2484
  %2537 = vmatprep.subr.mxu0 0.0
  %2538 = vmatpush2.msra.mxu0 0.0
  %2539 = vmatprep.subr.mxu0 0.0
  %2540 = vmatpush2.msra.mxu0 0.0
  %2541 = vmatprep.subr.mxu0 0.0
  %2542 = vmatpush2.msra.mxu0 0.0
  %2543 = vmatprep.subr.mxu0 0.0
  %2544 = vmatpush2.msra.mxu0 0.0
  %2545 = vmatprep.subr.mxu0 0.0
  %2546 = vmatpush2.msra.mxu0 0.0
  %2547 = vmatprep.subr.mxu0 0.0
  %2548 = vmatpush2.msra.mxu0 0.0
  %2549 = vmatprep.subr.mxu0 0.0
  %2550 = vmatpush2.msra.mxu0 0.0
  %2551 = vmatprep.subr.mxu0 0.0
  %2552 = vmatpush2.msra.mxu0 0.0
  %2553 = vmatprep.subr.mxu0 0.0
  %2554 = vmatpush2.msra.mxu0 0.0
  %2555 = vmatprep.subr.mxu0 0.0
  %2556 = vmatpush2.msra.mxu0 0.0
  %2557 = vmatprep.subr.mxu0 0.0
  %2558 = vmatpush2.msra.mxu0 0.0
  %2559 = vmatprep.subr.mxu0 0.0
  %2560 = vmatpush2.msra.mxu0 0.0
  %2561 = vmatprep.subr.mxu0 0.0
  %2562 = vmatpush2.msra.mxu0 0.0
  %2563 = vmatprep.subr.mxu0 0.0
  %2564 = vmatpush2.msra.mxu0 0.0
  %2565 = vmatprep.subr.mxu0 0.0
  %2566 = vmatpush2.msra.mxu0 %v2501
  %2567 = vmatprep.subr.mxu0 0.0
  %2568 = vmatpush2.msra.mxu0 %v2500
  %2569 = vmatprep.mubr.f32.mxu0 %v2503
  %2570 = vmatmul.mubr.f32.gmra.mxu0 %v2482
  %v2571 = vpop.f32.mrf.mxu0
  %v2572 = vadd.f32 0.0, %v2571
  %v2573 = vpop.f32.mrf.mxu0
  %2574 = vdwg.mxu0
  %s2575 = scalar_lea.vmem %s10, 144
  %v2576 = vld [vmem:[%s2575] sm:$0xff]
  %v2577 = vld [vmem:[%s2575 + $0x8] sm:$0xff]
  %v2578 = vld [vmem:[%s2575 + $0x10] sm:$0xff]
  %v2579 = vld [vmem:[%s2575 + $0x18] sm:$0xff]
  %v2580 = vld [vmem:[%s2575 + $0x20] sm:$0xff]
  %v2581 = vld [vmem:[%s2575 + $0x28] sm:$0xff]
  %v2582 = vld [vmem:[%s2575 + $0x30] sm:$0xff]
  %v2583 = vld [vmem:[%s2575 + $0x38] sm:$0xff]
  %v2584 = vld [vmem:[%s2575 + $0x40] sm:$0xff]
  %v2585 = vld [vmem:[%s2575 + $0x48] sm:$0xff]
  %v2586 = vld [vmem:[%s2575 + $0x50] sm:$0xff]
  %v2587 = vld [vmem:[%s2575 + $0x58] sm:$0xff]
  %v2588 = vld [vmem:[%s2575 + $0x60] sm:$0xff]
  %v2589 = vld [vmem:[%s2575 + $0x68] sm:$0xff]
  %v2590 = vld [vmem:[%s2575 + $0x70] sm:$0xff]
  %v2591 = vld [vmem:[%s2575 + $0x78] sm:$0xff]
  %v2592 = vld [vmem:[%s2575 + $0x80] sm:$0xff]
  %v2593 = vld [vmem:[%s2575 + $0x88] sm:$0xff]
  %2594 = vmatprep.subr.mxu0 0.0
  %2595 = vmatpush1.msra.mxu0 %v2591
  %2596 = vmatprep.subr.mxu0 0.0
  %2597 = vmatpush1.msra.mxu0 %v2590
  %2598 = vmatprep.subr.mxu0 0.0
  %2599 = vmatpush1.msra.mxu0 %v2589
  %2600 = vmatprep.subr.mxu0 0.0
  %2601 = vmatpush1.msra.mxu0 %v2588
  %2602 = vmatprep.subr.mxu0 0.0
  %2603 = vmatpush1.msra.mxu0 %v2587
  %2604 = vmatprep.subr.mxu0 0.0
  %2605 = vmatpush1.msra.mxu0 %v2586
  %2606 = vmatprep.subr.mxu0 0.0
  %2607 = vmatpush1.msra.mxu0 %v2585
  %2608 = vmatprep.subr.mxu0 0.0
  %2609 = vmatpush1.msra.mxu0 %v2584
  %2610 = vmatprep.subr.mxu0 0.0
  %2611 = vmatpush1.msra.mxu0 %v2583
  %2612 = vmatprep.subr.mxu0 0.0
  %2613 = vmatpush1.msra.mxu0 %v2582
  %2614 = vmatprep.subr.mxu0 0.0
  %2615 = vmatpush1.msra.mxu0 %v2581
  %2616 = vmatprep.subr.mxu0 0.0
  %2617 = vmatpush1.msra.mxu0 %v2580
  %2618 = vmatprep.subr.mxu0 0.0
  %2619 = vmatpush1.msra.mxu0 %v2579
  %2620 = vmatprep.subr.mxu0 0.0
  %2621 = vmatpush1.msra.mxu0 %v2578
  %2622 = vmatprep.subr.mxu0 0.0
  %2623 = vmatpush1.msra.mxu0 %v2577
  %2624 = vmatprep.subr.mxu0 0.0
  %2625 = vmatpush1.msra.mxu0 %v2576
  %2626 = vmatprep.subr.mxu0 0.0
  %2627 = vmatpush2.msra.mxu0 0.0
  %2628 = vmatprep.subr.mxu0 0.0
  %2629 = vmatpush2.msra.mxu0 0.0
  %2630 = vmatprep.subr.mxu0 0.0
  %2631 = vmatpush2.msra.mxu0 0.0
  %2632 = vmatprep.subr.mxu0 0.0
  %2633 = vmatpush2.msra.mxu0 0.0
  %2634 = vmatprep.subr.mxu0 0.0
  %2635 = vmatpush2.msra.mxu0 0.0
  %2636 = vmatprep.subr.mxu0 0.0
  %2637 = vmatpush2.msra.mxu0 0.0
  %2638 = vmatprep.subr.mxu0 0.0
  %2639 = vmatpush2.msra.mxu0 0.0
  %2640 = vmatprep.subr.mxu0 0.0
  %2641 = vmatpush2.msra.mxu0 0.0
  %2642 = vmatprep.subr.mxu0 0.0
  %2643 = vmatpush2.msra.mxu0 0.0
  %2644 = vmatprep.subr.mxu0 0.0
  %2645 = vmatpush2.msra.mxu0 0.0
  %2646 = vmatprep.subr.mxu0 0.0
  %2647 = vmatpush2.msra.mxu0 0.0
  %2648 = vmatprep.subr.mxu0 0.0
  %2649 = vmatpush2.msra.mxu0 0.0
  %2650 = vmatprep.subr.mxu0 0.0
  %2651 = vmatpush2.msra.mxu0 0.0
  %2652 = vmatprep.subr.mxu0 0.0
  %2653 = vmatpush2.msra.mxu0 0.0
  %2654 = vmatprep.subr.mxu0 0.0
  %2655 = vmatpush2.msra.mxu0 %v2593
  %2656 = vmatprep.subr.mxu0 0.0
  %2657 = vmatpush2.msra.mxu0 %v2592
  %2658 = vmatprep.mubr.f32.mxu0 %v2503
  %2659 = vmatmul.mubr.f32.gmra.mxu0 %v2482
  %v2660 = vpop.f32.mrf.mxu0
  %v2661 = vadd.f32 0.0, %v2660
  %v2662 = vpop.f32.mrf.mxu0
  %2663 = vdwg.mxu0
  %v2664 = vmax.f32 %v2572, %v2661
  %v2665 = vld [vmem:[%s11] sm:$0xff]
  %v2666 = vld [vmem:[%s11 + $0x8] sm:$0x3]
  %v2668 = vsel %vm1720, %v2665, 0
  %v2671 = vsel %vm1720, %v2666, 0
  %2673 = vmatprep.subr.mxu0 0.0
  %2674 = vmatpush1.msra.mxu0 0.0
  %2675 = vmatprep.subr.mxu0 0.0
  %2676 = vmatpush1.msra.mxu0 0.0
  %2677 = vmatprep.subr.mxu0 0.0
  %2678 = vmatpush1.msra.mxu0 0.0
  %2679 = vmatprep.subr.mxu0 0.0
  %2680 = vmatpush1.msra.mxu0 0.0
  %2681 = vmatprep.subr.mxu0 0.0
  %2682 = vmatpush1.msra.mxu0 0.0
  %2683 = vmatprep.subr.mxu0 0.0
  %2684 = vmatpush1.msra.mxu0 0.0
  %2685 = vmatprep.subr.mxu0 0.0
  %2686 = vmatpush1.msra.mxu0 0.0
  %2687 = vmatprep.subr.mxu0 0.0
  %2688 = vmatpush1.msra.mxu0 0.0
  %2689 = vmatprep.subr.mxu0 0.0
  %2690 = vmatpush1.msra.mxu0 0.0
  %2691 = vmatprep.subr.mxu0 0.0
  %2692 = vmatpush1.msra.mxu0 0.0
  %2693 = vmatprep.subr.mxu0 0.0
  %2694 = vmatpush1.msra.mxu0 0.0
  %2695 = vmatprep.subr.mxu0 0.0
  %2696 = vmatpush1.msra.mxu0 0.0
  %2697 = vmatprep.subr.mxu0 0.0
  %2698 = vmatpush1.msra.mxu0 0.0
  %2699 = vmatprep.subr.mxu0 0.0
  %2700 = vmatpush1.msra.mxu0 0.0
  %2701 = vmatprep.subr.mxu0 0.0
  %2702 = vmatpush1.msra.mxu0 0.0
  %2703 = vmatprep.subr.mxu0 0.0
  %2704 = vmatpush1.msra.mxu0 %v2664
  %2705 = vmatprep.subr.mxu0 0.0
  %2706 = vmatpush2.msra.mxu0 0.0
  %2707 = vmatprep.subr.mxu0 0.0
  %2708 = vmatpush2.msra.mxu0 0.0
  %2709 = vmatprep.subr.mxu0 0.0
  %2710 = vmatpush2.msra.mxu0 0.0
  %2711 = vmatprep.subr.mxu0 0.0
  %2712 = vmatpush2.msra.mxu0 0.0
  %2713 = vmatprep.subr.mxu0 0.0
  %2714 = vmatpush2.msra.mxu0 0.0
  %2715 = vmatprep.subr.mxu0 0.0
  %2716 = vmatpush2.msra.mxu0 0.0
  %2717 = vmatprep.subr.mxu0 0.0
  %2718 = vmatpush2.msra.mxu0 0.0
  %2719 = vmatprep.subr.mxu0 0.0
  %2720 = vmatpush2.msra.mxu0 0.0
  %2721 = vmatprep.subr.mxu0 0.0
  %2722 = vmatpush2.msra.mxu0 0.0
  %2723 = vmatprep.subr.mxu0 0.0
  %2724 = vmatpush2.msra.mxu0 0.0
  %2725 = vmatprep.subr.mxu0 0.0
  %2726 = vmatpush2.msra.mxu0 0.0
  %2727 = vmatprep.subr.mxu0 0.0
  %2728 = vmatpush2.msra.mxu0 0.0
  %2729 = vmatprep.subr.mxu0 0.0
  %2730 = vmatpush2.msra.mxu0 0.0
  %2731 = vmatprep.subr.mxu0 0.0
  %2732 = vmatpush2.msra.mxu0 0.0
  %2733 = vmatprep.subr.mxu0 0.0
  %2734 = vmatpush2.msra.mxu0 0.0
  %2735 = vmatprep.subr.mxu0 0.0
  %2736 = vmatpush2.msra.mxu0 0.0
  %2737 = vmatprep.mubr.f32.mxu0 0.0
  %2738 = vmatmul.mubr.f32.gmra.mxu0 %v2668
  %v2739 = vpop.f32.mrf.mxu0
  %v2740 = vadd.f32 0.0, %v2739
  %v2741 = vpop.f32.mrf.mxu0
  %2742 = vmatprep.mubr.f32.mxu0 0.0
  %2743 = vmatmul.mubr.f32.gmra.mxu0 %v2671
  %v2744 = vpop.f32.mrf.mxu0
  %v2745 = vadd.f32 0.0, %v2744
  %v2746 = vpop.f32.mrf.mxu0
  %2747 = vdwg.mxu0
  %v2748 = vld [vmem:[%s12] sm:$0xff]
  %v2749 = vld [vmem:[%s12 + $0x8] sm:$0xff]
  %v2750 = vld [vmem:[%s12 + $0x10] sm:$0xff]
  %v2751 = vld [vmem:[%s12 + $0x18] sm:$0xff]
  %v2752 = vld [vmem:[%s12 + $0x20] sm:$0xff]
  %v2753 = vld [vmem:[%s12 + $0x28] sm:$0xff]
  %v2754 = vld [vmem:[%s12 + $0x30] sm:$0xff]
  %v2755 = vld [vmem:[%s12 + $0x38] sm:$0xff]
  %v2756 = vld [vmem:[%s12 + $0x40] sm:$0xff]
  %v2757 = vld [vmem:[%s12 + $0x48] sm:$0xff]
  %v2758 = vld [vmem:[%s12 + $0x50] sm:$0xff]
  %v2759 = vld [vmem:[%s12 + $0x58] sm:$0xff]
  %v2760 = vld [vmem:[%s12 + $0x60] sm:$0xff]
  %v2761 = vld [vmem:[%s12 + $0x68] sm:$0xff]
  %v2762 = vld [vmem:[%s12 + $0x70] sm:$0xff]
  %v2763 = vld [vmem:[%s12 + $0x78] sm:$0xff]
  %s2764 = scalar_lea.vmem %s11, 16
  %v2765 = vld [vmem:[%s2764] sm:$0xff]
  %v2766 = vld [vmem:[%s2764 + $0x8] sm:$0x3]
  %v2768 = vsel %vm1720, %v2765, 0
  %v2771 = vsel %vm1720, %v2766, 0
  %2773 = vmatprep.subr.mxu0 0.0
  %2774 = vmatpush1.msra.mxu0 0.0
  %2775 = vmatprep.subr.mxu0 0.0
  %2776 = vmatpush1.msra.mxu0 0.0
  %2777 = vmatprep.subr.mxu0 0.0
  %2778 = vmatpush1.msra.mxu0 0.0
  %2779 = vmatprep.subr.mxu0 0.0
  %2780 = vmatpush1.msra.mxu0 0.0
  %2781 = vmatprep.subr.mxu0 0.0
  %2782 = vmatpush1.msra.mxu0 0.0
  %2783 = vmatprep.subr.mxu0 0.0
  %2784 = vmatpush1.msra.mxu0 0.0
  %2785 = vmatprep.subr.mxu0 0.0
  %2786 = vmatpush1.msra.mxu0 0.0
  %2787 = vmatprep.subr.mxu0 0.0
  %2788 = vmatpush1.msra.mxu0 0.0
  %2789 = vmatprep.subr.mxu0 0.0
  %2790 = vmatpush1.msra.mxu0 0.0
  %2791 = vmatprep.subr.mxu0 0.0
  %2792 = vmatpush1.msra.mxu0 0.0
  %2793 = vmatprep.subr.mxu0 0.0
  %2794 = vmatpush1.msra.mxu0 0.0
  %2795 = vmatprep.subr.mxu0 0.0
  %2796 = vmatpush1.msra.mxu0 0.0
  %2797 = vmatprep.subr.mxu0 0.0
  %2798 = vmatpush1.msra.mxu0 0.0
  %2799 = vmatprep.subr.mxu0 0.0
  %2800 = vmatpush1.msra.mxu0 0.0
  %2801 = vmatprep.subr.mxu0 0.0
  %2802 = vmatpush1.msra.mxu0 0.0
  %2803 = vmatprep.subr.mxu0 0.0
  %2804 = vmatpush1.msra.mxu0 %v2664
  %2805 = vmatprep.subr.mxu0 0.0
  %2806 = vmatpush2.msra.mxu0 0.0
  %2807 = vmatprep.subr.mxu0 0.0
  %2808 = vmatpush2.msra.mxu0 0.0
  %2809 = vmatprep.subr.mxu0 0.0
  %2810 = vmatpush2.msra.mxu0 0.0
  %2811 = vmatprep.subr.mxu0 0.0
  %2812 = vmatpush2.msra.mxu0 0.0
  %2813 = vmatprep.subr.mxu0 0.0
  %2814 = vmatpush2.msra.mxu0 0.0
  %2815 = vmatprep.subr.mxu0 0.0
  %2816 = vmatpush2.msra.mxu0 0.0
  %2817 = vmatprep.subr.mxu0 0.0
  %2818 = vmatpush2.msra.mxu0 0.0
  %2819 = vmatprep.subr.mxu0 0.0
  %2820 = vmatpush2.msra.mxu0 0.0
  %2821 = vmatprep.subr.mxu0 0.0
  %2822 = vmatpush2.msra.mxu0 0.0
  %2823 = vmatprep.subr.mxu0 0.0
  %2824 = vmatpush2.msra.mxu0 0.0
  %2825 = vmatprep.subr.mxu0 0.0
  %2826 = vmatpush2.msra.mxu0 0.0
  %2827 = vmatprep.subr.mxu0 0.0
  %2828 = vmatpush2.msra.mxu0 0.0
  %2829 = vmatprep.subr.mxu0 0.0
  %2830 = vmatpush2.msra.mxu0 0.0
  %2831 = vmatprep.subr.mxu0 0.0
  %2832 = vmatpush2.msra.mxu0 0.0
  %2833 = vmatprep.subr.mxu0 0.0
  %2834 = vmatpush2.msra.mxu0 0.0
  %2835 = vmatprep.subr.mxu0 0.0
  %2836 = vmatpush2.msra.mxu0 0.0
  %2837 = vmatprep.mubr.f32.mxu0 0.0
  %2838 = vmatmul.mubr.f32.gmra.mxu0 %v2768
  %v2839 = vpop.f32.mrf.mxu0
  %v2840 = vadd.f32 0.0, %v2839
  %v2841 = vpop.f32.mrf.mxu0
  %2842 = vmatprep.mubr.f32.mxu0 0.0
  %2843 = vmatmul.mubr.f32.gmra.mxu0 %v2771
  %v2844 = vpop.f32.mrf.mxu0
  %v2845 = vadd.f32 0.0, %v2844
  %v2846 = vpop.f32.mrf.mxu0
  %2847 = vdwg.mxu0
  %s2848 = scalar_lea.vmem %s12, 128
  %v2849 = vld [vmem:[%s2848] sm:$0xff]
  %v2850 = vld [vmem:[%s2848 + $0x8] sm:$0xff]
  %v2851 = vld [vmem:[%s2848 + $0x10] sm:$0xff]
  %v2852 = vld [vmem:[%s2848 + $0x18] sm:$0xff]
  %v2853 = vld [vmem:[%s2848 + $0x20] sm:$0xff]
  %v2854 = vld [vmem:[%s2848 + $0x28] sm:$0xff]
  %v2855 = vld [vmem:[%s2848 + $0x30] sm:$0xff]
  %v2856 = vld [vmem:[%s2848 + $0x38] sm:$0xff]
  %v2857 = vld [vmem:[%s2848 + $0x40] sm:$0xff]
  %v2858 = vld [vmem:[%s2848 + $0x48] sm:$0xff]
  %v2859 = vld [vmem:[%s2848 + $0x50] sm:$0xff]
  %v2860 = vld [vmem:[%s2848 + $0x58] sm:$0xff]
  %v2861 = vld [vmem:[%s2848 + $0x60] sm:$0xff]
  %v2862 = vld [vmem:[%s2848 + $0x68] sm:$0xff]
  %v2863 = vld [vmem:[%s2848 + $0x70] sm:$0xff]
  %v2864 = vld [vmem:[%s2848 + $0x78] sm:$0xff]
  %v2866 = vsel %vm2115, %v2840, 0
  %v2869 = vsel %vm2115, %v2845, 0
  %2871 = vmatprep.subr.mxu0 0.0
  %2872 = vmatpush1.msra.mxu0 0.0
  %2873 = vmatprep.subr.mxu0 0.0
  %2874 = vmatpush1.msra.mxu0 0.0
  %2875 = vmatprep.subr.mxu0 0.0
  %2876 = vmatpush1.msra.mxu0 0.0
  %2877 = vmatprep.subr.mxu0 0.0
  %2878 = vmatpush1.msra.mxu0 0.0
  %2879 = vmatprep.subr.mxu0 0.0
  %2880 = vmatpush1.msra.mxu0 0.0
  %2881 = vmatprep.subr.mxu0 0.0
  %2882 = vmatpush1.msra.mxu0 0.0
  %2883 = vmatprep.subr.mxu0 0.0
  %2884 = vmatpush1.msra.mxu0 0.0
  %2885 = vmatprep.subr.mxu0 0.0
  %2886 = vmatpush1.msra.mxu0 0.0
  %2887 = vmatprep.subr.mxu0 %v2864
  %2888 = vmatpush1.msra.mxu0 %v2863
  %2889 = vmatprep.subr.mxu0 %v2862
  %2890 = vmatpush1.msra.mxu0 %v2861
  %2891 = vmatprep.subr.mxu0 %v2860
  %2892 = vmatpush1.msra.mxu0 %v2859
  %2893 = vmatprep.subr.mxu0 %v2858
  %2894 = vmatpush1.msra.mxu0 %v2857
  %2895 = vmatprep.subr.mxu0 %v2856
  %2896 = vmatpush1.msra.mxu0 %v2855
  %2897 = vmatprep.subr.mxu0 %v2854
  %2898 = vmatpush1.msra.mxu0 %v2853
  %2899 = vmatprep.subr.mxu0 %v2852
  %2900 = vmatpush1.msra.mxu0 %v2851
  %2901 = vmatprep.subr.mxu0 %v2850
  %2902 = vmatpush1.msra.mxu0 %v2849
  %2903 = vmatprep.subr.mxu0 0.0
  %2904 = vmatpush2.msra.mxu0 0.0
  %2905 = vmatprep.subr.mxu0 0.0
  %2906 = vmatpush2.msra.mxu0 0.0
  %2907 = vmatprep.subr.mxu0 0.0
  %2908 = vmatpush2.msra.mxu0 0.0
  %2909 = vmatprep.subr.mxu0 0.0
  %2910 = vmatpush2.msra.mxu0 0.0
  %2911 = vmatprep.subr.mxu0 0.0
  %2912 = vmatpush2.msra.mxu0 0.0
  %2913 = vmatprep.subr.mxu0 0.0
  %2914 = vmatpush2.msra.mxu0 0.0
  %2915 = vmatprep.subr.mxu0 0.0
  %2916 = vmatpush2.msra.mxu0 0.0
  %2917 = vmatprep.subr.mxu0 0.0
  %2918 = vmatpush2.msra.mxu0 0.0
  %2919 = vmatprep.subr.mxu0 0.0
  %2920 = vmatpush2.msra.mxu0 0.0
  %2921 = vmatprep.subr.mxu0 0.0
  %2922 = vmatpush2.msra.mxu0 0.0
  %2923 = vmatprep.subr.mxu0 0.0
  %2924 = vmatpush2.msra.mxu0 0.0
  %2925 = vmatprep.subr.mxu0 0.0
  %2926 = vmatpush2.msra.mxu0 0.0
  %2927 = vmatprep.subr.mxu0 0.0
  %2928 = vmatpush2.msra.mxu0 0.0
  %2929 = vmatprep.subr.mxu0 0.0
  %2930 = vmatpush2.msra.mxu0 0.0
  %2931 = vmatprep.subr.mxu0 0.0
  %2932 = vmatpush2.msra.mxu0 0.0
  %2933 = vmatprep.subr.mxu0 0.0
  %2934 = vmatpush2.msra.mxu0 0.0
  %2935 = vmatprep.mubr.f32.mxu0 0.0
  %2936 = vmatmul.mubr.f32.gmra.mxu0 %v2866
  %v2937 = vpop.f32.mrf.mxu0
  %v2938 = vadd.f32 0.0, %v2937
  %v2939 = vpop.f32.mrf.mxu0
  %v2940 = vadd.f32 0.0, %v2939
  %2941 = vmatprep.mubr.f32.mxu0 0.0
  %2942 = vmatmul.mubr.f32.gmra.mxu0 %v2869
  %v2943 = vpop.f32.mrf.mxu0
  %v2944 = vadd.f32 0.0, %v2943
  %v2945 = vpop.f32.mrf.mxu0
  %v2946 = vadd.f32 0.0, %v2945
  %2947 = vdwg.mxu0
  %v2949 = vsel %vm2115, %v2740, 0
  %v2952 = vsel %vm2115, %v2745, 0
  %2954 = vmatprep.subr.mxu0 0.0
  %2955 = vmatpush1.msra.mxu0 0.0
  %2956 = vmatprep.subr.mxu0 0.0
  %2957 = vmatpush1.msra.mxu0 0.0
  %2958 = vmatprep.subr.mxu0 0.0
  %2959 = vmatpush1.msra.mxu0 0.0
  %2960 = vmatprep.subr.mxu0 0.0
  %2961 = vmatpush1.msra.mxu0 0.0
  %2962 = vmatprep.subr.mxu0 0.0
  %2963 = vmatpush1.msra.mxu0 0.0
  %2964 = vmatprep.subr.mxu0 0.0
  %2965 = vmatpush1.msra.mxu0 0.0
  %2966 = vmatprep.subr.mxu0 0.0
  %2967 = vmatpush1.msra.mxu0 0.0
  %2968 = vmatprep.subr.mxu0 0.0
  %2969 = vmatpush1.msra.mxu0 0.0
  %2970 = vmatprep.subr.mxu0 %v2763
  %2971 = vmatpush1.msra.mxu0 %v2762
  %2972 = vmatprep.subr.mxu0 %v2761
  %2973 = vmatpush1.msra.mxu0 %v2760
  %2974 = vmatprep.subr.mxu0 %v2759
  %2975 = vmatpush1.msra.mxu0 %v2758
  %2976 = vmatprep.subr.mxu0 %v2757
  %2977 = vmatpush1.msra.mxu0 %v2756
  %2978 = vmatprep.subr.mxu0 %v2755
  %2979 = vmatpush1.msra.mxu0 %v2754
  %2980 = vmatprep.subr.mxu0 %v2753
  %2981 = vmatpush1.msra.mxu0 %v2752
  %2982 = vmatprep.subr.mxu0 %v2751
  %2983 = vmatpush1.msra.mxu0 %v2750
  %2984 = vmatprep.subr.mxu0 %v2749
  %2985 = vmatpush1.msra.mxu0 %v2748
  %2986 = vmatprep.subr.mxu0 0.0
  %2987 = vmatpush2.msra.mxu0 0.0
  %2988 = vmatprep.subr.mxu0 0.0
  %2989 = vmatpush2.msra.mxu0 0.0
  %2990 = vmatprep.subr.mxu0 0.0
  %2991 = vmatpush2.msra.mxu0 0.0
  %2992 = vmatprep.subr.mxu0 0.0
  %2993 = vmatpush2.msra.mxu0 0.0
  %2994 = vmatprep.subr.mxu0 0.0
  %2995 = vmatpush2.msra.mxu0 0.0
  %2996 = vmatprep.subr.mxu0 0.0
  %2997 = vmatpush2.msra.mxu0 0.0
  %2998 = vmatprep.subr.mxu0 0.0
  %2999 = vmatpush2.msra.mxu0 0.0
  %3000 = vmatprep.subr.mxu0 0.0
  %3001 = vmatpush2.msra.mxu0 0.0
  %3002 = vmatprep.subr.mxu0 0.0
  %3003 = vmatpush2.msra.mxu0 0.0
  %3004 = vmatprep.subr.mxu0 0.0
  %3005 = vmatpush2.msra.mxu0 0.0
  %3006 = vmatprep.subr.mxu0 0.0
  %3007 = vmatpush2.msra.mxu0 0.0
  %3008 = vmatprep.subr.mxu0 0.0
  %3009 = vmatpush2.msra.mxu0 0.0
  %3010 = vmatprep.subr.mxu0 0.0
  %3011 = vmatpush2.msra.mxu0 0.0
  %3012 = vmatprep.subr.mxu0 0.0
  %3013 = vmatpush2.msra.mxu0 0.0
  %3014 = vmatprep.subr.mxu0 0.0
  %3015 = vmatpush2.msra.mxu0 0.0
  %3016 = vmatprep.subr.mxu0 0.0
  %3017 = vmatpush2.msra.mxu0 0.0
  %3018 = vmatprep.mubr.f32.mxu0 0.0
  %3019 = vmatmul.mubr.f32.gmra.mxu0 %v2949
  %v3020 = vpop.f32.mrf.mxu0
  %v3021 = vadd.f32 %v2938, %v3020
  %v3022 = vpop.f32.mrf.mxu0
  %v3023 = vadd.f32 %v2940, %v3022
  %3024 = vmatprep.mubr.f32.mxu0 0.0
  %3025 = vmatmul.mubr.f32.gmra.mxu0 %v2952
  %v3026 = vpop.f32.mrf.mxu0
  %v3027 = vadd.f32 %v2944, %v3026
  %v3028 = vpop.f32.mrf.mxu0
  %v3029 = vadd.f32 %v2946, %v3028
  %3030 = vdwg.mxu0
  %v3031 = vld [vmem:[%s13] sm:$0x3]
  %v3033 = vlaneseq
  %v3034 = vshrl.u32 %v3033, 7
  %v3035 = vsub.s32 0, %v3034
  %v3036 = vrot.slane %v3031, %v3035
  %v3037 = vlaneseq
  %v3038 = vshrl.u32 %v3037, 7
  %v3039 = vsub.s32 1, %v3038
  %v3040 = vrot.slane %v3031, %v3039
  %v3043 = vadd.f32 %v3021, %v3036
  %v3044 = vadd.f32 %v3023, %v3040
  %v3045 = vadd.f32 %v3027, %v3036
  %v3046 = vadd.f32 %v3029, %v3040
  %v3047 = vmax.f32 %v3043, 0.0
  %v3048 = vmax.f32 %v3044, 0.0
  %v3049 = vmax.f32 %v3045, 0.0
  %v3050 = vmax.f32 %v3046, 0.0
  %v3051 = vld [vmem:[%s14] sm:$0xf]
  %vm3052 = vcmask 80896
  %v3054 = vsel %vm3052, %v3051, 0
  %v3057 = vsel %vm1529, %v3049, 0
  %v3060 = vsel %vm1529, %v3050, 0
  %3062 = vmatprep.subr.mxu0 0.0
  %3063 = vmatpush1.msra.mxu0 0.0
  %3064 = vmatprep.subr.mxu0 0.0
  %3065 = vmatpush1.msra.mxu0 0.0
  %3066 = vmatprep.subr.mxu0 0.0
  %3067 = vmatpush1.msra.mxu0 0.0
  %3068 = vmatprep.subr.mxu0 0.0
  %3069 = vmatpush1.msra.mxu0 0.0
  %3070 = vmatprep.subr.mxu0 0.0
  %3071 = vmatpush1.msra.mxu0 0.0
  %3072 = vmatprep.subr.mxu0 0.0
  %3073 = vmatpush1.msra.mxu0 0.0
  %3074 = vmatprep.subr.mxu0 0.0
  %3075 = vmatpush1.msra.mxu0 0.0
  %3076 = vmatprep.subr.mxu0 0.0
  %3077 = vmatpush1.msra.mxu0 0.0
  %3078 = vmatprep.subr.mxu0 0.0
  %3079 = vmatpush1.msra.mxu0 0.0
  %3080 = vmatprep.subr.mxu0 0.0
  %3081 = vmatpush1.msra.mxu0 0.0
  %3082 = vmatprep.subr.mxu0 0.0
  %3083 = vmatpush1.msra.mxu0 0.0
  %3084 = vmatprep.subr.mxu0 0.0
  %3085 = vmatpush1.msra.mxu0 0.0
  %3086 = vmatprep.subr.mxu0 0.0
  %3087 = vmatpush1.msra.mxu0 0.0
  %3088 = vmatprep.subr.mxu0 0.0
  %3089 = vmatpush1.msra.mxu0 0.0
  %3090 = vmatprep.subr.mxu0 %v3060
  %3091 = vmatpush1.msra.mxu0 %v3057
  %3092 = vmatprep.subr.mxu0 %v3048
  %3093 = vmatpush1.msra.mxu0 %v3047
  %3094 = vmatprep.subr.mxu0 0.0
  %3095 = vmatpush2.msra.mxu0 0.0
  %3096 = vmatprep.subr.mxu0 0.0
  %3097 = vmatpush2.msra.mxu0 0.0
  %3098 = vmatprep.subr.mxu0 0.0
  %3099 = vmatpush2.msra.mxu0 0.0
  %3100 = vmatprep.subr.mxu0 0.0
  %3101 = vmatpush2.msra.mxu0 0.0
  %3102 = vmatprep.subr.mxu0 0.0
  %3103 = vmatpush2.msra.mxu0 0.0
  %3104 = vmatprep.subr.mxu0 0.0
  %3105 = vmatpush2.msra.mxu0 0.0
  %3106 = vmatprep.subr.mxu0 0.0
  %3107 = vmatpush2.msra.mxu0 0.0
  %3108 = vmatprep.subr.mxu0 0.0
  %3109 = vmatpush2.msra.mxu0 0.0
  %3110 = vmatprep.subr.mxu0 0.0
  %3111 = vmatpush2.msra.mxu0 0.0
  %3112 = vmatprep.subr.mxu0 0.0
  %3113 = vmatpush2.msra.mxu0 0.0
  %3114 = vmatprep.subr.mxu0 0.0
  %3115 = vmatpush2.msra.mxu0 0.0
  %3116 = vmatprep.subr.mxu0 0.0
  %3117 = vmatpush2.msra.mxu0 0.0
  %3118 = vmatprep.subr.mxu0 0.0
  %3119 = vmatpush2.msra.mxu0 0.0
  %3120 = vmatprep.subr.mxu0 0.0
  %3121 = vmatpush2.msra.mxu0 0.0
  %3122 = vmatprep.subr.mxu0 0.0
  %3123 = vmatpush2.msra.mxu0 0.0
  %3124 = vmatprep.subr.mxu0 0.0
  %3125 = vmatpush2.msra.mxu0 0.0
  %3126 = vmatprep.mubr.f32.mxu0 0.0
  %3127 = vmatmul.mubr.f32.gmra.mxu0 %v3054
  %v3128 = vpop.f32.mrf.mxu0
  %v3129 = vadd.f32 0.0, %v3128
  %v3130 = vpop.f32.mrf.mxu0
  %v3131 = vadd.f32 0.0, %v3130
  %3132 = vdwg.mxu0
  %s3133 = scalar_lea.vmem %s14, 4
  %v3134 = vld [vmem:[%s3133] sm:$0xf]
  %v3136 = vsel %vm3052, %v3134, 0
  %3138 = vmatprep.subr.mxu0 0.0
  %3139 = vmatpush1.msra.mxu0 0.0
  %3140 = vmatprep.subr.mxu0 0.0
  %3141 = vmatpush1.msra.mxu0 0.0
  %3142 = vmatprep.subr.mxu0 0.0
  %3143 = vmatpush1.msra.mxu0 0.0
  %3144 = vmatprep.subr.mxu0 0.0
  %3145 = vmatpush1.msra.mxu0 0.0
  %3146 = vmatprep.subr.mxu0 0.0
  %3147 = vmatpush1.msra.mxu0 0.0
  %3148 = vmatprep.subr.mxu0 0.0
  %3149 = vmatpush1.msra.mxu0 0.0
  %3150 = vmatprep.subr.mxu0 0.0
  %3151 = vmatpush1.msra.mxu0 0.0
  %3152 = vmatprep.subr.mxu0 0.0
  %3153 = vmatpush1.msra.mxu0 0.0
  %3154 = vmatprep.subr.mxu0 0.0
  %3155 = vmatpush1.msra.mxu0 0.0
  %3156 = vmatprep.subr.mxu0 0.0
  %3157 = vmatpush1.msra.mxu0 0.0
  %3158 = vmatprep.subr.mxu0 0.0
  %3159 = vmatpush1.msra.mxu0 0.0
  %3160 = vmatprep.subr.mxu0 0.0
  %3161 = vmatpush1.msra.mxu0 0.0
  %3162 = vmatprep.subr.mxu0 0.0
  %3163 = vmatpush1.msra.mxu0 0.0
  %3164 = vmatprep.subr.mxu0 0.0
  %3165 = vmatpush1.msra.mxu0 0.0
  %3166 = vmatprep.subr.mxu0 %v3060
  %3167 = vmatpush1.msra.mxu0 %v3057
  %3168 = vmatprep.subr.mxu0 %v3048
  %3169 = vmatpush1.msra.mxu0 %v3047
  %3170 = vmatprep.subr.mxu0 0.0
  %3171 = vmatpush2.msra.mxu0 0.0
  %3172 = vmatprep.subr.mxu0 0.0
  %3173 = vmatpush2.msra.mxu0 0.0
  %3174 = vmatprep.subr.mxu0 0.0
  %3175 = vmatpush2.msra.mxu0 0.0
  %3176 = vmatprep.subr.mxu0 0.0
  %3177 = vmatpush2.msra.mxu0 0.0
  %3178 = vmatprep.subr.mxu0 0.0
  %3179 = vmatpush2.msra.mxu0 0.0
  %3180 = vmatprep.subr.mxu0 0.0
  %3181 = vmatpush2.msra.mxu0 0.0
  %3182 = vmatprep.subr.mxu0 0.0
  %3183 = vmatpush2.msra.mxu0 0.0
  %3184 = vmatprep.subr.mxu0 0.0
  %3185 = vmatpush2.msra.mxu0 0.0
  %3186 = vmatprep.subr.mxu0 0.0
  %3187 = vmatpush2.msra.mxu0 0.0
  %3188 = vmatprep.subr.mxu0 0.0
  %3189 = vmatpush2.msra.mxu0 0.0
  %3190 = vmatprep.subr.mxu0 0.0
  %3191 = vmatpush2.msra.mxu0 0.0
  %3192 = vmatprep.subr.mxu0 0.0
  %3193 = vmatpush2.msra.mxu0 0.0
  %3194 = vmatprep.subr.mxu0 0.0
  %3195 = vmatpush2.msra.mxu0 0.0
  %3196 = vmatprep.subr.mxu0 0.0
  %3197 = vmatpush2.msra.mxu0 0.0
  %3198 = vmatprep.subr.mxu0 0.0
  %3199 = vmatpush2.msra.mxu0 0.0
  %3200 = vmatprep.subr.mxu0 0.0
  %3201 = vmatpush2.msra.mxu0 0.0
  %3202 = vmatprep.mubr.f32.mxu0 0.0
  %3203 = vmatmul.mubr.f32.gmra.mxu0 %v3136
  %v3204 = vpop.f32.mrf.mxu0
  %v3205 = vadd.f32 0.0, %v3204
  %v3206 = vpop.f32.mrf.mxu0
  %v3207 = vadd.f32 0.0, %v3206
  %3208 = vdwg.mxu0
  %v3209 = vmax.f32 %v3129, %v3205
  %v3210 = vmax.f32 %v3131, %v3207
  %v3211 = vld [vmem:[%s15] sm:$0xff]
  %v3212 = vld [vmem:[%s15 + $0x8] sm:$0xff]
  %v3213 = vld [vmem:[%s15 + $0x10] sm:$0xff]
  %v3214 = vld [vmem:[%s15 + $0x18] sm:$0xff]
  %v3215 = vld [vmem:[%s15 + $0x20] sm:$0xff]
  %v3216 = vld [vmem:[%s15 + $0x28] sm:$0xff]
  %v3217 = vld [vmem:[%s15 + $0x30] sm:$0xff]
  %v3218 = vld [vmem:[%s15 + $0x38] sm:$0xff]
  %v3219 = vld [vmem:[%s15 + $0x40] sm:$0xff]
  %v3220 = vld [vmem:[%s15 + $0x48] sm:$0xff]
  %v3221 = vld [vmem:[%s15 + $0x50] sm:$0xff]
  %v3222 = vld [vmem:[%s15 + $0x58] sm:$0xff]
  %v3223 = vld [vmem:[%s15 + $0x60] sm:$0xff]
  %v3224 = vld [vmem:[%s15 + $0x68] sm:$0xff]
  %v3225 = vld [vmem:[%s15 + $0x70] sm:$0xff]
  %v3226 = vld [vmem:[%s15 + $0x78] sm:$0xff]
  %v3227 = vld [vmem:[%s15 + $0x80] sm:$0xff]
  %v3228 = vld [vmem:[%s15 + $0x88] sm:$0xff]
  %v3229 = vld [vmem:[%s15 + $0x90] sm:$0xff]
  %v3230 = vld [vmem:[%s15 + $0x98] sm:$0xff]
  %vm3231 = vcmask 261120
  %v3233 = vsel %vm3231, %v3210, 0
  %3235 = vmatprep.subr.mxu0 0.0
  %3236 = vmatpush1.msra.mxu0 %v3226
  %3237 = vmatprep.subr.mxu0 0.0
  %3238 = vmatpush1.msra.mxu0 %v3225
  %3239 = vmatprep.subr.mxu0 0.0
  %3240 = vmatpush1.msra.mxu0 %v3224
  %3241 = vmatprep.subr.mxu0 0.0
  %3242 = vmatpush1.msra.mxu0 %v3223
  %3243 = vmatprep.subr.mxu0 0.0
  %3244 = vmatpush1.msra.mxu0 %v3222
  %3245 = vmatprep.subr.mxu0 0.0
  %3246 = vmatpush1.msra.mxu0 %v3221
  %3247 = vmatprep.subr.mxu0 0.0
  %3248 = vmatpush1.msra.mxu0 %v3220
  %3249 = vmatprep.subr.mxu0 0.0
  %3250 = vmatpush1.msra.mxu0 %v3219
  %3251 = vmatprep.subr.mxu0 0.0
  %3252 = vmatpush1.msra.mxu0 %v3218
  %3253 = vmatprep.subr.mxu0 0.0
  %3254 = vmatpush1.msra.mxu0 %v3217
  %3255 = vmatprep.subr.mxu0 0.0
  %3256 = vmatpush1.msra.mxu0 %v3216
  %3257 = vmatprep.subr.mxu0 0.0
  %3258 = vmatpush1.msra.mxu0 %v3215
  %3259 = vmatprep.subr.mxu0 0.0
  %3260 = vmatpush1.msra.mxu0 %v3214
  %3261 = vmatprep.subr.mxu0 0.0
  %3262 = vmatpush1.msra.mxu0 %v3213
  %3263 = vmatprep.subr.mxu0 0.0
  %3264 = vmatpush1.msra.mxu0 %v3212
  %3265 = vmatprep.subr.mxu0 0.0
  %3266 = vmatpush1.msra.mxu0 %v3211
  %3267 = vmatprep.subr.mxu0 0.0
  %3268 = vmatpush2.msra.mxu0 0.0
  %3269 = vmatprep.subr.mxu0 0.0
  %3270 = vmatpush2.msra.mxu0 0.0
  %3271 = vmatprep.subr.mxu0 0.0
  %3272 = vmatpush2.msra.mxu0 0.0
  %3273 = vmatprep.subr.mxu0 0.0
  %3274 = vmatpush2.msra.mxu0 0.0
  %3275 = vmatprep.subr.mxu0 0.0
  %3276 = vmatpush2.msra.mxu0 0.0
  %3277 = vmatprep.subr.mxu0 0.0
  %3278 = vmatpush2.msra.mxu0 0.0
  %3279 = vmatprep.subr.mxu0 0.0
  %3280 = vmatpush2.msra.mxu0 0.0
  %3281 = vmatprep.subr.mxu0 0.0
  %3282 = vmatpush2.msra.mxu0 0.0
  %3283 = vmatprep.subr.mxu0 0.0
  %3284 = vmatpush2.msra.mxu0 0.0
  %3285 = vmatprep.subr.mxu0 0.0
  %3286 = vmatpush2.msra.mxu0 0.0
  %3287 = vmatprep.subr.mxu0 0.0
  %3288 = vmatpush2.msra.mxu0 0.0
  %3289 = vmatprep.subr.mxu0 0.0
  %3290 = vmatpush2.msra.mxu0 0.0
  %3291 = vmatprep.subr.mxu0 0.0
  %3292 = vmatpush2.msra.mxu0 %v3230
  %3293 = vmatprep.subr.mxu0 0.0
  %3294 = vmatpush2.msra.mxu0 %v3229
  %3295 = vmatprep.subr.mxu0 0.0
  %3296 = vmatpush2.msra.mxu0 %v3228
  %3297 = vmatprep.subr.mxu0 0.0
  %3298 = vmatpush2.msra.mxu0 %v3227
  %3299 = vmatprep.mubr.f32.mxu0 %v3233
  %3300 = vmatmul.mubr.f32.gmra.mxu0 %v3209
  %v3301 = vpop.f32.mrf.mxu0
  %v3302 = vadd.f32 0.0, %v3301
  %v3303 = vpop.f32.mrf.mxu0
  %3304 = vdwg.mxu0
  %s3305 = scalar_lea.vmem %s15, 160
  %v3306 = vld [vmem:[%s3305] sm:$0xff]
  %v3307 = vld [vmem:[%s3305 + $0x8] sm:$0xff]
  %v3308 = vld [vmem:[%s3305 + $0x10] sm:$0xff]
  %v3309 = vld [vmem:[%s3305 + $0x18] sm:$0xff]
  %v3310 = vld [vmem:[%s3305 + $0x20] sm:$0xff]
  %v3311 = vld [vmem:[%s3305 + $0x28] sm:$0xff]
  %v3312 = vld [vmem:[%s3305 + $0x30] sm:$0xff]
  %v3313 = vld [vmem:[%s3305 + $0x38] sm:$0xff]
  %v3314 = vld [vmem:[%s3305 + $0x40] sm:$0xff]
  %v3315 = vld [vmem:[%s3305 + $0x48] sm:$0xff]
  %v3316 = vld [vmem:[%s3305 + $0x50] sm:$0xff]
  %v3317 = vld [vmem:[%s3305 + $0x58] sm:$0xff]
  %v3318 = vld [vmem:[%s3305 + $0x60] sm:$0xff]
  %v3319 = vld [vmem:[%s3305 + $0x68] sm:$0xff]
  %v3320 = vld [vmem:[%s3305 + $0x70] sm:$0xff]
  %v3321 = vld [vmem:[%s3305 + $0x78] sm:$0xff]
  %v3322 = vld [vmem:[%s3305 + $0x80] sm:$0xff]
  %v3323 = vld [vmem:[%s3305 + $0x88] sm:$0xff]
  %v3324 = vld [vmem:[%s3305 + $0x90] sm:$0xff]
  %v3325 = vld [vmem:[%s3305 + $0x98] sm:$0xff]
  %3326 = vmatprep.subr.mxu0 0.0
  %3327 = vmatpush1.msra.mxu0 %v3321
  %3328 = vmatprep.subr.mxu0 0.0
  %3329 = vmatpush1.msra.mxu0 %v3320
  %3330 = vmatprep.subr.mxu0 0.0
  %3331 = vmatpush1.msra.mxu0 %v3319
  %3332 = vmatprep.subr.mxu0 0.0
  %3333 = vmatpush1.msra.mxu0 %v3318
  %3334 = vmatprep.subr.mxu0 0.0
  %3335 = vmatpush1.msra.mxu0 %v3317
  %3336 = vmatprep.subr.mxu0 0.0
  %3337 = vmatpush1.msra.mxu0 %v3316
  %3338 = vmatprep.subr.mxu0 0.0
  %3339 = vmatpush1.msra.mxu0 %v3315
  %3340 = vmatprep.subr.mxu0 0.0
  %3341 = vmatpush1.msra.mxu0 %v3314
  %3342 = vmatprep.subr.mxu0 0.0
  %3343 = vmatpush1.msra.mxu0 %v3313
  %3344 = vmatprep.subr.mxu0 0.0
  %3345 = vmatpush1.msra.mxu0 %v3312
  %3346 = vmatprep.subr.mxu0 0.0
  %3347 = vmatpush1.msra.mxu0 %v3311
  %3348 = vmatprep.subr.mxu0 0.0
  %3349 = vmatpush1.msra.mxu0 %v3310
  %3350 = vmatprep.subr.mxu0 0.0
  %3351 = vmatpush1.msra.mxu0 %v3309
  %3352 = vmatprep.subr.mxu0 0.0
  %3353 = vmatpush1.msra.mxu0 %v3308
  %3354 = vmatprep.subr.mxu0 0.0
  %3355 = vmatpush1.msra.mxu0 %v3307
  %3356 = vmatprep.subr.mxu0 0.0
  %3357 = vmatpush1.msra.mxu0 %v3306
  %3358 = vmatprep.subr.mxu0 0.0
  %3359 = vmatpush2.msra.mxu0 0.0
  %3360 = vmatprep.subr.mxu0 0.0
  %3361 = vmatpush2.msra.mxu0 0.0
  %3362 = vmatprep.subr.mxu0 0.0
  %3363 = vmatpush2.msra.mxu0 0.0
  %3364 = vmatprep.subr.mxu0 0.0
  %3365 = vmatpush2.msra.mxu0 0.0
  %3366 = vmatprep.subr.mxu0 0.0
  %3367 = vmatpush2.msra.mxu0 0.0
  %3368 = vmatprep.subr.mxu0 0.0
  %3369 = vmatpush2.msra.mxu0 0.0
  %3370 = vmatprep.subr.mxu0 0.0
  %3371 = vmatpush2.msra.mxu0 0.0
  %3372 = vmatprep.subr.mxu0 0.0
  %3373 = vmatpush2.msra.mxu0 0.0
  %3374 = vmatprep.subr.mxu0 0.0
  %3375 = vmatpush2.msra.mxu0 0.0
  %3376 = vmatprep.subr.mxu0 0.0
  %3377 = vmatpush2.msra.mxu0 0.0
  %3378 = vmatprep.subr.mxu0 0.0
  %3379 = vmatpush2.msra.mxu0 0.0
  %3380 = vmatprep.subr.mxu0 0.0
  %3381 = vmatpush2.msra.mxu0 0.0
  %3382 = vmatprep.subr.mxu0 0.0
  %3383 = vmatpush2.msra.mxu0 %v3325
  %3384 = vmatprep.subr.mxu0 0.0
  %3385 = vmatpush2.msra.mxu0 %v3324
  %3386 = vmatprep.subr.mxu0 0.0
  %3387 = vmatpush2.msra.mxu0 %v3323
  %3388 = vmatprep.subr.mxu0 0.0
  %3389 = vmatpush2.msra.mxu0 %v3322
  %3390 = vmatprep.mubr.f32.mxu0 %v3233
  %3391 = vmatmul.mubr.f32.gmra.mxu0 %v3209
  %v3392 = vpop.f32.mrf.mxu0
  %v3393 = vadd.f32 0.0, %v3392
  %v3394 = vpop.f32.mrf.mxu0
  %3395 = vdwg.mxu0
  %v3396 = vmax.f32 %v3302, %v3393
  %v3397 = vld [vmem:[%s16] sm:$0x3f]
  %v3398 = vld [vmem:[%s17] sm:$0xff]
  %v3399 = vld [vmem:[%s17 + $0x8] sm:$0xff]
  %v3400 = vld [vmem:[%s17 + $0x10] sm:$0xff]
  %v3401 = vld [vmem:[%s17 + $0x18] sm:$0xff]
  %v3402 = vld [vmem:[%s17 + $0x20] sm:$0xff]
  %v3403 = vld [vmem:[%s17 + $0x28] sm:$0xff]
  %v3404 = vld [vmem:[%s17 + $0x30] sm:$0xff]
  %v3405 = vld [vmem:[%s17 + $0x38] sm:$0xff]
  %v3407 = vsel %vm2115, %v3396, 0
  %3409 = vmatprep.subr.mxu0 0.0
  %3410 = vmatpush1.msra.mxu0 0.0
  %3411 = vmatprep.subr.mxu0 0.0
  %3412 = vmatpush1.msra.mxu0 0.0
  %3413 = vmatprep.subr.mxu0 0.0
  %3414 = vmatpush1.msra.mxu0 0.0
  %3415 = vmatprep.subr.mxu0 0.0
  %3416 = vmatpush1.msra.mxu0 0.0
  %3417 = vmatprep.subr.mxu0 0.0
  %3418 = vmatpush1.msra.mxu0 0.0
  %3419 = vmatprep.subr.mxu0 0.0
  %3420 = vmatpush1.msra.mxu0 0.0
  %3421 = vmatprep.subr.mxu0 0.0
  %3422 = vmatpush1.msra.mxu0 0.0
  %3423 = vmatprep.subr.mxu0 0.0
  %3424 = vmatpush1.msra.mxu0 0.0
  %3425 = vmatprep.subr.mxu0 0.0
  %3426 = vmatpush1.msra.mxu0 %v3405
  %3427 = vmatprep.subr.mxu0 0.0
  %3428 = vmatpush1.msra.mxu0 %v3404
  %3429 = vmatprep.subr.mxu0 0.0
  %3430 = vmatpush1.msra.mxu0 %v3403
  %3431 = vmatprep.subr.mxu0 0.0
  %3432 = vmatpush1.msra.mxu0 %v3402
  %3433 = vmatprep.subr.mxu0 0.0
  %3434 = vmatpush1.msra.mxu0 %v3401
  %3435 = vmatprep.subr.mxu0 0.0
  %3436 = vmatpush1.msra.mxu0 %v3400
  %3437 = vmatprep.subr.mxu0 0.0
  %3438 = vmatpush1.msra.mxu0 %v3399
  %3439 = vmatprep.subr.mxu0 0.0
  %3440 = vmatpush1.msra.mxu0 %v3398
  %3441 = vmatprep.subr.mxu0 0.0
  %3442 = vmatpush2.msra.mxu0 0.0
  %3443 = vmatprep.subr.mxu0 0.0
  %3444 = vmatpush2.msra.mxu0 0.0
  %3445 = vmatprep.subr.mxu0 0.0
  %3446 = vmatpush2.msra.mxu0 0.0
  %3447 = vmatprep.subr.mxu0 0.0
  %3448 = vmatpush2.msra.mxu0 0.0
  %3449 = vmatprep.subr.mxu0 0.0
  %3450 = vmatpush2.msra.mxu0 0.0
  %3451 = vmatprep.subr.mxu0 0.0
  %3452 = vmatpush2.msra.mxu0 0.0
  %3453 = vmatprep.subr.mxu0 0.0
  %3454 = vmatpush2.msra.mxu0 0.0
  %3455 = vmatprep.subr.mxu0 0.0
  %3456 = vmatpush2.msra.mxu0 0.0
  %3457 = vmatprep.subr.mxu0 0.0
  %3458 = vmatpush2.msra.mxu0 0.0
  %3459 = vmatprep.subr.mxu0 0.0
  %3460 = vmatpush2.msra.mxu0 0.0
  %3461 = vmatprep.subr.mxu0 0.0
  %3462 = vmatpush2.msra.mxu0 0.0
  %3463 = vmatprep.subr.mxu0 0.0
  %3464 = vmatpush2.msra.mxu0 0.0
  %3465 = vmatprep.subr.mxu0 0.0
  %3466 = vmatpush2.msra.mxu0 0.0
  %3467 = vmatprep.subr.mxu0 0.0
  %3468 = vmatpush2.msra.mxu0 0.0
  %3469 = vmatprep.subr.mxu0 0.0
  %3470 = vmatpush2.msra.mxu0 0.0
  %3471 = vmatprep.subr.mxu0 0.0
  %3472 = vmatpush2.msra.mxu0 0.0
  %3473 = vmatprep.mubr.f32.mxu0 0.0
  %3474 = vmatmul.mubr.f32.gmra.mxu0 %v3407
  %v3475 = vpop.f32.mrf.mxu0
  %v3476 = vadd.f32 0.0, %v3475
  %v3477 = vpop.f32.mrf.mxu0
  %3478 = vdwg.mxu0
  %v3479 = vld [vmem:[%s18] sm:$0x1]
  %v3481 = vlaneseq
  %v3482 = vshrl.u32 %v3481, 7
  %v3483 = vsub.s32 0, %v3482
  %v3484 = vrot.slane %v3479, %v3483
  %vm3486 = vcmask 31744
  %v3488 = vsel %vm3486, %v3397, 0
  %vm3490 = vcmask 1043456
  %v3492 = vsel %vm3490, %v3476, 0
  %3494 = vmatprep.subr.mxu0 0.0
  %3495 = vmatpush1.msra.mxu0 0.0
  %3496 = vmatprep.subr.mxu0 0.0
  %3497 = vmatpush1.msra.mxu0 0.0
  %3498 = vmatprep.subr.mxu0 0.0
  %3499 = vmatpush1.msra.mxu0 0.0
  %3500 = vmatprep.subr.mxu0 0.0
  %3501 = vmatpush1.msra.mxu0 0.0
  %3502 = vmatprep.subr.mxu0 0.0
  %3503 = vmatpush1.msra.mxu0 0.0
  %3504 = vmatprep.subr.mxu0 0.0
  %3505 = vmatpush1.msra.mxu0 0.0
  %3506 = vmatprep.subr.mxu0 0.0
  %3507 = vmatpush1.msra.mxu0 0.0
  %3508 = vmatprep.subr.mxu0 0.0
  %3509 = vmatpush1.msra.mxu0 0.0
  %3510 = vmatprep.subr.mxu0 0.0
  %3511 = vmatpush1.msra.mxu0 0.0
  %3512 = vmatprep.subr.mxu0 0.0
  %3513 = vmatpush1.msra.mxu0 0.0
  %3514 = vmatprep.subr.mxu0 0.0
  %3515 = vmatpush1.msra.mxu0 0.0
  %3516 = vmatprep.subr.mxu0 0.0
  %3517 = vmatpush1.msra.mxu0 0.0
  %3518 = vmatprep.subr.mxu0 0.0
  %3519 = vmatpush1.msra.mxu0 0.0
  %3520 = vmatprep.subr.mxu0 0.0
  %3521 = vmatpush1.msra.mxu0 0.0
  %3522 = vmatprep.subr.mxu0 0.0
  %3523 = vmatpush1.msra.mxu0 0.0
  %3524 = vmatprep.subr.mxu0 0.0
  %3525 = vmatpush1.msra.mxu0 %v3492
  %3526 = vmatprep.subr.mxu0 0.0
  %3527 = vmatpush2.msra.mxu0 0.0
  %3528 = vmatprep.subr.mxu0 0.0
  %3529 = vmatpush2.msra.mxu0 0.0
  %3530 = vmatprep.subr.mxu0 0.0
  %3531 = vmatpush2.msra.mxu0 0.0
  %3532 = vmatprep.subr.mxu0 0.0
  %3533 = vmatpush2.msra.mxu0 0.0
  %3534 = vmatprep.subr.mxu0 0.0
  %3535 = vmatpush2.msra.mxu0 0.0
  %3536 = vmatprep.subr.mxu0 0.0
  %3537 = vmatpush2.msra.mxu0 0.0
  %3538 = vmatprep.subr.mxu0 0.0
  %3539 = vmatpush2.msra.mxu0 0.0
  %3540 = vmatprep.subr.mxu0 0.0
  %3541 = vmatpush2.msra.mxu0 0.0
  %3542 = vmatprep.subr.mxu0 0.0
  %3543 = vmatpush2.msra.mxu0 0.0
  %3544 = vmatprep.subr.mxu0 0.0
  %3545 = vmatpush2.msra.mxu0 0.0
  %3546 = vmatprep.subr.mxu0 0.0
  %3547 = vmatpush2.msra.mxu0 0.0
  %3548 = vmatprep.subr.mxu0 0.0
  %3549 = vmatpush2.msra.mxu0 0.0
  %3550 = vmatprep.subr.mxu0 0.0
  %3551 = vmatpush2.msra.mxu0 0.0
  %3552 = vmatprep.subr.mxu0 0.0
  %3553 = vmatpush2.msra.mxu0 0.0
  %3554 = vmatprep.subr.mxu0 0.0
  %3555 = vmatpush2.msra.mxu0 0.0
  %3556 = vmatprep.subr.mxu0 0.0
  %3557 = vmatpush2.msra.mxu0 0.0
  %3558 = vmatprep.mubr.f32.mxu0 0.0
  %3559 = vmatmul.mubr.f32.gmra.mxu0 %v3488
  %v3560 = vpop.f32.mrf.mxu0
  %v3561 = vadd.f32 %v3484, %v3560
  %v3562 = vpop.f32.mrf.mxu0
  %3563 = vdwg.mxu0
  %v3564 = vmax.f32 %v3561, 0.0
  %v3565 = vld [vmem:[%s19] sm:$0xff]
  %v3566 = vld [vmem:[%s19 + $0x8] sm:$0x3f]
  %v3567 = vld [vmem:[%s20] sm:$0xff]
  %v3568 = vld [vmem:[%s20 + $0x8] sm:$0xff]
  %v3569 = vld [vmem:[%s20 + $0x10] sm:$0xff]
  %v3570 = vld [vmem:[%s20 + $0x18] sm:$0xff]
  %v3571 = vld [vmem:[%s20 + $0x20] sm:$0xff]
  %v3572 = vld [vmem:[%s20 + $0x28] sm:$0xff]
  %vm3573 = vcmask 392192
  %v3575 = vsel %vm3573, %v3564, 0
  %3577 = vmatprep.subr.mxu0 0.0
  %3578 = vmatpush1.msra.mxu0 0.0
  %3579 = vmatprep.subr.mxu0 0.0
  %3580 = vmatpush1.msra.mxu0 0.0
  %3581 = vmatprep.subr.mxu0 0.0
  %3582 = vmatpush1.msra.mxu0 0.0
  %3583 = vmatprep.subr.mxu0 0.0
  %3584 = vmatpush1.msra.mxu0 0.0
  %3585 = vmatprep.subr.mxu0 0.0
  %3586 = vmatpush1.msra.mxu0 0.0
  %3587 = vmatprep.subr.mxu0 0.0
  %3588 = vmatpush1.msra.mxu0 0.0
  %3589 = vmatprep.subr.mxu0 0.0
  %3590 = vmatpush1.msra.mxu0 0.0
  %3591 = vmatprep.subr.mxu0 0.0
  %3592 = vmatpush1.msra.mxu0 0.0
  %3593 = vmatprep.subr.mxu0 0.0
  %3594 = vmatpush1.msra.mxu0 0.0
  %3595 = vmatprep.subr.mxu0 0.0
  %3596 = vmatpush1.msra.mxu0 0.0
  %3597 = vmatprep.subr.mxu0 0.0
  %3598 = vmatpush1.msra.mxu0 %v3572
  %3599 = vmatprep.subr.mxu0 0.0
  %3600 = vmatpush1.msra.mxu0 %v3571
  %3601 = vmatprep.subr.mxu0 0.0
  %3602 = vmatpush1.msra.mxu0 %v3570
  %3603 = vmatprep.subr.mxu0 0.0
  %3604 = vmatpush1.msra.mxu0 %v3569
  %3605 = vmatprep.subr.mxu0 0.0
  %3606 = vmatpush1.msra.mxu0 %v3568
  %3607 = vmatprep.subr.mxu0 0.0
  %3608 = vmatpush1.msra.mxu0 %v3567
  %3609 = vmatprep.subr.mxu0 0.0
  %3610 = vmatpush2.msra.mxu0 0.0
  %3611 = vmatprep.subr.mxu0 0.0
  %3612 = vmatpush2.msra.mxu0 0.0
  %3613 = vmatprep.subr.mxu0 0.0
  %3614 = vmatpush2.msra.mxu0 0.0
  %3615 = vmatprep.subr.mxu0 0.0
  %3616 = vmatpush2.msra.mxu0 0.0
  %3617 = vmatprep.subr.mxu0 0.0
  %3618 = vmatpush2.msra.mxu0 0.0
  %3619 = vmatprep.subr.mxu0 0.0
  %3620 = vmatpush2.msra.mxu0 0.0
  %3621 = vmatprep.subr.mxu0 0.0
  %3622 = vmatpush2.msra.mxu0 0.0
  %3623 = vmatprep.subr.mxu0 0.0
  %3624 = vmatpush2.msra.mxu0 0.0
  %3625 = vmatprep.subr.mxu0 0.0
  %3626 = vmatpush2.msra.mxu0 0.0
  %3627 = vmatprep.subr.mxu0 0.0
  %3628 = vmatpush2.msra.mxu0 0.0
  %3629 = vmatprep.subr.mxu0 0.0
  %3630 = vmatpush2.msra.mxu0 0.0
  %3631 = vmatprep.subr.mxu0 0.0
  %3632 = vmatpush2.msra.mxu0 0.0
  %3633 = vmatprep.subr.mxu0 0.0
  %3634 = vmatpush2.msra.mxu0 0.0
  %3635 = vmatprep.subr.mxu0 0.0
  %3636 = vmatpush2.msra.mxu0 0.0
  %3637 = vmatprep.subr.mxu0 0.0
  %3638 = vmatpush2.msra.mxu0 0.0
  %3639 = vmatprep.subr.mxu0 0.0
  %3640 = vmatpush2.msra.mxu0 0.0
  %3641 = vmatprep.mubr.f32.mxu0 0.0
  %3642 = vmatmul.mubr.f32.gmra.mxu0 %v3575
  %v3643 = vpop.f32.mrf.mxu0
  %v3644 = vadd.f32 0.0, %v3643
  %v3645 = vpop.f32.mrf.mxu0
  %3646 = vdwg.mxu0
  %s3647 = scalar_lea.vmem %s19, 16
  %v3648 = vld [vmem:[%s3647] sm:$0xff]
  %v3649 = vld [vmem:[%s3647 + $0x8] sm:$0x3f]
  %s3650 = scalar_lea.vmem %s20, 48
  %v3651 = vld [vmem:[%s3650] sm:$0xff]
  %v3652 = vld [vmem:[%s3650 + $0x8] sm:$0xff]
  %v3653 = vld [vmem:[%s3650 + $0x10] sm:$0xff]
  %v3654 = vld [vmem:[%s3650 + $0x18] sm:$0xff]
  %v3655 = vld [vmem:[%s3650 + $0x20] sm:$0xff]
  %v3656 = vld [vmem:[%s3650 + $0x28] sm:$0xff]
  %3657 = vmatprep.subr.mxu0 0.0
  %3658 = vmatpush1.msra.mxu0 0.0
  %3659 = vmatprep.subr.mxu0 0.0
  %3660 = vmatpush1.msra.mxu0 0.0
  %3661 = vmatprep.subr.mxu0 0.0
  %3662 = vmatpush1.msra.mxu0 0.0
  %3663 = vmatprep.subr.mxu0 0.0
  %3664 = vmatpush1.msra.mxu0 0.0
  %3665 = vmatprep.subr.mxu0 0.0
  %3666 = vmatpush1.msra.mxu0 0.0
  %3667 = vmatprep.subr.mxu0 0.0
  %3668 = vmatpush1.msra.mxu0 0.0
  %3669 = vmatprep.subr.mxu0 0.0
  %3670 = vmatpush1.msra.mxu0 0.0
  %3671 = vmatprep.subr.mxu0 0.0
  %3672 = vmatpush1.msra.mxu0 0.0
  %3673 = vmatprep.subr.mxu0 0.0
  %3674 = vmatpush1.msra.mxu0 0.0
  %3675 = vmatprep.subr.mxu0 0.0
  %3676 = vmatpush1.msra.mxu0 0.0
  %3677 = vmatprep.subr.mxu0 0.0
  %3678 = vmatpush1.msra.mxu0 %v3656
  %3679 = vmatprep.subr.mxu0 0.0
  %3680 = vmatpush1.msra.mxu0 %v3655
  %3681 = vmatprep.subr.mxu0 0.0
  %3682 = vmatpush1.msra.mxu0 %v3654
  %3683 = vmatprep.subr.mxu0 0.0
  %3684 = vmatpush1.msra.mxu0 %v3653
  %3685 = vmatprep.subr.mxu0 0.0
  %3686 = vmatpush1.msra.mxu0 %v3652
  %3687 = vmatprep.subr.mxu0 0.0
  %3688 = vmatpush1.msra.mxu0 %v3651
  %3689 = vmatprep.subr.mxu0 0.0
  %3690 = vmatpush2.msra.mxu0 0.0
  %3691 = vmatprep.subr.mxu0 0.0
  %3692 = vmatpush2.msra.mxu0 0.0
  %3693 = vmatprep.subr.mxu0 0.0
  %3694 = vmatpush2.msra.mxu0 0.0
  %3695 = vmatprep.subr.mxu0 0.0
  %3696 = vmatpush2.msra.mxu0 0.0
  %3697 = vmatprep.subr.mxu0 0.0
  %3698 = vmatpush2.msra.mxu0 0.0
  %3699 = vmatprep.subr.mxu0 0.0
  %3700 = vmatpush2.msra.mxu0 0.0
  %3701 = vmatprep.subr.mxu0 0.0
  %3702 = vmatpush2.msra.mxu0 0.0
  %3703 = vmatprep.subr.mxu0 0.0
  %3704 = vmatpush2.msra.mxu0 0.0
  %3705 = vmatprep.subr.mxu0 0.0
  %3706 = vmatpush2.msra.mxu0 0.0
  %3707 = vmatprep.subr.mxu0 0.0
  %3708 = vmatpush2.msra.mxu0 0.0
  %3709 = vmatprep.subr.mxu0 0.0
  %3710 = vmatpush2.msra.mxu0 0.0
  %3711 = vmatprep.subr.mxu0 0.0
  %3712 = vmatpush2.msra.mxu0 0.0
  %3713 = vmatprep.subr.mxu0 0.0
  %3714 = vmatpush2.msra.mxu0 0.0
  %3715 = vmatprep.subr.mxu0 0.0
  %3716 = vmatpush2.msra.mxu0 0.0
  %3717 = vmatprep.subr.mxu0 0.0
  %3718 = vmatpush2.msra.mxu0 0.0
  %3719 = vmatprep.subr.mxu0 0.0
  %3720 = vmatpush2.msra.mxu0 0.0
  %3721 = vmatprep.mubr.f32.mxu0 0.0
  %3722 = vmatmul.mubr.f32.gmra.mxu0 %v3575
  %v3723 = vpop.f32.mrf.mxu0
  %v3724 = vadd.f32 0.0, %v3723
  %v3725 = vpop.f32.mrf.mxu0
  %3726 = vdwg.mxu0
  %vm3727 = vcmask 48128
  %v3729 = vsel %vm3727, %v3648, 0
  %v3732 = vsel %vm3727, %v3649, 0
  %vm3734 = vcmask 1045504
  %v3736 = vsel %vm3734, %v3724, 0
  %3738 = vmatprep.subr.mxu0 0.0
  %3739 = vmatpush1.msra.mxu0 0.0
  %3740 = vmatprep.subr.mxu0 0.0
  %3741 = vmatpush1.msra.mxu0 0.0
  %3742 = vmatprep.subr.mxu0 0.0
  %3743 = vmatpush1.msra.mxu0 0.0
  %3744 = vmatprep.subr.mxu0 0.0
  %3745 = vmatpush1.msra.mxu0 0.0
  %3746 = vmatprep.subr.mxu0 0.0
  %3747 = vmatpush1.msra.mxu0 0.0
  %3748 = vmatprep.subr.mxu0 0.0
  %3749 = vmatpush1.msra.mxu0 0.0
  %3750 = vmatprep.subr.mxu0 0.0
  %3751 = vmatpush1.msra.mxu0 0.0
  %3752 = vmatprep.subr.mxu0 0.0
  %3753 = vmatpush1.msra.mxu0 0.0
  %3754 = vmatprep.subr.mxu0 0.0
  %3755 = vmatpush1.msra.mxu0 0.0
  %3756 = vmatprep.subr.mxu0 0.0
  %3757 = vmatpush1.msra.mxu0 0.0
  %3758 = vmatprep.subr.mxu0 0.0
  %3759 = vmatpush1.msra.mxu0 0.0
  %3760 = vmatprep.subr.mxu0 0.0
  %3761 = vmatpush1.msra.mxu0 0.0
  %3762 = vmatprep.subr.mxu0 0.0
  %3763 = vmatpush1.msra.mxu0 0.0
  %3764 = vmatprep.subr.mxu0 0.0
  %3765 = vmatpush1.msra.mxu0 0.0
  %3766 = vmatprep.subr.mxu0 0.0
  %3767 = vmatpush1.msra.mxu0 0.0
  %3768 = vmatprep.subr.mxu0 0.0
  %3769 = vmatpush1.msra.mxu0 %v3736
  %3770 = vmatprep.subr.mxu0 0.0
  %3771 = vmatpush2.msra.mxu0 0.0
  %3772 = vmatprep.subr.mxu0 0.0
  %3773 = vmatpush2.msra.mxu0 0.0
  %3774 = vmatprep.subr.mxu0 0.0
  %3775 = vmatpush2.msra.mxu0 0.0
  %3776 = vmatprep.subr.mxu0 0.0
  %3777 = vmatpush2.msra.mxu0 0.0
  %3778 = vmatprep.subr.mxu0 0.0
  %3779 = vmatpush2.msra.mxu0 0.0
  %3780 = vmatprep.subr.mxu0 0.0
  %3781 = vmatpush2.msra.mxu0 0.0
  %3782 = vmatprep.subr.mxu0 0.0
  %3783 = vmatpush2.msra.mxu0 0.0
  %3784 = vmatprep.subr.mxu0 0.0
  %3785 = vmatpush2.msra.mxu0 0.0
  %3786 = vmatprep.subr.mxu0 0.0
  %3787 = vmatpush2.msra.mxu0 0.0
  %3788 = vmatprep.subr.mxu0 0.0
  %3789 = vmatpush2.msra.mxu0 0.0
  %3790 = vmatprep.subr.mxu0 0.0
  %3791 = vmatpush2.msra.mxu0 0.0
  %3792 = vmatprep.subr.mxu0 0.0
  %3793 = vmatpush2.msra.mxu0 0.0
  %3794 = vmatprep.subr.mxu0 0.0
  %3795 = vmatpush2.msra.mxu0 0.0
  %3796 = vmatprep.subr.mxu0 0.0
  %3797 = vmatpush2.msra.mxu0 0.0
  %3798 = vmatprep.subr.mxu0 0.0
  %3799 = vmatpush2.msra.mxu0 0.0
  %3800 = vmatprep.subr.mxu0 0.0
  %3801 = vmatpush2.msra.mxu0 0.0
  %3802 = vmatprep.mubr.f32.mxu0 0.0
  %3803 = vmatmul.mubr.f32.gmra.mxu0 %v3729
  %v3804 = vpop.f32.mrf.mxu0
  %v3805 = vadd.f32 0.0, %v3804
  %v3806 = vpop.f32.mrf.mxu0
  %3807 = vmatprep.mubr.f32.mxu0 0.0
  %3808 = vmatmul.mubr.f32.gmra.mxu0 %v3732
  %v3809 = vpop.f32.mrf.mxu0
  %v3810 = vadd.f32 0.0, %v3809
  %v3811 = vpop.f32.mrf.mxu0
  %3812 = vdwg.mxu0
  %v3814 = vsel %vm3727, %v3565, 0
  %v3817 = vsel %vm3727, %v3566, 0
  %v3820 = vsel %vm3734, %v3644, 0
  %3822 = vmatprep.subr.mxu0 0.0
  %3823 = vmatpush1.msra.mxu0 0.0
  %3824 = vmatprep.subr.mxu0 0.0
  %3825 = vmatpush1.msra.mxu0 0.0
  %3826 = vmatprep.subr.mxu0 0.0
  %3827 = vmatpush1.msra.mxu0 0.0
  %3828 = vmatprep.subr.mxu0 0.0
  %3829 = vmatpush1.msra.mxu0 0.0
  %3830 = vmatprep.subr.mxu0 0.0
  %3831 = vmatpush1.msra.mxu0 0.0
  %3832 = vmatprep.subr.mxu0 0.0
  %3833 = vmatpush1.msra.mxu0 0.0
  %3834 = vmatprep.subr.mxu0 0.0
  %3835 = vmatpush1.msra.mxu0 0.0
  %3836 = vmatprep.subr.mxu0 0.0
  %3837 = vmatpush1.msra.mxu0 0.0
  %3838 = vmatprep.subr.mxu0 0.0
  %3839 = vmatpush1.msra.mxu0 0.0
  %3840 = vmatprep.subr.mxu0 0.0
  %3841 = vmatpush1.msra.mxu0 0.0
  %3842 = vmatprep.subr.mxu0 0.0
  %3843 = vmatpush1.msra.mxu0 0.0
  %3844 = vmatprep.subr.mxu0 0.0
  %3845 = vmatpush1.msra.mxu0 0.0
  %3846 = vmatprep.subr.mxu0 0.0
  %3847 = vmatpush1.msra.mxu0 0.0
  %3848 = vmatprep.subr.mxu0 0.0
  %3849 = vmatpush1.msra.mxu0 0.0
  %3850 = vmatprep.subr.mxu0 0.0
  %3851 = vmatpush1.msra.mxu0 0.0
  %3852 = vmatprep.subr.mxu0 0.0
  %3853 = vmatpush1.msra.mxu0 %v3820
  %3854 = vmatprep.subr.mxu0 0.0
  %3855 = vmatpush2.msra.mxu0 0.0
  %3856 = vmatprep.subr.mxu0 0.0
  %3857 = vmatpush2.msra.mxu0 0.0
  %3858 = vmatprep.subr.mxu0 0.0
  %3859 = vmatpush2.msra.mxu0 0.0
  %3860 = vmatprep.subr.mxu0 0.0
  %3861 = vmatpush2.msra.mxu0 0.0
  %3862 = vmatprep.subr.mxu0 0.0
  %3863 = vmatpush2.msra.mxu0 0.0
  %3864 = vmatprep.subr.mxu0 0.0
  %3865 = vmatpush2.msra.mxu0 0.0
  %3866 = vmatprep.subr.mxu0 0.0
  %3867 = vmatpush2.msra.mxu0 0.0
  %3868 = vmatprep.subr.mxu0 0.0
  %3869 = vmatpush2.msra.mxu0 0.0
  %3870 = vmatprep.subr.mxu0 0.0
  %3871 = vmatpush2.msra.mxu0 0.0
  %3872 = vmatprep.subr.mxu0 0.0
  %3873 = vmatpush2.msra.mxu0 0.0
  %3874 = vmatprep.subr.mxu0 0.0
  %3875 = vmatpush2.msra.mxu0 0.0
  %3876 = vmatprep.subr.mxu0 0.0
  %3877 = vmatpush2.msra.mxu0 0.0
  %3878 = vmatprep.subr.mxu0 0.0
  %3879 = vmatpush2.msra.mxu0 0.0
  %3880 = vmatprep.subr.mxu0 0.0
  %3881 = vmatpush2.msra.mxu0 0.0
  %3882 = vmatprep.subr.mxu0 0.0
  %3883 = vmatpush2.msra.mxu0 0.0
  %3884 = vmatprep.subr.mxu0 0.0
  %3885 = vmatpush2.msra.mxu0 0.0
  %3886 = vmatprep.mubr.f32.mxu0 0.0
  %3887 = vmatmul.mubr.f32.gmra.mxu0 %v3814
  %v3888 = vpop.f32.mrf.mxu0
  %v3889 = vadd.f32 %v3805, %v3888
  %v3890 = vpop.f32.mrf.mxu0
  %3891 = vmatprep.mubr.f32.mxu0 0.0
  %3892 = vmatmul.mubr.f32.gmra.mxu0 %v3817
  %v3893 = vpop.f32.mrf.mxu0
  %v3894 = vadd.f32 %v3810, %v3893
  %v3895 = vpop.f32.mrf.mxu0
  %3896 = vdwg.mxu0
  %s3897 = scalar_lea.vmem %s19, 32
  %v3898 = vld [vmem:[%s3897] sm:$0xff]
  %v3899 = vld [vmem:[%s3897 + $0x8] sm:$0x3f]
  %s3900 = scalar_lea.vmem %s20, 96
  %v3901 = vld [vmem:[%s3900] sm:$0xff]
  %v3902 = vld [vmem:[%s3900 + $0x8] sm:$0xff]
  %v3903 = vld [vmem:[%s3900 + $0x10] sm:$0xff]
  %v3904 = vld [vmem:[%s3900 + $0x18] sm:$0xff]
  %v3905 = vld [vmem:[%s3900 + $0x20] sm:$0xff]
  %v3906 = vld [vmem:[%s3900 + $0x28] sm:$0xff]
  %3907 = vmatprep.subr.mxu0 0.0
  %3908 = vmatpush1.msra.mxu0 0.0
  %3909 = vmatprep.subr.mxu0 0.0
  %3910 = vmatpush1.msra.mxu0 0.0
  %3911 = vmatprep.subr.mxu0 0.0
  %3912 = vmatpush1.msra.mxu0 0.0
  %3913 = vmatprep.subr.mxu0 0.0
  %3914 = vmatpush1.msra.mxu0 0.0
  %3915 = vmatprep.subr.mxu0 0.0
  %3916 = vmatpush1.msra.mxu0 0.0
  %3917 = vmatprep.subr.mxu0 0.0
  %3918 = vmatpush1.msra.mxu0 0.0
  %3919 = vmatprep.subr.mxu0 0.0
  %3920 = vmatpush1.msra.mxu0 0.0
  %3921 = vmatprep.subr.mxu0 0.0
  %3922 = vmatpush1.msra.mxu0 0.0
  %3923 = vmatprep.subr.mxu0 0.0
  %3924 = vmatpush1.msra.mxu0 0.0
  %3925 = vmatprep.subr.mxu0 0.0
  %3926 = vmatpush1.msra.mxu0 0.0
  %3927 = vmatprep.subr.mxu0 0.0
  %3928 = vmatpush1.msra.mxu0 %v3906
  %3929 = vmatprep.subr.mxu0 0.0
  %3930 = vmatpush1.msra.mxu0 %v3905
  %3931 = vmatprep.subr.mxu0 0.0
  %3932 = vmatpush1.msra.mxu0 %v3904
  %3933 = vmatprep.subr.mxu0 0.0
  %3934 = vmatpush1.msra.mxu0 %v3903
  %3935 = vmatprep.subr.mxu0 0.0
  %3936 = vmatpush1.msra.mxu0 %v3902
  %3937 = vmatprep.subr.mxu0 0.0
  %3938 = vmatpush1.msra.mxu0 %v3901
  %3939 = vmatprep.subr.mxu0 0.0
  %3940 = vmatpush2.msra.mxu0 0.0
  %3941 = vmatprep.subr.mxu0 0.0
  %3942 = vmatpush2.msra.mxu0 0.0
  %3943 = vmatprep.subr.mxu0 0.0
  %3944 = vmatpush2.msra.mxu0 0.0
  %3945 = vmatprep.subr.mxu0 0.0
  %3946 = vmatpush2.msra.mxu0 0.0
  %3947 = vmatprep.subr.mxu0 0.0
  %3948 = vmatpush2.msra.mxu0 0.0
  %3949 = vmatprep.subr.mxu0 0.0
  %3950 = vmatpush2.msra.mxu0 0.0
  %3951 = vmatprep.subr.mxu0 0.0
  %3952 = vmatpush2.msra.mxu0 0.0
  %3953 = vmatprep.subr.mxu0 0.0
  %3954 = vmatpush2.msra.mxu0 0.0
  %3955 = vmatprep.subr.mxu0 0.0
  %3956 = vmatpush2.msra.mxu0 0.0
  %3957 = vmatprep.subr.mxu0 0.0
  %3958 = vmatpush2.msra.mxu0 0.0
  %3959 = vmatprep.subr.mxu0 0.0
  %3960 = vmatpush2.msra.mxu0 0.0
  %3961 = vmatprep.subr.mxu0 0.0
  %3962 = vmatpush2.msra.mxu0 0.0
  %3963 = vmatprep.subr.mxu0 0.0
  %3964 = vmatpush2.msra.mxu0 0.0
  %3965 = vmatprep.subr.mxu0 0.0
  %3966 = vmatpush2.msra.mxu0 0.0
  %3967 = vmatprep.subr.mxu0 0.0
  %3968 = vmatpush2.msra.mxu0 0.0
  %3969 = vmatprep.subr.mxu0 0.0
  %3970 = vmatpush2.msra.mxu0 0.0
  %3971 = vmatprep.mubr.f32.mxu0 0.0
  %3972 = vmatmul.mubr.f32.gmra.mxu0 %v3575
  %v3973 = vpop.f32.mrf.mxu0
  %v3974 = vadd.f32 0.0, %v3973
  %v3975 = vpop.f32.mrf.mxu0
  %3976 = vdwg.mxu0
  %v3978 = vsel %vm3727, %v3898, 0
  %v3981 = vsel %vm3727, %v3899, 0
  %v3984 = vsel %vm3734, %v3974, 0
  %3986 = vmatprep.subr.mxu0 0.0
  %3987 = vmatpush1.msra.mxu0 0.0
  %3988 = vmatprep.subr.mxu0 0.0
  %3989 = vmatpush1.msra.mxu0 0.0
  %3990 = vmatprep.subr.mxu0 0.0
  %3991 = vmatpush1.msra.mxu0 0.0
  %3992 = vmatprep.subr.mxu0 0.0
  %3993 = vmatpush1.msra.mxu0 0.0
  %3994 = vmatprep.subr.mxu0 0.0
  %3995 = vmatpush1.msra.mxu0 0.0
  %3996 = vmatprep.subr.mxu0 0.0
  %3997 = vmatpush1.msra.mxu0 0.0
  %3998 = vmatprep.subr.mxu0 0.0
  %3999 = vmatpush1.msra.mxu0 0.0
  %4000 = vmatprep.subr.mxu0 0.0
  %4001 = vmatpush1.msra.mxu0 0.0
  %4002 = vmatprep.subr.mxu0 0.0
  %4003 = vmatpush1.msra.mxu0 0.0
  %4004 = vmatprep.subr.mxu0 0.0
  %4005 = vmatpush1.msra.mxu0 0.0
  %4006 = vmatprep.subr.mxu0 0.0
  %4007 = vmatpush1.msra.mxu0 0.0
  %4008 = vmatprep.subr.mxu0 0.0
  %4009 = vmatpush1.msra.mxu0 0.0
  %4010 = vmatprep.subr.mxu0 0.0
  %4011 = vmatpush1.msra.mxu0 0.0
  %4012 = vmatprep.subr.mxu0 0.0
  %4013 = vmatpush1.msra.mxu0 0.0
  %4014 = vmatprep.subr.mxu0 0.0
  %4015 = vmatpush1.msra.mxu0 0.0
  %4016 = vmatprep.subr.mxu0 0.0
  %4017 = vmatpush1.msra.mxu0 %v3984
  %4018 = vmatprep.subr.mxu0 0.0
  %4019 = vmatpush2.msra.mxu0 0.0
  %4020 = vmatprep.subr.mxu0 0.0
  %4021 = vmatpush2.msra.mxu0 0.0
  %4022 = vmatprep.subr.mxu0 0.0
  %4023 = vmatpush2.msra.mxu0 0.0
  %4024 = vmatprep.subr.mxu0 0.0
  %4025 = vmatpush2.msra.mxu0 0.0
  %4026 = vmatprep.subr.mxu0 0.0
  %4027 = vmatpush2.msra.mxu0 0.0
  %4028 = vmatprep.subr.mxu0 0.0
  %4029 = vmatpush2.msra.mxu0 0.0
  %4030 = vmatprep.subr.mxu0 0.0
  %4031 = vmatpush2.msra.mxu0 0.0
  %4032 = vmatprep.subr.mxu0 0.0
  %4033 = vmatpush2.msra.mxu0 0.0
  %4034 = vmatprep.subr.mxu0 0.0
  %4035 = vmatpush2.msra.mxu0 0.0
  %4036 = vmatprep.subr.mxu0 0.0
  %4037 = vmatpush2.msra.mxu0 0.0
  %4038 = vmatprep.subr.mxu0 0.0
  %4039 = vmatpush2.msra.mxu0 0.0
  %4040 = vmatprep.subr.mxu0 0.0
  %4041 = vmatpush2.msra.mxu0 0.0
  %4042 = vmatprep.subr.mxu0 0.0
  %4043 = vmatpush2.msra.mxu0 0.0
  %4044 = vmatprep.subr.mxu0 0.0
  %4045 = vmatpush2.msra.mxu0 0.0
  %4046 = vmatprep.subr.mxu0 0.0
  %4047 = vmatpush2.msra.mxu0 0.0
  %4048 = vmatprep.subr.mxu0 0.0
  %4049 = vmatpush2.msra.mxu0 0.0
  %4050 = vmatprep.mubr.f32.mxu0 0.0
  %4051 = vmatmul.mubr.f32.gmra.mxu0 %v3978
  %v4052 = vpop.f32.mrf.mxu0
  %v4053 = vadd.f32 0.0, %v4052
  %v4054 = vpop.f32.mrf.mxu0
  %4055 = vmatprep.mubr.f32.mxu0 0.0
  %4056 = vmatmul.mubr.f32.gmra.mxu0 %v3981
  %v4057 = vpop.f32.mrf.mxu0
  %v4058 = vadd.f32 0.0, %v4057
  %v4059 = vpop.f32.mrf.mxu0
  %4060 = vdwg.mxu0
  %v4061 = vadd.f32 %v3889, %v4053
  %v4062 = vadd.f32 %v3894, %v4058
  %v4063 = vld [vmem:[%s21] sm:$0x1]
  %v4065 = vlaneseq
  %v4066 = vshrl.u32 %v4065, 7
  %v4067 = vsub.s32 0, %v4066
  %v4068 = vrot.slane %v4063, %v4067
  %v4070 = vadd.f32 %v4061, %v4068
  %v4071 = vadd.f32 %v4062, %v4068
  %v4072 = vmax.f32 %v4070, 0.0
  %v4073 = vmax.f32 %v4071, 0.0
  %v4074 = vld [vmem:[%s22] sm:$0xff]
  %v4075 = vld [vmem:[%s22 + $0x8] sm:$0xff]
  %v4076 = vld [vmem:[%s22 + $0x10] sm:$0xff]
  %v4077 = vld [vmem:[%s22 + $0x18] sm:$0xff]
  %v4078 = vld [vmem:[%s22 + $0x20] sm:$0xff]
  %v4079 = vld [vmem:[%s22 + $0x28] sm:$0xff]
  %v4080 = vld [vmem:[%s22 + $0x30] sm:$0xff]
  %v4081 = vld [vmem:[%s22 + $0x38] sm:$0xff]
  %v4082 = vld [vmem:[%s22 + $0x40] sm:$0xff]
  %v4083 = vld [vmem:[%s22 + $0x48] sm:$0xff]
  %v4084 = vld [vmem:[%s22 + $0x50] sm:$0xf]
  %v4085 = vld [vmem:[%s23] sm:$0xff]
  %v4086 = vld [vmem:[%s23 + $0x8] sm:$0xff]
  %v4087 = vld [vmem:[%s23 + $0x10] sm:$0xff]
  %v4088 = vld [vmem:[%s23 + $0x18] sm:$0xff]
  %v4089 = vld [vmem:[%s23 + $0x20] sm:$0xff]
  %v4090 = vld [vmem:[%s23 + $0x28] sm:$0xff]
  %v4091 = vld [vmem:[%s23 + $0x30] sm:$0xff]
  %vm4092 = vcmask 457728
  %v4094 = vsel %vm4092, %v4072, 0
  %v4097 = vsel %vm4092, %v4073, 0
  %4099 = vmatprep.subr.mxu0 0.0
  %4100 = vmatpush1.msra.mxu0 0.0
  %4101 = vmatprep.subr.mxu0 0.0
  %4102 = vmatpush1.msra.mxu0 0.0
  %4103 = vmatprep.subr.mxu0 0.0
  %4104 = vmatpush1.msra.mxu0 0.0
  %4105 = vmatprep.subr.mxu0 0.0
  %4106 = vmatpush1.msra.mxu0 0.0
  %4107 = vmatprep.subr.mxu0 0.0
  %4108 = vmatpush1.msra.mxu0 0.0
  %4109 = vmatprep.subr.mxu0 0.0
  %4110 = vmatpush1.msra.mxu0 0.0
  %4111 = vmatprep.subr.mxu0 0.0
  %4112 = vmatpush1.msra.mxu0 0.0
  %4113 = vmatprep.subr.mxu0 0.0
  %4114 = vmatpush1.msra.mxu0 0.0
  %4115 = vmatprep.subr.mxu0 0.0
  %4116 = vmatpush1.msra.mxu0 0.0
  %4117 = vmatprep.subr.mxu0 0.0
  %4118 = vmatpush1.msra.mxu0 %v4091
  %4119 = vmatprep.subr.mxu0 0.0
  %4120 = vmatpush1.msra.mxu0 %v4090
  %4121 = vmatprep.subr.mxu0 0.0
  %4122 = vmatpush1.msra.mxu0 %v4089
  %4123 = vmatprep.subr.mxu0 0.0
  %4124 = vmatpush1.msra.mxu0 %v4088
  %4125 = vmatprep.subr.mxu0 0.0
  %4126 = vmatpush1.msra.mxu0 %v4087
  %4127 = vmatprep.subr.mxu0 0.0
  %4128 = vmatpush1.msra.mxu0 %v4086
  %4129 = vmatprep.subr.mxu0 0.0
  %4130 = vmatpush1.msra.mxu0 %v4085
  %4131 = vmatprep.subr.mxu0 0.0
  %4132 = vmatpush2.msra.mxu0 0.0
  %4133 = vmatprep.subr.mxu0 0.0
  %4134 = vmatpush2.msra.mxu0 0.0
  %4135 = vmatprep.subr.mxu0 0.0
  %4136 = vmatpush2.msra.mxu0 0.0
  %4137 = vmatprep.subr.mxu0 0.0
  %4138 = vmatpush2.msra.mxu0 0.0
  %4139 = vmatprep.subr.mxu0 0.0
  %4140 = vmatpush2.msra.mxu0 0.0
  %4141 = vmatprep.subr.mxu0 0.0
  %4142 = vmatpush2.msra.mxu0 0.0
  %4143 = vmatprep.subr.mxu0 0.0
  %4144 = vmatpush2.msra.mxu0 0.0
  %4145 = vmatprep.subr.mxu0 0.0
  %4146 = vmatpush2.msra.mxu0 0.0
  %4147 = vmatprep.subr.mxu0 0.0
  %4148 = vmatpush2.msra.mxu0 0.0
  %4149 = vmatprep.subr.mxu0 0.0
  %4150 = vmatpush2.msra.mxu0 0.0
  %4151 = vmatprep.subr.mxu0 0.0
  %4152 = vmatpush2.msra.mxu0 0.0
  %4153 = vmatprep.subr.mxu0 0.0
  %4154 = vmatpush2.msra.mxu0 0.0
  %4155 = vmatprep.subr.mxu0 0.0
  %4156 = vmatpush2.msra.mxu0 0.0
  %4157 = vmatprep.subr.mxu0 0.0
  %4158 = vmatpush2.msra.mxu0 0.0
  %4159 = vmatprep.subr.mxu0 0.0
  %4160 = vmatpush2.msra.mxu0 0.0
  %4161 = vmatprep.subr.mxu0 0.0
  %4162 = vmatpush2.msra.mxu0 0.0
  %4163 = vmatprep.mubr.f32.mxu0 0.0
  %4164 = vmatmul.mubr.f32.gmra.mxu0 %v4094
  %v4165 = vpop.f32.mrf.mxu0
  %v4166 = vadd.f32 0.0, %v4165
  %v4167 = vpop.f32.mrf.mxu0
  %4168 = vmatprep.mubr.f32.mxu0 0.0
  %4169 = vmatmul.mubr.f32.gmra.mxu0 %v4097
  %v4170 = vpop.f32.mrf.mxu0
  %v4171 = vadd.f32 0.0, %v4170
  %v4172 = vpop.f32.mrf.mxu0
  %4173 = vdwg.mxu0
  %s4174 = scalar_lea.vmem %s22, 88
  %v4175 = vld [vmem:[%s4174] sm:$0xff]
  %v4176 = vld [vmem:[%s4174 + $0x8] sm:$0xff]
  %v4177 = vld [vmem:[%s4174 + $0x10] sm:$0xff]
  %v4178 = vld [vmem:[%s4174 + $0x18] sm:$0xff]
  %v4179 = vld [vmem:[%s4174 + $0x20] sm:$0xff]
  %v4180 = vld [vmem:[%s4174 + $0x28] sm:$0xff]
  %v4181 = vld [vmem:[%s4174 + $0x30] sm:$0xff]
  %v4182 = vld [vmem:[%s4174 + $0x38] sm:$0xff]
  %v4183 = vld [vmem:[%s4174 + $0x40] sm:$0xff]
  %v4184 = vld [vmem:[%s4174 + $0x48] sm:$0xff]
  %v4185 = vld [vmem:[%s4174 + $0x50] sm:$0xf]
  %s4186 = scalar_lea.vmem %s23, 56
  %v4187 = vld [vmem:[%s4186] sm:$0xff]
  %v4188 = vld [vmem:[%s4186 + $0x8] sm:$0xff]
  %v4189 = vld [vmem:[%s4186 + $0x10] sm:$0xff]
  %v4190 = vld [vmem:[%s4186 + $0x18] sm:$0xff]
  %v4191 = vld [vmem:[%s4186 + $0x20] sm:$0xff]
  %v4192 = vld [vmem:[%s4186 + $0x28] sm:$0xff]
  %v4193 = vld [vmem:[%s4186 + $0x30] sm:$0xff]
  %4194 = vmatprep.subr.mxu0 0.0
  %4195 = vmatpush1.msra.mxu0 0.0
  %4196 = vmatprep.subr.mxu0 0.0
  %4197 = vmatpush1.msra.mxu0 0.0
  %4198 = vmatprep.subr.mxu0 0.0
  %4199 = vmatpush1.msra.mxu0 0.0
  %4200 = vmatprep.subr.mxu0 0.0
  %4201 = vmatpush1.msra.mxu0 0.0
  %4202 = vmatprep.subr.mxu0 0.0
  %4203 = vmatpush1.msra.mxu0 0.0
  %4204 = vmatprep.subr.mxu0 0.0
  %4205 = vmatpush1.msra.mxu0 0.0
  %4206 = vmatprep.subr.mxu0 0.0
  %4207 = vmatpush1.msra.mxu0 0.0
  %4208 = vmatprep.subr.mxu0 0.0
  %4209 = vmatpush1.msra.mxu0 0.0
  %4210 = vmatprep.subr.mxu0 0.0
  %4211 = vmatpush1.msra.mxu0 0.0
  %4212 = vmatprep.subr.mxu0 0.0
  %4213 = vmatpush1.msra.mxu0 %v4193
  %4214 = vmatprep.subr.mxu0 0.0
  %4215 = vmatpush1.msra.mxu0 %v4192
  %4216 = vmatprep.subr.mxu0 0.0
  %4217 = vmatpush1.msra.mxu0 %v4191
  %4218 = vmatprep.subr.mxu0 0.0
  %4219 = vmatpush1.msra.mxu0 %v4190
  %4220 = vmatprep.subr.mxu0 0.0
  %4221 = vmatpush1.msra.mxu0 %v4189
  %4222 = vmatprep.subr.mxu0 0.0
  %4223 = vmatpush1.msra.mxu0 %v4188
  %4224 = vmatprep.subr.mxu0 0.0
  %4225 = vmatpush1.msra.mxu0 %v4187
  %4226 = vmatprep.subr.mxu0 0.0
  %4227 = vmatpush2.msra.mxu0 0.0
  %4228 = vmatprep.subr.mxu0 0.0
  %4229 = vmatpush2.msra.mxu0 0.0
  %4230 = vmatprep.subr.mxu0 0.0
  %4231 = vmatpush2.msra.mxu0 0.0
  %4232 = vmatprep.subr.mxu0 0.0
  %4233 = vmatpush2.msra.mxu0 0.0
  %4234 = vmatprep.subr.mxu0 0.0
  %4235 = vmatpush2.msra.mxu0 0.0
  %4236 = vmatprep.subr.mxu0 0.0
  %4237 = vmatpush2.msra.mxu0 0.0
  %4238 = vmatprep.subr.mxu0 0.0
  %4239 = vmatpush2.msra.mxu0 0.0
  %4240 = vmatprep.subr.mxu0 0.0
  %4241 = vmatpush2.msra.mxu0 0.0
  %4242 = vmatprep.subr.mxu0 0.0
  %4243 = vmatpush2.msra.mxu0 0.0
  %4244 = vmatprep.subr.mxu0 0.0
  %4245 = vmatpush2.msra.mxu0 0.0
  %4246 = vmatprep.subr.mxu0 0.0
  %4247 = vmatpush2.msra.mxu0 0.0
  %4248 = vmatprep.subr.mxu0 0.0
  %4249 = vmatpush2.msra.mxu0 0.0
  %4250 = vmatprep.subr.mxu0 0.0
  %4251 = vmatpush2.msra.mxu0 0.0
  %4252 = vmatprep.subr.mxu0 0.0
  %4253 = vmatpush2.msra.mxu0 0.0
  %4254 = vmatprep.subr.mxu0 0.0
  %4255 = vmatpush2.msra.mxu0 0.0
  %4256 = vmatprep.subr.mxu0 0.0
  %4257 = vmatpush2.msra.mxu0 0.0
  %4258 = vmatprep.mubr.f32.mxu0 0.0
  %4259 = vmatmul.mubr.f32.gmra.mxu0 %v4094
  %v4260 = vpop.f32.mrf.mxu0
  %v4261 = vadd.f32 0.0, %v4260
  %v4262 = vpop.f32.mrf.mxu0
  %4263 = vmatprep.mubr.f32.mxu0 0.0
  %4264 = vmatmul.mubr.f32.gmra.mxu0 %v4097
  %v4265 = vpop.f32.mrf.mxu0
  %v4266 = vadd.f32 0.0, %v4265
  %v4267 = vpop.f32.mrf.mxu0
  %4268 = vdwg.mxu0
  %vm4269 = vcmask 113664
  %v4271 = vsel %vm4269, %v4175, 0
  %v4274 = vsel %vm4269, %v4176, 0
  %v4277 = vsel %vm4269, %v4177, 0
  %v4280 = vsel %vm4269, %v4178, 0
  %v4283 = vsel %vm4269, %v4179, 0
  %v4286 = vsel %vm4269, %v4180, 0
  %v4289 = vsel %vm4269, %v4181, 0
  %v4292 = vsel %vm4269, %v4182, 0
  %v4295 = vsel %vm4269, %v4183, 0
  %v4298 = vsel %vm4269, %v4184, 0
  %v4301 = vsel %vm4269, %v4185, 0
  %v4304 = vsel %vm3734, %v4266, 0
  %4306 = vmatprep.subr.mxu0 0.0
  %4307 = vmatpush1.msra.mxu0 0.0
  %4308 = vmatprep.subr.mxu0 0.0
  %4309 = vmatpush1.msra.mxu0 0.0
  %4310 = vmatprep.subr.mxu0 0.0
  %4311 = vmatpush1.msra.mxu0 0.0
  %4312 = vmatprep.subr.mxu0 0.0
  %4313 = vmatpush1.msra.mxu0 0.0
  %4314 = vmatprep.subr.mxu0 0.0
  %4315 = vmatpush1.msra.mxu0 0.0
  %4316 = vmatprep.subr.mxu0 0.0
  %4317 = vmatpush1.msra.mxu0 0.0
  %4318 = vmatprep.subr.mxu0 0.0
  %4319 = vmatpush1.msra.mxu0 0.0
  %4320 = vmatprep.subr.mxu0 0.0
  %4321 = vmatpush1.msra.mxu0 0.0
  %4322 = vmatprep.subr.mxu0 0.0
  %4323 = vmatpush1.msra.mxu0 0.0
  %4324 = vmatprep.subr.mxu0 0.0
  %4325 = vmatpush1.msra.mxu0 0.0
  %4326 = vmatprep.subr.mxu0 0.0
  %4327 = vmatpush1.msra.mxu0 0.0
  %4328 = vmatprep.subr.mxu0 0.0
  %4329 = vmatpush1.msra.mxu0 0.0
  %4330 = vmatprep.subr.mxu0 0.0
  %4331 = vmatpush1.msra.mxu0 0.0
  %4332 = vmatprep.subr.mxu0 0.0
  %4333 = vmatpush1.msra.mxu0 0.0
  %4334 = vmatprep.subr.mxu0 0.0
  %4335 = vmatpush1.msra.mxu0 %v4304
  %4336 = vmatprep.subr.mxu0 0.0
  %4337 = vmatpush1.msra.mxu0 %v4261
  %4338 = vmatprep.subr.mxu0 0.0
  %4339 = vmatpush2.msra.mxu0 0.0
  %4340 = vmatprep.subr.mxu0 0.0
  %4341 = vmatpush2.msra.mxu0 0.0
  %4342 = vmatprep.subr.mxu0 0.0
  %4343 = vmatpush2.msra.mxu0 0.0
  %4344 = vmatprep.subr.mxu0 0.0
  %4345 = vmatpush2.msra.mxu0 0.0
  %4346 = vmatprep.subr.mxu0 0.0
  %4347 = vmatpush2.msra.mxu0 0.0
  %4348 = vmatprep.subr.mxu0 0.0
  %4349 = vmatpush2.msra.mxu0 0.0
  %4350 = vmatprep.subr.mxu0 0.0
  %4351 = vmatpush2.msra.mxu0 0.0
  %4352 = vmatprep.subr.mxu0 0.0
  %4353 = vmatpush2.msra.mxu0 0.0
  %4354 = vmatprep.subr.mxu0 0.0
  %4355 = vmatpush2.msra.mxu0 0.0
  %4356 = vmatprep.subr.mxu0 0.0
  %4357 = vmatpush2.msra.mxu0 0.0
  %4358 = vmatprep.subr.mxu0 0.0
  %4359 = vmatpush2.msra.mxu0 0.0
  %4360 = vmatprep.subr.mxu0 0.0
  %4361 = vmatpush2.msra.mxu0 0.0
  %4362 = vmatprep.subr.mxu0 0.0
  %4363 = vmatpush2.msra.mxu0 0.0
  %4364 = vmatprep.subr.mxu0 0.0
  %4365 = vmatpush2.msra.mxu0 0.0
  %4366 = vmatprep.subr.mxu0 0.0
  %4367 = vmatpush2.msra.mxu0 0.0
  %4368 = vmatprep.subr.mxu0 0.0
  %4369 = vmatpush2.msra.mxu0 0.0
  %4370 = vmatprep.mubr.f32.mxu0 0.0
  %4371 = vmatmul.mubr.f32.gmra.mxu0 %v4271
  %v4372 = vpop.f32.mrf.mxu0
  %v4373 = vadd.f32 0.0, %v4372
  %v4374 = vpop.f32.mrf.mxu0
  %4375 = vmatprep.mubr.f32.mxu0 0.0
  %4376 = vmatmul.mubr.f32.gmra.mxu0 %v4274
  %v4377 = vpop.f32.mrf.mxu0
  %v4378 = vadd.f32 0.0, %v4377
  %v4379 = vpop.f32.mrf.mxu0
  %4380 = vmatprep.mubr.f32.mxu0 0.0
  %4381 = vmatmul.mubr.f32.gmra.mxu0 %v4277
  %v4382 = vpop.f32.mrf.mxu0
  %v4383 = vadd.f32 0.0, %v4382
  %v4384 = vpop.f32.mrf.mxu0
  %4385 = vmatprep.mubr.f32.mxu0 0.0
  %4386 = vmatmul.mubr.f32.gmra.mxu0 %v4280
  %v4387 = vpop.f32.mrf.mxu0
  %v4388 = vadd.f32 0.0, %v4387
  %v4389 = vpop.f32.mrf.mxu0
  %4390 = vmatprep.mubr.f32.mxu0 0.0
  %4391 = vmatmul.mubr.f32.gmra.mxu0 %v4283
  %v4392 = vpop.f32.mrf.mxu0
  %v4393 = vadd.f32 0.0, %v4392
  %v4394 = vpop.f32.mrf.mxu0
  %4395 = vmatprep.mubr.f32.mxu0 0.0
  %4396 = vmatmul.mubr.f32.gmra.mxu0 %v4286
  %v4397 = vpop.f32.mrf.mxu0
  %v4398 = vadd.f32 0.0, %v4397
  %v4399 = vpop.f32.mrf.mxu0
  %4400 = vmatprep.mubr.f32.mxu0 0.0
  %4401 = vmatmul.mubr.f32.gmra.mxu0 %v4289
  %v4402 = vpop.f32.mrf.mxu0
  %v4403 = vadd.f32 0.0, %v4402
  %v4404 = vpop.f32.mrf.mxu0
  %4405 = vmatprep.mubr.f32.mxu0 0.0
  %4406 = vmatmul.mubr.f32.gmra.mxu0 %v4292
  %v4407 = vpop.f32.mrf.mxu0
  %v4408 = vadd.f32 0.0, %v4407
  %v4409 = vpop.f32.mrf.mxu0
  %4410 = vmatprep.mubr.f32.mxu0 0.0
  %4411 = vmatmul.mubr.f32.gmra.mxu0 %v4295
  %v4412 = vpop.f32.mrf.mxu0
  %v4413 = vadd.f32 0.0, %v4412
  %v4414 = vpop.f32.mrf.mxu0
  %4415 = vmatprep.mubr.f32.mxu0 0.0
  %4416 = vmatmul.mubr.f32.gmra.mxu0 %v4298
  %v4417 = vpop.f32.mrf.mxu0
  %v4418 = vadd.f32 0.0, %v4417
  %v4419 = vpop.f32.mrf.mxu0
  %4420 = vmatprep.mubr.f32.mxu0 0.0
  %4421 = vmatmul.mubr.f32.gmra.mxu0 %v4301
  %v4422 = vpop.f32.mrf.mxu0
  %v4423 = vadd.f32 0.0, %v4422
  %v4424 = vpop.f32.mrf.mxu0
  %4425 = vdwg.mxu0
  %v4427 = vsel %vm4269, %v4074, 0
  %v4430 = vsel %vm4269, %v4075, 0
  %v4433 = vsel %vm4269, %v4076, 0
  %v4436 = vsel %vm4269, %v4077, 0
  %v4439 = vsel %vm4269, %v4078, 0
  %v4442 = vsel %vm4269, %v4079, 0
  %v4445 = vsel %vm4269, %v4080, 0
  %v4448 = vsel %vm4269, %v4081, 0
  %v4451 = vsel %vm4269, %v4082, 0
  %v4454 = vsel %vm4269, %v4083, 0
  %v4457 = vsel %vm4269, %v4084, 0
  %v4460 = vsel %vm3734, %v4171, 0
  %4462 = vmatprep.subr.mxu0 0.0
  %4463 = vmatpush1.msra.mxu0 0.0
  %4464 = vmatprep.subr.mxu0 0.0
  %4465 = vmatpush1.msra.mxu0 0.0
  %4466 = vmatprep.subr.mxu0 0.0
  %4467 = vmatpush1.msra.mxu0 0.0
  %4468 = vmatprep.subr.mxu0 0.0
  %4469 = vmatpush1.msra.mxu0 0.0
  %4470 = vmatprep.subr.mxu0 0.0
  %4471 = vmatpush1.msra.mxu0 0.0
  %4472 = vmatprep.subr.mxu0 0.0
  %4473 = vmatpush1.msra.mxu0 0.0
  %4474 = vmatprep.subr.mxu0 0.0
  %4475 = vmatpush1.msra.mxu0 0.0
  %4476 = vmatprep.subr.mxu0 0.0
  %4477 = vmatpush1.msra.mxu0 0.0
  %4478 = vmatprep.subr.mxu0 0.0
  %4479 = vmatpush1.msra.mxu0 0.0
  %4480 = vmatprep.subr.mxu0 0.0
  %4481 = vmatpush1.msra.mxu0 0.0
  %4482 = vmatprep.subr.mxu0 0.0
  %4483 = vmatpush1.msra.mxu0 0.0
  %4484 = vmatprep.subr.mxu0 0.0
  %4485 = vmatpush1.msra.mxu0 0.0
  %4486 = vmatprep.subr.mxu0 0.0
  %4487 = vmatpush1.msra.mxu0 0.0
  %4488 = vmatprep.subr.mxu0 0.0
  %4489 = vmatpush1.msra.mxu0 0.0
  %4490 = vmatprep.subr.mxu0 0.0
  %4491 = vmatpush1.msra.mxu0 %v4460
  %4492 = vmatprep.subr.mxu0 0.0
  %4493 = vmatpush1.msra.mxu0 %v4166
  %4494 = vmatprep.subr.mxu0 0.0
  %4495 = vmatpush2.msra.mxu0 0.0
  %4496 = vmatprep.subr.mxu0 0.0
  %4497 = vmatpush2.msra.mxu0 0.0
  %4498 = vmatprep.subr.mxu0 0.0
  %4499 = vmatpush2.msra.mxu0 0.0
  %4500 = vmatprep.subr.mxu0 0.0
  %4501 = vmatpush2.msra.mxu0 0.0
  %4502 = vmatprep.subr.mxu0 0.0
  %4503 = vmatpush2.msra.mxu0 0.0
  %4504 = vmatprep.subr.mxu0 0.0
  %4505 = vmatpush2.msra.mxu0 0.0
  %4506 = vmatprep.subr.mxu0 0.0
  %4507 = vmatpush2.msra.mxu0 0.0
  %4508 = vmatprep.subr.mxu0 0.0
  %4509 = vmatpush2.msra.mxu0 0.0
  %4510 = vmatprep.subr.mxu0 0.0
  %4511 = vmatpush2.msra.mxu0 0.0
  %4512 = vmatprep.subr.mxu0 0.0
  %4513 = vmatpush2.msra.mxu0 0.0
  %4514 = vmatprep.subr.mxu0 0.0
  %4515 = vmatpush2.msra.mxu0 0.0
  %4516 = vmatprep.subr.mxu0 0.0
  %4517 = vmatpush2.msra.mxu0 0.0
  %4518 = vmatprep.subr.mxu0 0.0
  %4519 = vmatpush2.msra.mxu0 0.0
  %4520 = vmatprep.subr.mxu0 0.0
  %4521 = vmatpush2.msra.mxu0 0.0
  %4522 = vmatprep.subr.mxu0 0.0
  %4523 = vmatpush2.msra.mxu0 0.0
  %4524 = vmatprep.subr.mxu0 0.0
  %4525 = vmatpush2.msra.mxu0 0.0
  %4526 = vmatprep.mubr.f32.mxu0 0.0
  %4527 = vmatmul.mubr.f32.gmra.mxu0 %v4427
  %v4528 = vpop.f32.mrf.mxu0
  %v4529 = vadd.f32 %v4373, %v4528
  %v4530 = vpop.f32.mrf.mxu0
  %4531 = vmatprep.mubr.f32.mxu0 0.0
  %4532 = vmatmul.mubr.f32.gmra.mxu0 %v4430
  %v4533 = vpop.f32.mrf.mxu0
  %v4534 = vadd.f32 %v4378, %v4533
  %v4535 = vpop.f32.mrf.mxu0
  %4536 = vmatprep.mubr.f32.mxu0 0.0
  %4537 = vmatmul.mubr.f32.gmra.mxu0 %v4433
  %v4538 = vpop.f32.mrf.mxu0
  %v4539 = vadd.f32 %v4383, %v4538
  %v4540 = vpop.f32.mrf.mxu0
  %4541 = vmatprep.mubr.f32.mxu0 0.0
  %4542 = vmatmul.mubr.f32.gmra.mxu0 %v4436
  %v4543 = vpop.f32.mrf.mxu0
  %v4544 = vadd.f32 %v4388, %v4543
  %v4545 = vpop.f32.mrf.mxu0
  %4546 = vmatprep.mubr.f32.mxu0 0.0
  %4547 = vmatmul.mubr.f32.gmra.mxu0 %v4439
  %v4548 = vpop.f32.mrf.mxu0
  %v4549 = vadd.f32 %v4393, %v4548
  %v4550 = vpop.f32.mrf.mxu0
  %4551 = vmatprep.mubr.f32.mxu0 0.0
  %4552 = vmatmul.mubr.f32.gmra.mxu0 %v4442
  %v4553 = vpop.f32.mrf.mxu0
  %v4554 = vadd.f32 %v4398, %v4553
  %v4555 = vpop.f32.mrf.mxu0
  %4556 = vmatprep.mubr.f32.mxu0 0.0
  %4557 = vmatmul.mubr.f32.gmra.mxu0 %v4445
  %v4558 = vpop.f32.mrf.mxu0
  %v4559 = vadd.f32 %v4403, %v4558
  %v4560 = vpop.f32.mrf.mxu0
  %4561 = vmatprep.mubr.f32.mxu0 0.0
  %4562 = vmatmul.mubr.f32.gmra.mxu0 %v4448
  %v4563 = vpop.f32.mrf.mxu0
  %v4564 = vadd.f32 %v4408, %v4563
  %v4565 = vpop.f32.mrf.mxu0
  %4566 = vmatprep.mubr.f32.mxu0 0.0
  %4567 = vmatmul.mubr.f32.gmra.mxu0 %v4451
  %v4568 = vpop.f32.mrf.mxu0
  %v4569 = vadd.f32 %v4413, %v4568
  %v4570 = vpop.f32.mrf.mxu0
  %4571 = vmatprep.mubr.f32.mxu0 0.0
  %4572 = vmatmul.mubr.f32.gmra.mxu0 %v4454
  %v4573 = vpop.f32.mrf.mxu0
  %v4574 = vadd.f32 %v4418, %v4573
  %v4575 = vpop.f32.mrf.mxu0
  %4576 = vmatprep.mubr.f32.mxu0 0.0
  %4577 = vmatmul.mubr.f32.gmra.mxu0 %v4457
  %v4578 = vpop.f32.mrf.mxu0
  %v4579 = vadd.f32 %v4423, %v4578
  %v4580 = vpop.f32.mrf.mxu0
  %4581 = vdwg.mxu0
  %s4582 = scalar_lea.vmem %s22, 176
  %v4583 = vld [vmem:[%s4582] sm:$0xff]
  %v4584 = vld [vmem:[%s4582 + $0x8] sm:$0xff]
  %v4585 = vld [vmem:[%s4582 + $0x10] sm:$0xff]
  %v4586 = vld [vmem:[%s4582 + $0x18] sm:$0xff]
  %v4587 = vld [vmem:[%s4582 + $0x20] sm:$0xff]
  %v4588 = vld [vmem:[%s4582 + $0x28] sm:$0xff]
  %v4589 = vld [vmem:[%s4582 + $0x30] sm:$0xff]
  %v4590 = vld [vmem:[%s4582 + $0x38] sm:$0xff]
  %v4591 = vld [vmem:[%s4582 + $0x40] sm:$0xff]
  %v4592 = vld [vmem:[%s4582 + $0x48] sm:$0xff]
  %v4593 = vld [vmem:[%s4582 + $0x50] sm:$0xf]
  %s4594 = scalar_lea.vmem %s23, 112
  %v4595 = vld [vmem:[%s4594] sm:$0xff]
  %v4596 = vld [vmem:[%s4594 + $0x8] sm:$0xff]
  %v4597 = vld [vmem:[%s4594 + $0x10] sm:$0xff]
  %v4598 = vld [vmem:[%s4594 + $0x18] sm:$0xff]
  %v4599 = vld [vmem:[%s4594 + $0x20] sm:$0xff]
  %v4600 = vld [vmem:[%s4594 + $0x28] sm:$0xff]
  %v4601 = vld [vmem:[%s4594 + $0x30] sm:$0xff]
  %4602 = vmatprep.subr.mxu0 0.0
  %4603 = vmatpush1.msra.mxu0 0.0
  %4604 = vmatprep.subr.mxu0 0.0
  %4605 = vmatpush1.msra.mxu0 0.0
  %4606 = vmatprep.subr.mxu0 0.0
  %4607 = vmatpush1.msra.mxu0 0.0
  %4608 = vmatprep.subr.mxu0 0.0
  %4609 = vmatpush1.msra.mxu0 0.0
  %4610 = vmatprep.subr.mxu0 0.0
  %4611 = vmatpush1.msra.mxu0 0.0
  %4612 = vmatprep.subr.mxu0 0.0
  %4613 = vmatpush1.msra.mxu0 0.0
  %4614 = vmatprep.subr.mxu0 0.0
  %4615 = vmatpush1.msra.mxu0 0.0
  %4616 = vmatprep.subr.mxu0 0.0
  %4617 = vmatpush1.msra.mxu0 0.0
  %4618 = vmatprep.subr.mxu0 0.0
  %4619 = vmatpush1.msra.mxu0 0.0
  %4620 = vmatprep.subr.mxu0 0.0
  %4621 = vmatpush1.msra.mxu0 %v4601
  %4622 = vmatprep.subr.mxu0 0.0
  %4623 = vmatpush1.msra.mxu0 %v4600
  %4624 = vmatprep.subr.mxu0 0.0
  %4625 = vmatpush1.msra.mxu0 %v4599
  %4626 = vmatprep.subr.mxu0 0.0
  %4627 = vmatpush1.msra.mxu0 %v4598
  %4628 = vmatprep.subr.mxu0 0.0
  %4629 = vmatpush1.msra.mxu0 %v4597
  %4630 = vmatprep.subr.mxu0 0.0
  %4631 = vmatpush1.msra.mxu0 %v4596
  %4632 = vmatprep.subr.mxu0 0.0
  %4633 = vmatpush1.msra.mxu0 %v4595
  %4634 = vmatprep.subr.mxu0 0.0
  %4635 = vmatpush2.msra.mxu0 0.0
  %4636 = vmatprep.subr.mxu0 0.0
  %4637 = vmatpush2.msra.mxu0 0.0
  %4638 = vmatprep.subr.mxu0 0.0
  %4639 = vmatpush2.msra.mxu0 0.0
  %4640 = vmatprep.subr.mxu0 0.0
  %4641 = vmatpush2.msra.mxu0 0.0
  %4642 = vmatprep.subr.mxu0 0.0
  %4643 = vmatpush2.msra.mxu0 0.0
  %4644 = vmatprep.subr.mxu0 0.0
  %4645 = vmatpush2.msra.mxu0 0.0
  %4646 = vmatprep.subr.mxu0 0.0
  %4647 = vmatpush2.msra.mxu0 0.0
  %4648 = vmatprep.subr.mxu0 0.0
  %4649 = vmatpush2.msra.mxu0 0.0
  %4650 = vmatprep.subr.mxu0 0.0
  %4651 = vmatpush2.msra.mxu0 0.0
  %4652 = vmatprep.subr.mxu0 0.0
  %4653 = vmatpush2.msra.mxu0 0.0
  %4654 = vmatprep.subr.mxu0 0.0
  %4655 = vmatpush2.msra.mxu0 0.0
  %4656 = vmatprep.subr.mxu0 0.0
  %4657 = vmatpush2.msra.mxu0 0.0
  %4658 = vmatprep.subr.mxu0 0.0
  %4659 = vmatpush2.msra.mxu0 0.0
  %4660 = vmatprep.subr.mxu0 0.0
  %4661 = vmatpush2.msra.mxu0 0.0
  %4662 = vmatprep.subr.mxu0 0.0
  %4663 = vmatpush2.msra.mxu0 0.0
  %4664 = vmatprep.subr.mxu0 0.0
  %4665 = vmatpush2.msra.mxu0 0.0
  %4666 = vmatprep.mubr.f32.mxu0 0.0
  %4667 = vmatmul.mubr.f32.gmra.mxu0 %v4094
  %v4668 = vpop.f32.mrf.mxu0
  %v4669 = vadd.f32 0.0, %v4668
  %v4670 = vpop.f32.mrf.mxu0
  %4671 = vmatprep.mubr.f32.mxu0 0.0
  %4672 = vmatmul.mubr.f32.gmra.mxu0 %v4097
  %v4673 = vpop.f32.mrf.mxu0
  %v4674 = vadd.f32 0.0, %v4673
  %v4675 = vpop.f32.mrf.mxu0
  %4676 = vdwg.mxu0
  %v4678 = vsel %vm4269, %v4583, 0
  %v4681 = vsel %vm4269, %v4584, 0
  %v4684 = vsel %vm4269, %v4585, 0
  %v4687 = vsel %vm4269, %v4586, 0
  %v4690 = vsel %vm4269, %v4587, 0
  %v4693 = vsel %vm4269, %v4588, 0
  %v4696 = vsel %vm4269, %v4589, 0
  %v4699 = vsel %vm4269, %v4590, 0
  %v4702 = vsel %vm4269, %v4591, 0
  %v4705 = vsel %vm4269, %v4592, 0
  %v4708 = vsel %vm4269, %v4593, 0
  %v4711 = vsel %vm3734, %v4674, 0
  %4713 = vmatprep.subr.mxu0 0.0
  %4714 = vmatpush1.msra.mxu0 0.0
  %4715 = vmatprep.subr.mxu0 0.0
  %4716 = vmatpush1.msra.mxu0 0.0
  %4717 = vmatprep.subr.mxu0 0.0
  %4718 = vmatpush1.msra.mxu0 0.0
  %4719 = vmatprep.subr.mxu0 0.0
  %4720 = vmatpush1.msra.mxu0 0.0
  %4721 = vmatprep.subr.mxu0 0.0
  %4722 = vmatpush1.msra.mxu0 0.0
  %4723 = vmatprep.subr.mxu0 0.0
  %4724 = vmatpush1.msra.mxu0 0.0
  %4725 = vmatprep.subr.mxu0 0.0
  %4726 = vmatpush1.msra.mxu0 0.0
  %4727 = vmatprep.subr.mxu0 0.0
  %4728 = vmatpush1.msra.mxu0 0.0
  %4729 = vmatprep.subr.mxu0 0.0
  %4730 = vmatpush1.msra.mxu0 0.0
  %4731 = vmatprep.subr.mxu0 0.0
  %4732 = vmatpush1.msra.mxu0 0.0
  %4733 = vmatprep.subr.mxu0 0.0
  %4734 = vmatpush1.msra.mxu0 0.0
  %4735 = vmatprep.subr.mxu0 0.0
  %4736 = vmatpush1.msra.mxu0 0.0
  %4737 = vmatprep.subr.mxu0 0.0
  %4738 = vmatpush1.msra.mxu0 0.0
  %4739 = vmatprep.subr.mxu0 0.0
  %4740 = vmatpush1.msra.mxu0 0.0
  %4741 = vmatprep.subr.mxu0 0.0
  %4742 = vmatpush1.msra.mxu0 %v4711
  %4743 = vmatprep.subr.mxu0 0.0
  %4744 = vmatpush1.msra.mxu0 %v4669
  %4745 = vmatprep.subr.mxu0 0.0
  %4746 = vmatpush2.msra.mxu0 0.0
  %4747 = vmatprep.subr.mxu0 0.0
  %4748 = vmatpush2.msra.mxu0 0.0
  %4749 = vmatprep.subr.mxu0 0.0
  %4750 = vmatpush2.msra.mxu0 0.0
  %4751 = vmatprep.subr.mxu0 0.0
  %4752 = vmatpush2.msra.mxu0 0.0
  %4753 = vmatprep.subr.mxu0 0.0
  %4754 = vmatpush2.msra.mxu0 0.0
  %4755 = vmatprep.subr.mxu0 0.0
  %4756 = vmatpush2.msra.mxu0 0.0
  %4757 = vmatprep.subr.mxu0 0.0
  %4758 = vmatpush2.msra.mxu0 0.0
  %4759 = vmatprep.subr.mxu0 0.0
  %4760 = vmatpush2.msra.mxu0 0.0
  %4761 = vmatprep.subr.mxu0 0.0
  %4762 = vmatpush2.msra.mxu0 0.0
  %4763 = vmatprep.subr.mxu0 0.0
  %4764 = vmatpush2.msra.mxu0 0.0
  %4765 = vmatprep.subr.mxu0 0.0
  %4766 = vmatpush2.msra.mxu0 0.0
  %4767 = vmatprep.subr.mxu0 0.0
  %4768 = vmatpush2.msra.mxu0 0.0
  %4769 = vmatprep.subr.mxu0 0.0
  %4770 = vmatpush2.msra.mxu0 0.0
  %4771 = vmatprep.subr.mxu0 0.0
  %4772 = vmatpush2.msra.mxu0 0.0
  %4773 = vmatprep.subr.mxu0 0.0
  %4774 = vmatpush2.msra.mxu0 0.0
  %4775 = vmatprep.subr.mxu0 0.0
  %4776 = vmatpush2.msra.mxu0 0.0
  %4777 = vmatprep.mubr.f32.mxu0 0.0
  %4778 = vmatmul.mubr.f32.gmra.mxu0 %v4678
  %v4779 = vpop.f32.mrf.mxu0
  %v4780 = vadd.f32 0.0, %v4779
  %v4781 = vpop.f32.mrf.mxu0
  %4782 = vmatprep.mubr.f32.mxu0 0.0
  %4783 = vmatmul.mubr.f32.gmra.mxu0 %v4681
  %v4784 = vpop.f32.mrf.mxu0
  %v4785 = vadd.f32 0.0, %v4784
  %v4786 = vpop.f32.mrf.mxu0
  %4787 = vmatprep.mubr.f32.mxu0 0.0
  %4788 = vmatmul.mubr.f32.gmra.mxu0 %v4684
  %v4789 = vpop.f32.mrf.mxu0
  %v4790 = vadd.f32 0.0, %v4789
  %v4791 = vpop.f32.mrf.mxu0
  %4792 = vmatprep.mubr.f32.mxu0 0.0
  %4793 = vmatmul.mubr.f32.gmra.mxu0 %v4687
  %v4794 = vpop.f32.mrf.mxu0
  %v4795 = vadd.f32 0.0, %v4794
  %v4796 = vpop.f32.mrf.mxu0
  %4797 = vmatprep.mubr.f32.mxu0 0.0
  %4798 = vmatmul.mubr.f32.gmra.mxu0 %v4690
  %v4799 = vpop.f32.mrf.mxu0
  %v4800 = vadd.f32 0.0, %v4799
  %v4801 = vpop.f32.mrf.mxu0
  %4802 = vmatprep.mubr.f32.mxu0 0.0
  %4803 = vmatmul.mubr.f32.gmra.mxu0 %v4693
  %v4804 = vpop.f32.mrf.mxu0
  %v4805 = vadd.f32 0.0, %v4804
  %v4806 = vpop.f32.mrf.mxu0
  %4807 = vmatprep.mubr.f32.mxu0 0.0
  %4808 = vmatmul.mubr.f32.gmra.mxu0 %v4696
  %v4809 = vpop.f32.mrf.mxu0
  %v4810 = vadd.f32 0.0, %v4809
  %v4811 = vpop.f32.mrf.mxu0
  %4812 = vmatprep.mubr.f32.mxu0 0.0
  %4813 = vmatmul.mubr.f32.gmra.mxu0 %v4699
  %v4814 = vpop.f32.mrf.mxu0
  %v4815 = vadd.f32 0.0, %v4814
  %v4816 = vpop.f32.mrf.mxu0
  %4817 = vmatprep.mubr.f32.mxu0 0.0
  %4818 = vmatmul.mubr.f32.gmra.mxu0 %v4702
  %v4819 = vpop.f32.mrf.mxu0
  %v4820 = vadd.f32 0.0, %v4819
  %v4821 = vpop.f32.mrf.mxu0
  %4822 = vmatprep.mubr.f32.mxu0 0.0
  %4823 = vmatmul.mubr.f32.gmra.mxu0 %v4705
  %v4824 = vpop.f32.mrf.mxu0
  %v4825 = vadd.f32 0.0, %v4824
  %v4826 = vpop.f32.mrf.mxu0
  %4827 = vmatprep.mubr.f32.mxu0 0.0
  %4828 = vmatmul.mubr.f32.gmra.mxu0 %v4708
  %v4829 = vpop.f32.mrf.mxu0
  %v4830 = vadd.f32 0.0, %v4829
  %v4831 = vpop.f32.mrf.mxu0
  %4832 = vdwg.mxu0
  %v4833 = vadd.f32 %v4529, %v4780
  %v4834 = vadd.f32 %v4534, %v4785
  %v4835 = vadd.f32 %v4539, %v4790
  %v4836 = vadd.f32 %v4544, %v4795
  %v4837 = vadd.f32 %v4549, %v4800
  %v4838 = vadd.f32 %v4554, %v4805
  %v4839 = vadd.f32 %v4559, %v4810
  %v4840 = vadd.f32 %v4564, %v4815
  %v4841 = vadd.f32 %v4569, %v4820
  %v4842 = vadd.f32 %v4574, %v4825
  %v4843 = vadd.f32 %v4579, %v4830
  %s4844 = scalar_lea.vmem %s22, 264
  %v4845 = vld [vmem:[%s4844] sm:$0xff]
  %v4846 = vld [vmem:[%s4844 + $0x8] sm:$0xff]
  %v4847 = vld [vmem:[%s4844 + $0x10] sm:$0xff]
  %v4848 = vld [vmem:[%s4844 + $0x18] sm:$0xff]
  %v4849 = vld [vmem:[%s4844 + $0x20] sm:$0xff]
  %v4850 = vld [vmem:[%s4844 + $0x28] sm:$0xff]
  %v4851 = vld [vmem:[%s4844 + $0x30] sm:$0xff]
  %v4852 = vld [vmem:[%s4844 + $0x38] sm:$0xff]
  %v4853 = vld [vmem:[%s4844 + $0x40] sm:$0xff]
  %v4854 = vld [vmem:[%s4844 + $0x48] sm:$0xff]
  %v4855 = vld [vmem:[%s4844 + $0x50] sm:$0xf]
  %s4856 = scalar_lea.vmem %s23, 168
  %v4857 = vld [vmem:[%s4856] sm:$0xff]
  %v4858 = vld [vmem:[%s4856 + $0x8] sm:$0xff]
  %v4859 = vld [vmem:[%s4856 + $0x10] sm:$0xff]
  %v4860 = vld [vmem:[%s4856 + $0x18] sm:$0xff]
  %v4861 = vld [vmem:[%s4856 + $0x20] sm:$0xff]
  %v4862 = vld [vmem:[%s4856 + $0x28] sm:$0xff]
  %v4863 = vld [vmem:[%s4856 + $0x30] sm:$0xff]
  %4864 = vmatprep.subr.mxu0 0.0
  %4865 = vmatpush1.msra.mxu0 0.0
  %4866 = vmatprep.subr.mxu0 0.0
  %4867 = vmatpush1.msra.mxu0 0.0
  %4868 = vmatprep.subr.mxu0 0.0
  %4869 = vmatpush1.msra.mxu0 0.0
  %4870 = vmatprep.subr.mxu0 0.0
  %4871 = vmatpush1.msra.mxu0 0.0
  %4872 = vmatprep.subr.mxu0 0.0
  %4873 = vmatpush1.msra.mxu0 0.0
  %4874 = vmatprep.subr.mxu0 0.0
  %4875 = vmatpush1.msra.mxu0 0.0
  %4876 = vmatprep.subr.mxu0 0.0
  %4877 = vmatpush1.msra.mxu0 0.0
  %4878 = vmatprep.subr.mxu0 0.0
  %4879 = vmatpush1.msra.mxu0 0.0
  %4880 = vmatprep.subr.mxu0 0.0
  %4881 = vmatpush1.msra.mxu0 0.0
  %4882 = vmatprep.subr.mxu0 0.0
  %4883 = vmatpush1.msra.mxu0 %v4863
  %4884 = vmatprep.subr.mxu0 0.0
  %4885 = vmatpush1.msra.mxu0 %v4862
  %4886 = vmatprep.subr.mxu0 0.0
  %4887 = vmatpush1.msra.mxu0 %v4861
  %4888 = vmatprep.subr.mxu0 0.0
  %4889 = vmatpush1.msra.mxu0 %v4860
  %4890 = vmatprep.subr.mxu0 0.0
  %4891 = vmatpush1.msra.mxu0 %v4859
  %4892 = vmatprep.subr.mxu0 0.0
  %4893 = vmatpush1.msra.mxu0 %v4858
  %4894 = vmatprep.subr.mxu0 0.0
  %4895 = vmatpush1.msra.mxu0 %v4857
  %4896 = vmatprep.subr.mxu0 0.0
  %4897 = vmatpush2.msra.mxu0 0.0
  %4898 = vmatprep.subr.mxu0 0.0
  %4899 = vmatpush2.msra.mxu0 0.0
  %4900 = vmatprep.subr.mxu0 0.0
  %4901 = vmatpush2.msra.mxu0 0.0
  %4902 = vmatprep.subr.mxu0 0.0
  %4903 = vmatpush2.msra.mxu0 0.0
  %4904 = vmatprep.subr.mxu0 0.0
  %4905 = vmatpush2.msra.mxu0 0.0
  %4906 = vmatprep.subr.mxu0 0.0
  %4907 = vmatpush2.msra.mxu0 0.0
  %4908 = vmatprep.subr.mxu0 0.0
  %4909 = vmatpush2.msra.mxu0 0.0
  %4910 = vmatprep.subr.mxu0 0.0
  %4911 = vmatpush2.msra.mxu0 0.0
  %4912 = vmatprep.subr.mxu0 0.0
  %4913 = vmatpush2.msra.mxu0 0.0
  %4914 = vmatprep.subr.mxu0 0.0
  %4915 = vmatpush2.msra.mxu0 0.0
  %4916 = vmatprep.subr.mxu0 0.0
  %4917 = vmatpush2.msra.mxu0 0.0
  %4918 = vmatprep.subr.mxu0 0.0
  %4919 = vmatpush2.msra.mxu0 0.0
  %4920 = vmatprep.subr.mxu0 0.0
  %4921 = vmatpush2.msra.mxu0 0.0
  %4922 = vmatprep.subr.mxu0 0.0
  %4923 = vmatpush2.msra.mxu0 0.0
  %4924 = vmatprep.subr.mxu0 0.0
  %4925 = vmatpush2.msra.mxu0 0.0
  %4926 = vmatprep.subr.mxu0 0.0
  %4927 = vmatpush2.msra.mxu0 0.0
  %4928 = vmatprep.mubr.f32.mxu0 0.0
  %4929 = vmatmul.mubr.f32.gmra.mxu0 %v4094
  %v4930 = vpop.f32.mrf.mxu0
  %v4931 = vadd.f32 0.0, %v4930
  %v4932 = vpop.f32.mrf.mxu0
  %4933 = vmatprep.mubr.f32.mxu0 0.0
  %4934 = vmatmul.mubr.f32.gmra.mxu0 %v4097
  %v4935 = vpop.f32.mrf.mxu0
  %v4936 = vadd.f32 0.0, %v4935
  %v4937 = vpop.f32.mrf.mxu0
  %4938 = vdwg.mxu0
  %v4940 = vsel %vm4269, %v4845, 0
  %v4943 = vsel %vm4269, %v4846, 0
  %v4946 = vsel %vm4269, %v4847, 0
  %v4949 = vsel %vm4269, %v4848, 0
  %v4952 = vsel %vm4269, %v4849, 0
  %v4955 = vsel %vm4269, %v4850, 0
  %v4958 = vsel %vm4269, %v4851, 0
  %v4961 = vsel %vm4269, %v4852, 0
  %v4964 = vsel %vm4269, %v4853, 0
  %v4967 = vsel %vm4269, %v4854, 0
  %v4970 = vsel %vm4269, %v4855, 0
  %v4973 = vsel %vm3734, %v4936, 0
  %4975 = vmatprep.subr.mxu0 0.0
  %4976 = vmatpush1.msra.mxu0 0.0
  %4977 = vmatprep.subr.mxu0 0.0
  %4978 = vmatpush1.msra.mxu0 0.0
  %4979 = vmatprep.subr.mxu0 0.0
  %4980 = vmatpush1.msra.mxu0 0.0
  %4981 = vmatprep.subr.mxu0 0.0
  %4982 = vmatpush1.msra.mxu0 0.0
  %4983 = vmatprep.subr.mxu0 0.0
  %4984 = vmatpush1.msra.mxu0 0.0
  %4985 = vmatprep.subr.mxu0 0.0
  %4986 = vmatpush1.msra.mxu0 0.0
  %4987 = vmatprep.subr.mxu0 0.0
  %4988 = vmatpush1.msra.mxu0 0.0
  %4989 = vmatprep.subr.mxu0 0.0
  %4990 = vmatpush1.msra.mxu0 0.0
  %4991 = vmatprep.subr.mxu0 0.0
  %4992 = vmatpush1.msra.mxu0 0.0
  %4993 = vmatprep.subr.mxu0 0.0
  %4994 = vmatpush1.msra.mxu0 0.0
  %4995 = vmatprep.subr.mxu0 0.0
  %4996 = vmatpush1.msra.mxu0 0.0
  %4997 = vmatprep.subr.mxu0 0.0
  %4998 = vmatpush1.msra.mxu0 0.0
  %4999 = vmatprep.subr.mxu0 0.0
  %5000 = vmatpush1.msra.mxu0 0.0
  %5001 = vmatprep.subr.mxu0 0.0
  %5002 = vmatpush1.msra.mxu0 0.0
  %5003 = vmatprep.subr.mxu0 0.0
  %5004 = vmatpush1.msra.mxu0 %v4973
  %5005 = vmatprep.subr.mxu0 0.0
  %5006 = vmatpush1.msra.mxu0 %v4931
  %5007 = vmatprep.subr.mxu0 0.0
  %5008 = vmatpush2.msra.mxu0 0.0
  %5009 = vmatprep.subr.mxu0 0.0
  %5010 = vmatpush2.msra.mxu0 0.0
  %5011 = vmatprep.subr.mxu0 0.0
  %5012 = vmatpush2.msra.mxu0 0.0
  %5013 = vmatprep.subr.mxu0 0.0
  %5014 = vmatpush2.msra.mxu0 0.0
  %5015 = vmatprep.subr.mxu0 0.0
  %5016 = vmatpush2.msra.mxu0 0.0
  %5017 = vmatprep.subr.mxu0 0.0
  %5018 = vmatpush2.msra.mxu0 0.0
  %5019 = vmatprep.subr.mxu0 0.0
  %5020 = vmatpush2.msra.mxu0 0.0
  %5021 = vmatprep.subr.mxu0 0.0
  %5022 = vmatpush2.msra.mxu0 0.0
  %5023 = vmatprep.subr.mxu0 0.0
  %5024 = vmatpush2.msra.mxu0 0.0
  %5025 = vmatprep.subr.mxu0 0.0
  %5026 = vmatpush2.msra.mxu0 0.0
  %5027 = vmatprep.subr.mxu0 0.0
  %5028 = vmatpush2.msra.mxu0 0.0
  %5029 = vmatprep.subr.mxu0 0.0
  %5030 = vmatpush2.msra.mxu0 0.0
  %5031 = vmatprep.subr.mxu0 0.0
  %5032 = vmatpush2.msra.mxu0 0.0
  %5033 = vmatprep.subr.mxu0 0.0
  %5034 = vmatpush2.msra.mxu0 0.0
  %5035 = vmatprep.subr.mxu0 0.0
  %5036 = vmatpush2.msra.mxu0 0.0
  %5037 = vmatprep.subr.mxu0 0.0
  %5038 = vmatpush2.msra.mxu0 0.0
  %5039 = vmatprep.mubr.f32.mxu0 0.0
  %5040 = vmatmul.mubr.f32.gmra.mxu0 %v4940
  %v5041 = vpop.f32.mrf.mxu0
  %v5042 = vadd.f32 0.0, %v5041
  %v5043 = vpop.f32.mrf.mxu0
  %5044 = vmatprep.mubr.f32.mxu0 0.0
  %5045 = vmatmul.mubr.f32.gmra.mxu0 %v4943
  %v5046 = vpop.f32.mrf.mxu0
  %v5047 = vadd.f32 0.0, %v5046
  %v5048 = vpop.f32.mrf.mxu0
  %5049 = vmatprep.mubr.f32.mxu0 0.0
  %5050 = vmatmul.mubr.f32.gmra.mxu0 %v4946
  %v5051 = vpop.f32.mrf.mxu0
  %v5052 = vadd.f32 0.0, %v5051
  %v5053 = vpop.f32.mrf.mxu0
  %5054 = vmatprep.mubr.f32.mxu0 0.0
  %5055 = vmatmul.mubr.f32.gmra.mxu0 %v4949
  %v5056 = vpop.f32.mrf.mxu0
  %v5057 = vadd.f32 0.0, %v5056
  %v5058 = vpop.f32.mrf.mxu0
  %5059 = vmatprep.mubr.f32.mxu0 0.0
  %5060 = vmatmul.mubr.f32.gmra.mxu0 %v4952
  %v5061 = vpop.f32.mrf.mxu0
  %v5062 = vadd.f32 0.0, %v5061
  %v5063 = vpop.f32.mrf.mxu0
  %5064 = vmatprep.mubr.f32.mxu0 0.0
  %5065 = vmatmul.mubr.f32.gmra.mxu0 %v4955
  %v5066 = vpop.f32.mrf.mxu0
  %v5067 = vadd.f32 0.0, %v5066
  %v5068 = vpop.f32.mrf.mxu0
  %5069 = vmatprep.mubr.f32.mxu0 0.0
  %5070 = vmatmul.mubr.f32.gmra.mxu0 %v4958
  %v5071 = vpop.f32.mrf.mxu0
  %v5072 = vadd.f32 0.0, %v5071
  %v5073 = vpop.f32.mrf.mxu0
  %5074 = vmatprep.mubr.f32.mxu0 0.0
  %5075 = vmatmul.mubr.f32.gmra.mxu0 %v4961
  %v5076 = vpop.f32.mrf.mxu0
  %v5077 = vadd.f32 0.0, %v5076
  %v5078 = vpop.f32.mrf.mxu0
  %5079 = vmatprep.mubr.f32.mxu0 0.0
  %5080 = vmatmul.mubr.f32.gmra.mxu0 %v4964
  %v5081 = vpop.f32.mrf.mxu0
  %v5082 = vadd.f32 0.0, %v5081
  %v5083 = vpop.f32.mrf.mxu0
  %5084 = vmatprep.mubr.f32.mxu0 0.0
  %5085 = vmatmul.mubr.f32.gmra.mxu0 %v4967
  %v5086 = vpop.f32.mrf.mxu0
  %v5087 = vadd.f32 0.0, %v5086
  %v5088 = vpop.f32.mrf.mxu0
  %5089 = vmatprep.mubr.f32.mxu0 0.0
  %5090 = vmatmul.mubr.f32.gmra.mxu0 %v4970
  %v5091 = vpop.f32.mrf.mxu0
  %v5092 = vadd.f32 0.0, %v5091
  %v5093 = vpop.f32.mrf.mxu0
  %5094 = vdwg.mxu0
  %v5095 = vadd.f32 %v4833, %v5042
  %v5096 = vadd.f32 %v4834, %v5047
  %v5097 = vadd.f32 %v4835, %v5052
  %v5098 = vadd.f32 %v4836, %v5057
  %v5099 = vadd.f32 %v4837, %v5062
  %v5100 = vadd.f32 %v4838, %v5067
  %v5101 = vadd.f32 %v4839, %v5072
  %v5102 = vadd.f32 %v4840, %v5077
  %v5103 = vadd.f32 %v4841, %v5082
  %v5104 = vadd.f32 %v4842, %v5087
  %v5105 = vadd.f32 %v4843, %v5092
  %s5106 = scalar_lea.vmem %s22, 352
  %v5107 = vld [vmem:[%s5106] sm:$0xff]
  %v5108 = vld [vmem:[%s5106 + $0x8] sm:$0xff]
  %v5109 = vld [vmem:[%s5106 + $0x10] sm:$0xff]
  %v5110 = vld [vmem:[%s5106 + $0x18] sm:$0xff]
  %v5111 = vld [vmem:[%s5106 + $0x20] sm:$0xff]
  %v5112 = vld [vmem:[%s5106 + $0x28] sm:$0xff]
  %v5113 = vld [vmem:[%s5106 + $0x30] sm:$0xff]
  %v5114 = vld [vmem:[%s5106 + $0x38] sm:$0xff]
  %v5115 = vld [vmem:[%s5106 + $0x40] sm:$0xff]
  %v5116 = vld [vmem:[%s5106 + $0x48] sm:$0xff]
  %v5117 = vld [vmem:[%s5106 + $0x50] sm:$0xf]
  %s5118 = scalar_lea.vmem %s23, 224
  %v5119 = vld [vmem:[%s5118] sm:$0xff]
  %v5120 = vld [vmem:[%s5118 + $0x8] sm:$0xff]
  %v5121 = vld [vmem:[%s5118 + $0x10] sm:$0xff]
  %v5122 = vld [vmem:[%s5118 + $0x18] sm:$0xff]
  %v5123 = vld [vmem:[%s5118 + $0x20] sm:$0xff]
  %v5124 = vld [vmem:[%s5118 + $0x28] sm:$0xff]
  %v5125 = vld [vmem:[%s5118 + $0x30] sm:$0xff]
  %5126 = vmatprep.subr.mxu0 0.0
  %5127 = vmatpush1.msra.mxu0 0.0
  %5128 = vmatprep.subr.mxu0 0.0
  %5129 = vmatpush1.msra.mxu0 0.0
  %5130 = vmatprep.subr.mxu0 0.0
  %5131 = vmatpush1.msra.mxu0 0.0
  %5132 = vmatprep.subr.mxu0 0.0
  %5133 = vmatpush1.msra.mxu0 0.0
  %5134 = vmatprep.subr.mxu0 0.0
  %5135 = vmatpush1.msra.mxu0 0.0
  %5136 = vmatprep.subr.mxu0 0.0
  %5137 = vmatpush1.msra.mxu0 0.0
  %5138 = vmatprep.subr.mxu0 0.0
  %5139 = vmatpush1.msra.mxu0 0.0
  %5140 = vmatprep.subr.mxu0 0.0
  %5141 = vmatpush1.msra.mxu0 0.0
  %5142 = vmatprep.subr.mxu0 0.0
  %5143 = vmatpush1.msra.mxu0 0.0
  %5144 = vmatprep.subr.mxu0 0.0
  %5145 = vmatpush1.msra.mxu0 %v5125
  %5146 = vmatprep.subr.mxu0 0.0
  %5147 = vmatpush1.msra.mxu0 %v5124
  %5148 = vmatprep.subr.mxu0 0.0
  %5149 = vmatpush1.msra.mxu0 %v5123
  %5150 = vmatprep.subr.mxu0 0.0
  %5151 = vmatpush1.msra.mxu0 %v5122
  %5152 = vmatprep.subr.mxu0 0.0
  %5153 = vmatpush1.msra.mxu0 %v5121
  %5154 = vmatprep.subr.mxu0 0.0
  %5155 = vmatpush1.msra.mxu0 %v5120
  %5156 = vmatprep.subr.mxu0 0.0
  %5157 = vmatpush1.msra.mxu0 %v5119
  %5158 = vmatprep.subr.mxu0 0.0
  %5159 = vmatpush2.msra.mxu0 0.0
  %5160 = vmatprep.subr.mxu0 0.0
  %5161 = vmatpush2.msra.mxu0 0.0
  %5162 = vmatprep.subr.mxu0 0.0
  %5163 = vmatpush2.msra.mxu0 0.0
  %5164 = vmatprep.subr.mxu0 0.0
  %5165 = vmatpush2.msra.mxu0 0.0
  %5166 = vmatprep.subr.mxu0 0.0
  %5167 = vmatpush2.msra.mxu0 0.0
  %5168 = vmatprep.subr.mxu0 0.0
  %5169 = vmatpush2.msra.mxu0 0.0
  %5170 = vmatprep.subr.mxu0 0.0
  %5171 = vmatpush2.msra.mxu0 0.0
  %5172 = vmatprep.subr.mxu0 0.0
  %5173 = vmatpush2.msra.mxu0 0.0
  %5174 = vmatprep.subr.mxu0 0.0
  %5175 = vmatpush2.msra.mxu0 0.0
  %5176 = vmatprep.subr.mxu0 0.0
  %5177 = vmatpush2.msra.mxu0 0.0
  %5178 = vmatprep.subr.mxu0 0.0
  %5179 = vmatpush2.msra.mxu0 0.0
  %5180 = vmatprep.subr.mxu0 0.0
  %5181 = vmatpush2.msra.mxu0 0.0
  %5182 = vmatprep.subr.mxu0 0.0
  %5183 = vmatpush2.msra.mxu0 0.0
  %5184 = vmatprep.subr.mxu0 0.0
  %5185 = vmatpush2.msra.mxu0 0.0
  %5186 = vmatprep.subr.mxu0 0.0
  %5187 = vmatpush2.msra.mxu0 0.0
  %5188 = vmatprep.subr.mxu0 0.0
  %5189 = vmatpush2.msra.mxu0 0.0
  %5190 = vmatprep.mubr.f32.mxu0 0.0
  %5191 = vmatmul.mubr.f32.gmra.mxu0 %v4094
  %v5192 = vpop.f32.mrf.mxu0
  %v5193 = vadd.f32 0.0, %v5192
  %v5194 = vpop.f32.mrf.mxu0
  %5195 = vmatprep.mubr.f32.mxu0 0.0
  %5196 = vmatmul.mubr.f32.gmra.mxu0 %v4097
  %v5197 = vpop.f32.mrf.mxu0
  %v5198 = vadd.f32 0.0, %v5197
  %v5199 = vpop.f32.mrf.mxu0
  %5200 = vdwg.mxu0
  %v5202 = vsel %vm4269, %v5107, 0
  %v5205 = vsel %vm4269, %v5108, 0
  %v5208 = vsel %vm4269, %v5109, 0
  %v5211 = vsel %vm4269, %v5110, 0
  %v5214 = vsel %vm4269, %v5111, 0
  %v5217 = vsel %vm4269, %v5112, 0
  %v5220 = vsel %vm4269, %v5113, 0
  %v5223 = vsel %vm4269, %v5114, 0
  %v5226 = vsel %vm4269, %v5115, 0
  %v5229 = vsel %vm4269, %v5116, 0
  %v5232 = vsel %vm4269, %v5117, 0
  %v5235 = vsel %vm3734, %v5198, 0
  %5237 = vmatprep.subr.mxu0 0.0
  %5238 = vmatpush1.msra.mxu0 0.0
  %5239 = vmatprep.subr.mxu0 0.0
  %5240 = vmatpush1.msra.mxu0 0.0
  %5241 = vmatprep.subr.mxu0 0.0
  %5242 = vmatpush1.msra.mxu0 0.0
  %5243 = vmatprep.subr.mxu0 0.0
  %5244 = vmatpush1.msra.mxu0 0.0
  %5245 = vmatprep.subr.mxu0 0.0
  %5246 = vmatpush1.msra.mxu0 0.0
  %5247 = vmatprep.subr.mxu0 0.0
  %5248 = vmatpush1.msra.mxu0 0.0
  %5249 = vmatprep.subr.mxu0 0.0
  %5250 = vmatpush1.msra.mxu0 0.0
  %5251 = vmatprep.subr.mxu0 0.0
  %5252 = vmatpush1.msra.mxu0 0.0
  %5253 = vmatprep.subr.mxu0 0.0
  %5254 = vmatpush1.msra.mxu0 0.0
  %5255 = vmatprep.subr.mxu0 0.0
  %5256 = vmatpush1.msra.mxu0 0.0
  %5257 = vmatprep.subr.mxu0 0.0
  %5258 = vmatpush1.msra.mxu0 0.0
  %5259 = vmatprep.subr.mxu0 0.0
  %5260 = vmatpush1.msra.mxu0 0.0
  %5261 = vmatprep.subr.mxu0 0.0
  %5262 = vmatpush1.msra.mxu0 0.0
  %5263 = vmatprep.subr.mxu0 0.0
  %5264 = vmatpush1.msra.mxu0 0.0
  %5265 = vmatprep.subr.mxu0 0.0
  %5266 = vmatpush1.msra.mxu0 %v5235
  %5267 = vmatprep.subr.mxu0 0.0
  %5268 = vmatpush1.msra.mxu0 %v5193
  %5269 = vmatprep.subr.mxu0 0.0
  %5270 = vmatpush2.msra.mxu0 0.0
  %5271 = vmatprep.subr.mxu0 0.0
  %5272 = vmatpush2.msra.mxu0 0.0
  %5273 = vmatprep.subr.mxu0 0.0
  %5274 = vmatpush2.msra.mxu0 0.0
  %5275 = vmatprep.subr.mxu0 0.0
  %5276 = vmatpush2.msra.mxu0 0.0
  %5277 = vmatprep.subr.mxu0 0.0
  %5278 = vmatpush2.msra.mxu0 0.0
  %5279 = vmatprep.subr.mxu0 0.0
  %5280 = vmatpush2.msra.mxu0 0.0
  %5281 = vmatprep.subr.mxu0 0.0
  %5282 = vmatpush2.msra.mxu0 0.0
  %5283 = vmatprep.subr.mxu0 0.0
  %5284 = vmatpush2.msra.mxu0 0.0
  %5285 = vmatprep.subr.mxu0 0.0
  %5286 = vmatpush2.msra.mxu0 0.0
  %5287 = vmatprep.subr.mxu0 0.0
  %5288 = vmatpush2.msra.mxu0 0.0
  %5289 = vmatprep.subr.mxu0 0.0
  %5290 = vmatpush2.msra.mxu0 0.0
  %5291 = vmatprep.subr.mxu0 0.0
  %5292 = vmatpush2.msra.mxu0 0.0
  %5293 = vmatprep.subr.mxu0 0.0
  %5294 = vmatpush2.msra.mxu0 0.0
  %5295 = vmatprep.subr.mxu0 0.0
  %5296 = vmatpush2.msra.mxu0 0.0
  %5297 = vmatprep.subr.mxu0 0.0
  %5298 = vmatpush2.msra.mxu0 0.0
  %5299 = vmatprep.subr.mxu0 0.0
  %5300 = vmatpush2.msra.mxu0 0.0
  %5301 = vmatprep.mubr.f32.mxu0 0.0
  %5302 = vmatmul.mubr.f32.gmra.mxu0 %v5202
  %v5303 = vpop.f32.mrf.mxu0
  %v5304 = vadd.f32 0.0, %v5303
  %v5305 = vpop.f32.mrf.mxu0
  %5306 = vmatprep.mubr.f32.mxu0 0.0
  %5307 = vmatmul.mubr.f32.gmra.mxu0 %v5205
  %v5308 = vpop.f32.mrf.mxu0
  %v5309 = vadd.f32 0.0, %v5308
  %v5310 = vpop.f32.mrf.mxu0
  %5311 = vmatprep.mubr.f32.mxu0 0.0
  %5312 = vmatmul.mubr.f32.gmra.mxu0 %v5208
  %v5313 = vpop.f32.mrf.mxu0
  %v5314 = vadd.f32 0.0, %v5313
  %v5315 = vpop.f32.mrf.mxu0
  %5316 = vmatprep.mubr.f32.mxu0 0.0
  %5317 = vmatmul.mubr.f32.gmra.mxu0 %v5211
  %v5318 = vpop.f32.mrf.mxu0
  %v5319 = vadd.f32 0.0, %v5318
  %v5320 = vpop.f32.mrf.mxu0
  %5321 = vmatprep.mubr.f32.mxu0 0.0
  %5322 = vmatmul.mubr.f32.gmra.mxu0 %v5214
  %v5323 = vpop.f32.mrf.mxu0
  %v5324 = vadd.f32 0.0, %v5323
  %v5325 = vpop.f32.mrf.mxu0
  %5326 = vmatprep.mubr.f32.mxu0 0.0
  %5327 = vmatmul.mubr.f32.gmra.mxu0 %v5217
  %v5328 = vpop.f32.mrf.mxu0
  %v5329 = vadd.f32 0.0, %v5328
  %v5330 = vpop.f32.mrf.mxu0
  %5331 = vmatprep.mubr.f32.mxu0 0.0
  %5332 = vmatmul.mubr.f32.gmra.mxu0 %v5220
  %v5333 = vpop.f32.mrf.mxu0
  %v5334 = vadd.f32 0.0, %v5333
  %v5335 = vpop.f32.mrf.mxu0
  %5336 = vmatprep.mubr.f32.mxu0 0.0
  %5337 = vmatmul.mubr.f32.gmra.mxu0 %v5223
  %v5338 = vpop.f32.mrf.mxu0
  %v5339 = vadd.f32 0.0, %v5338
  %v5340 = vpop.f32.mrf.mxu0
  %5341 = vmatprep.mubr.f32.mxu0 0.0
  %5342 = vmatmul.mubr.f32.gmra.mxu0 %v5226
  %v5343 = vpop.f32.mrf.mxu0
  %v5344 = vadd.f32 0.0, %v5343
  %v5345 = vpop.f32.mrf.mxu0
  %5346 = vmatprep.mubr.f32.mxu0 0.0
  %5347 = vmatmul.mubr.f32.gmra.mxu0 %v5229
  %v5348 = vpop.f32.mrf.mxu0
  %v5349 = vadd.f32 0.0, %v5348
  %v5350 = vpop.f32.mrf.mxu0
  %5351 = vmatprep.mubr.f32.mxu0 0.0
  %5352 = vmatmul.mubr.f32.gmra.mxu0 %v5232
  %v5353 = vpop.f32.mrf.mxu0
  %v5354 = vadd.f32 0.0, %v5353
  %v5355 = vpop.f32.mrf.mxu0
  %5356 = vdwg.mxu0
  %v5357 = vadd.f32 %v5095, %v5304
  %v5358 = vadd.f32 %v5096, %v5309
  %v5359 = vadd.f32 %v5097, %v5314
  %v5360 = vadd.f32 %v5098, %v5319
  %v5361 = vadd.f32 %v5099, %v5324
  %v5362 = vadd.f32 %v5100, %v5329
  %v5363 = vadd.f32 %v5101, %v5334
  %v5364 = vadd.f32 %v5102, %v5339
  %v5365 = vadd.f32 %v5103, %v5344
  %v5366 = vadd.f32 %v5104, %v5349
  %v5367 = vadd.f32 %v5105, %v5354
  %s5368 = scalar_lea.vmem %s22, 440
  %v5369 = vld [vmem:[%s5368] sm:$0xff]
  %v5370 = vld [vmem:[%s5368 + $0x8] sm:$0xff]
  %v5371 = vld [vmem:[%s5368 + $0x10] sm:$0xff]
  %v5372 = vld [vmem:[%s5368 + $0x18] sm:$0xff]
  %v5373 = vld [vmem:[%s5368 + $0x20] sm:$0xff]
  %v5374 = vld [vmem:[%s5368 + $0x28] sm:$0xff]
  %v5375 = vld [vmem:[%s5368 + $0x30] sm:$0xff]
  %v5376 = vld [vmem:[%s5368 + $0x38] sm:$0xff]
  %v5377 = vld [vmem:[%s5368 + $0x40] sm:$0xff]
  %v5378 = vld [vmem:[%s5368 + $0x48] sm:$0xff]
  %v5379 = vld [vmem:[%s5368 + $0x50] sm:$0xf]
  %s5380 = scalar_lea.vmem %s23, 280
  %v5381 = vld [vmem:[%s5380] sm:$0xff]
  %v5382 = vld [vmem:[%s5380 + $0x8] sm:$0xff]
  %v5383 = vld [vmem:[%s5380 + $0x10] sm:$0xff]
  %v5384 = vld [vmem:[%s5380 + $0x18] sm:$0xff]
  %v5385 = vld [vmem:[%s5380 + $0x20] sm:$0xff]
  %v5386 = vld [vmem:[%s5380 + $0x28] sm:$0xff]
  %v5387 = vld [vmem:[%s5380 + $0x30] sm:$0xff]
  %5388 = vmatprep.subr.mxu0 0.0
  %5389 = vmatpush1.msra.mxu0 0.0
  %5390 = vmatprep.subr.mxu0 0.0
  %5391 = vmatpush1.msra.mxu0 0.0
  %5392 = vmatprep.subr.mxu0 0.0
  %5393 = vmatpush1.msra.mxu0 0.0
  %5394 = vmatprep.subr.mxu0 0.0
  %5395 = vmatpush1.msra.mxu0 0.0
  %5396 = vmatprep.subr.mxu0 0.0
  %5397 = vmatpush1.msra.mxu0 0.0
  %5398 = vmatprep.subr.mxu0 0.0
  %5399 = vmatpush1.msra.mxu0 0.0
  %5400 = vmatprep.subr.mxu0 0.0
  %5401 = vmatpush1.msra.mxu0 0.0
  %5402 = vmatprep.subr.mxu0 0.0
  %5403 = vmatpush1.msra.mxu0 0.0
  %5404 = vmatprep.subr.mxu0 0.0
  %5405 = vmatpush1.msra.mxu0 0.0
  %5406 = vmatprep.subr.mxu0 0.0
  %5407 = vmatpush1.msra.mxu0 %v5387
  %5408 = vmatprep.subr.mxu0 0.0
  %5409 = vmatpush1.msra.mxu0 %v5386
  %5410 = vmatprep.subr.mxu0 0.0
  %5411 = vmatpush1.msra.mxu0 %v5385
  %5412 = vmatprep.subr.mxu0 0.0
  %5413 = vmatpush1.msra.mxu0 %v5384
  %5414 = vmatprep.subr.mxu0 0.0
  %5415 = vmatpush1.msra.mxu0 %v5383
  %5416 = vmatprep.subr.mxu0 0.0
  %5417 = vmatpush1.msra.mxu0 %v5382
  %5418 = vmatprep.subr.mxu0 0.0
  %5419 = vmatpush1.msra.mxu0 %v5381
  %5420 = vmatprep.subr.mxu0 0.0
  %5421 = vmatpush2.msra.mxu0 0.0
  %5422 = vmatprep.subr.mxu0 0.0
  %5423 = vmatpush2.msra.mxu0 0.0
  %5424 = vmatprep.subr.mxu0 0.0
  %5425 = vmatpush2.msra.mxu0 0.0
  %5426 = vmatprep.subr.mxu0 0.0
  %5427 = vmatpush2.msra.mxu0 0.0
  %5428 = vmatprep.subr.mxu0 0.0
  %5429 = vmatpush2.msra.mxu0 0.0
  %5430 = vmatprep.subr.mxu0 0.0
  %5431 = vmatpush2.msra.mxu0 0.0
  %5432 = vmatprep.subr.mxu0 0.0
  %5433 = vmatpush2.msra.mxu0 0.0
  %5434 = vmatprep.subr.mxu0 0.0
  %5435 = vmatpush2.msra.mxu0 0.0
  %5436 = vmatprep.subr.mxu0 0.0
  %5437 = vmatpush2.msra.mxu0 0.0
  %5438 = vmatprep.subr.mxu0 0.0
  %5439 = vmatpush2.msra.mxu0 0.0
  %5440 = vmatprep.subr.mxu0 0.0
  %5441 = vmatpush2.msra.mxu0 0.0
  %5442 = vmatprep.subr.mxu0 0.0
  %5443 = vmatpush2.msra.mxu0 0.0
  %5444 = vmatprep.subr.mxu0 0.0
  %5445 = vmatpush2.msra.mxu0 0.0
  %5446 = vmatprep.subr.mxu0 0.0
  %5447 = vmatpush2.msra.mxu0 0.0
  %5448 = vmatprep.subr.mxu0 0.0
  %5449 = vmatpush2.msra.mxu0 0.0
  %5450 = vmatprep.subr.mxu0 0.0
  %5451 = vmatpush2.msra.mxu0 0.0
  %5452 = vmatprep.mubr.f32.mxu0 0.0
  %5453 = vmatmul.mubr.f32.gmra.mxu0 %v4094
  %v5454 = vpop.f32.mrf.mxu0
  %v5455 = vadd.f32 0.0, %v5454
  %v5456 = vpop.f32.mrf.mxu0
  %5457 = vmatprep.mubr.f32.mxu0 0.0
  %5458 = vmatmul.mubr.f32.gmra.mxu0 %v4097
  %v5459 = vpop.f32.mrf.mxu0
  %v5460 = vadd.f32 0.0, %v5459
  %v5461 = vpop.f32.mrf.mxu0
  %5462 = vdwg.mxu0
  %v5464 = vsel %vm4269, %v5369, 0
  %v5467 = vsel %vm4269, %v5370, 0
  %v5470 = vsel %vm4269, %v5371, 0
  %v5473 = vsel %vm4269, %v5372, 0
  %v5476 = vsel %vm4269, %v5373, 0
  %v5479 = vsel %vm4269, %v5374, 0
  %v5482 = vsel %vm4269, %v5375, 0
  %v5485 = vsel %vm4269, %v5376, 0
  %v5488 = vsel %vm4269, %v5377, 0
  %v5491 = vsel %vm4269, %v5378, 0
  %v5494 = vsel %vm4269, %v5379, 0
  %v5497 = vsel %vm3734, %v5460, 0
  %5499 = vmatprep.subr.mxu0 0.0
  %5500 = vmatpush1.msra.mxu0 0.0
  %5501 = vmatprep.subr.mxu0 0.0
  %5502 = vmatpush1.msra.mxu0 0.0
  %5503 = vmatprep.subr.mxu0 0.0
  %5504 = vmatpush1.msra.mxu0 0.0
  %5505 = vmatprep.subr.mxu0 0.0
  %5506 = vmatpush1.msra.mxu0 0.0
  %5507 = vmatprep.subr.mxu0 0.0
  %5508 = vmatpush1.msra.mxu0 0.0
  %5509 = vmatprep.subr.mxu0 0.0
  %5510 = vmatpush1.msra.mxu0 0.0
  %5511 = vmatprep.subr.mxu0 0.0
  %5512 = vmatpush1.msra.mxu0 0.0
  %5513 = vmatprep.subr.mxu0 0.0
  %5514 = vmatpush1.msra.mxu0 0.0
  %5515 = vmatprep.subr.mxu0 0.0
  %5516 = vmatpush1.msra.mxu0 0.0
  %5517 = vmatprep.subr.mxu0 0.0
  %5518 = vmatpush1.msra.mxu0 0.0
  %5519 = vmatprep.subr.mxu0 0.0
  %5520 = vmatpush1.msra.mxu0 0.0
  %5521 = vmatprep.subr.mxu0 0.0
  %5522 = vmatpush1.msra.mxu0 0.0
  %5523 = vmatprep.subr.mxu0 0.0
  %5524 = vmatpush1.msra.mxu0 0.0
  %5525 = vmatprep.subr.mxu0 0.0
  %5526 = vmatpush1.msra.mxu0 0.0
  %5527 = vmatprep.subr.mxu0 0.0
  %5528 = vmatpush1.msra.mxu0 %v5497
  %5529 = vmatprep.subr.mxu0 0.0
  %5530 = vmatpush1.msra.mxu0 %v5455
  %5531 = vmatprep.subr.mxu0 0.0
  %5532 = vmatpush2.msra.mxu0 0.0
  %5533 = vmatprep.subr.mxu0 0.0
  %5534 = vmatpush2.msra.mxu0 0.0
  %5535 = vmatprep.subr.mxu0 0.0
  %5536 = vmatpush2.msra.mxu0 0.0
  %5537 = vmatprep.subr.mxu0 0.0
  %5538 = vmatpush2.msra.mxu0 0.0
  %5539 = vmatprep.subr.mxu0 0.0
  %5540 = vmatpush2.msra.mxu0 0.0
  %5541 = vmatprep.subr.mxu0 0.0
  %5542 = vmatpush2.msra.mxu0 0.0
  %5543 = vmatprep.subr.mxu0 0.0
  %5544 = vmatpush2.msra.mxu0 0.0
  %5545 = vmatprep.subr.mxu0 0.0
  %5546 = vmatpush2.msra.mxu0 0.0
  %5547 = vmatprep.subr.mxu0 0.0
  %5548 = vmatpush2.msra.mxu0 0.0
  %5549 = vmatprep.subr.mxu0 0.0
  %5550 = vmatpush2.msra.mxu0 0.0
  %5551 = vmatprep.subr.mxu0 0.0
  %5552 = vmatpush2.msra.mxu0 0.0
  %5553 = vmatprep.subr.mxu0 0.0
  %5554 = vmatpush2.msra.mxu0 0.0
  %5555 = vmatprep.subr.mxu0 0.0
  %5556 = vmatpush2.msra.mxu0 0.0
  %5557 = vmatprep.subr.mxu0 0.0
  %5558 = vmatpush2.msra.mxu0 0.0
  %5559 = vmatprep.subr.mxu0 0.0
  %5560 = vmatpush2.msra.mxu0 0.0
  %5561 = vmatprep.subr.mxu0 0.0
  %5562 = vmatpush2.msra.mxu0 0.0
  %5563 = vmatprep.mubr.f32.mxu0 0.0
  %5564 = vmatmul.mubr.f32.gmra.mxu0 %v5464
  %v5565 = vpop.f32.mrf.mxu0
  %v5566 = vadd.f32 0.0, %v5565
  %v5567 = vpop.f32.mrf.mxu0
  %5568 = vmatprep.mubr.f32.mxu0 0.0
  %5569 = vmatmul.mubr.f32.gmra.mxu0 %v5467
  %v5570 = vpop.f32.mrf.mxu0
  %v5571 = vadd.f32 0.0, %v5570
  %v5572 = vpop.f32.mrf.mxu0
  %5573 = vmatprep.mubr.f32.mxu0 0.0
  %5574 = vmatmul.mubr.f32.gmra.mxu0 %v5470
  %v5575 = vpop.f32.mrf.mxu0
  %v5576 = vadd.f32 0.0, %v5575
  %v5577 = vpop.f32.mrf.mxu0
  %5578 = vmatprep.mubr.f32.mxu0 0.0
  %5579 = vmatmul.mubr.f32.gmra.mxu0 %v5473
  %v5580 = vpop.f32.mrf.mxu0
  %v5581 = vadd.f32 0.0, %v5580
  %v5582 = vpop.f32.mrf.mxu0
  %5583 = vmatprep.mubr.f32.mxu0 0.0
  %5584 = vmatmul.mubr.f32.gmra.mxu0 %v5476
  %v5585 = vpop.f32.mrf.mxu0
  %v5586 = vadd.f32 0.0, %v5585
  %v5587 = vpop.f32.mrf.mxu0
  %5588 = vmatprep.mubr.f32.mxu0 0.0
  %5589 = vmatmul.mubr.f32.gmra.mxu0 %v5479
  %v5590 = vpop.f32.mrf.mxu0
  %v5591 = vadd.f32 0.0, %v5590
  %v5592 = vpop.f32.mrf.mxu0
  %5593 = vmatprep.mubr.f32.mxu0 0.0
  %5594 = vmatmul.mubr.f32.gmra.mxu0 %v5482
  %v5595 = vpop.f32.mrf.mxu0
  %v5596 = vadd.f32 0.0, %v5595
  %v5597 = vpop.f32.mrf.mxu0
  %5598 = vmatprep.mubr.f32.mxu0 0.0
  %5599 = vmatmul.mubr.f32.gmra.mxu0 %v5485
  %v5600 = vpop.f32.mrf.mxu0
  %v5601 = vadd.f32 0.0, %v5600
  %v5602 = vpop.f32.mrf.mxu0
  %5603 = vmatprep.mubr.f32.mxu0 0.0
  %5604 = vmatmul.mubr.f32.gmra.mxu0 %v5488
  %v5605 = vpop.f32.mrf.mxu0
  %v5606 = vadd.f32 0.0, %v5605
  %v5607 = vpop.f32.mrf.mxu0
  %5608 = vmatprep.mubr.f32.mxu0 0.0
  %5609 = vmatmul.mubr.f32.gmra.mxu0 %v5491
  %v5610 = vpop.f32.mrf.mxu0
  %v5611 = vadd.f32 0.0, %v5610
  %v5612 = vpop.f32.mrf.mxu0
  %5613 = vmatprep.mubr.f32.mxu0 0.0
  %5614 = vmatmul.mubr.f32.gmra.mxu0 %v5494
  %v5615 = vpop.f32.mrf.mxu0
  %v5616 = vadd.f32 0.0, %v5615
  %v5617 = vpop.f32.mrf.mxu0
  %5618 = vdwg.mxu0
  %v5619 = vadd.f32 %v5357, %v5566
  %v5620 = vadd.f32 %v5358, %v5571
  %v5621 = vadd.f32 %v5359, %v5576
  %v5622 = vadd.f32 %v5360, %v5581
  %v5623 = vadd.f32 %v5361, %v5586
  %v5624 = vadd.f32 %v5362, %v5591
  %v5625 = vadd.f32 %v5363, %v5596
  %v5626 = vadd.f32 %v5364, %v5601
  %v5627 = vadd.f32 %v5365, %v5606
  %v5628 = vadd.f32 %v5366, %v5611
  %v5629 = vadd.f32 %v5367, %v5616
  %v5630 = vld [vmem:[%s24] sm:$0xff]
  %v5631 = vld [vmem:[%s24 + $0x8] sm:$0xff]
  %v5632 = vld [vmem:[%s24 + $0x10] sm:$0xff]
  %v5633 = vld [vmem:[%s24 + $0x18] sm:$0xff]
  %v5634 = vld [vmem:[%s24 + $0x20] sm:$0xff]
  %v5635 = vld [vmem:[%s24 + $0x28] sm:$0xff]
  %v5636 = vld [vmem:[%s24 + $0x30] sm:$0xff]
  %v5637 = vld [vmem:[%s24 + $0x38] sm:$0xff]
  %v5638 = vld [vmem:[%s24 + $0x40] sm:$0xff]
  %v5639 = vld [vmem:[%s24 + $0x48] sm:$0xff]
  %v5640 = vld [vmem:[%s24 + $0x50] sm:$0xf]
  %5642 = vset.pattern.permute.xlu0 0
  %5643 = vperm.xlu0 %5642, %v5630
  %v5644 = vpop.permute.xlu0 %5643
  %5647 = vset.pattern.permute.xlu0 0
  %5648 = vperm.xlu0 %5647, %v5631
  %v5649 = vpop.permute.xlu0 %5648
  %5652 = vset.pattern.permute.xlu0 0
  %5653 = vperm.xlu0 %5652, %v5632
  %v5654 = vpop.permute.xlu0 %5653
  %5657 = vset.pattern.permute.xlu0 0
  %5658 = vperm.xlu0 %5657, %v5633
  %v5659 = vpop.permute.xlu0 %5658
  %5662 = vset.pattern.permute.xlu0 0
  %5663 = vperm.xlu0 %5662, %v5634
  %v5664 = vpop.permute.xlu0 %5663
  %5667 = vset.pattern.permute.xlu0 0
  %5668 = vperm.xlu0 %5667, %v5635
  %v5669 = vpop.permute.xlu0 %5668
  %5672 = vset.pattern.permute.xlu0 0
  %5673 = vperm.xlu0 %5672, %v5636
  %v5674 = vpop.permute.xlu0 %5673
  %5677 = vset.pattern.permute.xlu0 0
  %5678 = vperm.xlu0 %5677, %v5637
  %v5679 = vpop.permute.xlu0 %5678
  %5682 = vset.pattern.permute.xlu0 0
  %5683 = vperm.xlu0 %5682, %v5638
  %v5684 = vpop.permute.xlu0 %5683
  %5687 = vset.pattern.permute.xlu0 0
  %5688 = vperm.xlu0 %5687, %v5639
  %v5689 = vpop.permute.xlu0 %5688
  %5692 = vset.pattern.permute.xlu0 0
  %5693 = vperm.xlu0 %5692, %v5640
  %v5694 = vpop.permute.xlu0 %5693
  %v5696 = vadd.f32 %v5619, %v5644
  %v5697 = vadd.f32 %v5620, %v5649
  %v5698 = vadd.f32 %v5621, %v5654
  %v5699 = vadd.f32 %v5622, %v5659
  %v5700 = vadd.f32 %v5623, %v5664
  %v5701 = vadd.f32 %v5624, %v5669
  %v5702 = vadd.f32 %v5625, %v5674
  %v5703 = vadd.f32 %v5626, %v5679
  %v5704 = vadd.f32 %v5627, %v5684
  %v5705 = vadd.f32 %v5628, %v5689
  %v5706 = vadd.f32 %v5629, %v5694
  %v5707 = vxor.u32 %v5696, 2147483648
  %v5708 = vxor.u32 %v5697, 2147483648
  %v5709 = vxor.u32 %v5698, 2147483648
  %v5710 = vxor.u32 %v5699, 2147483648
  %v5711 = vxor.u32 %v5700, 2147483648
  %v5712 = vxor.u32 %v5701, 2147483648
  %v5713 = vxor.u32 %v5702, 2147483648
  %v5714 = vxor.u32 %v5703, 2147483648
  %v5715 = vxor.u32 %v5704, 2147483648
  %v5716 = vxor.u32 %v5705, 2147483648
  %v5717 = vxor.u32 %v5706, 2147483648
  %v5718 = vmul.f32 %v5707, 1.442695
  %v5719 = vpow.pop %v5718
  %v5720 = vmul.f32 %v5708, 1.442695
  %v5721 = vpow.pop %v5720
  %v5722 = vmul.f32 %v5709, 1.442695
  %v5723 = vpow.pop %v5722
  %v5724 = vmul.f32 %v5710, 1.442695
  %v5725 = vpow.pop %v5724
  %v5726 = vmul.f32 %v5711, 1.442695
  %v5727 = vpow.pop %v5726
  %v5728 = vmul.f32 %v5712, 1.442695
  %v5729 = vpow.pop %v5728
  %v5730 = vmul.f32 %v5713, 1.442695
  %v5731 = vpow.pop %v5730
  %v5732 = vmul.f32 %v5714, 1.442695
  %v5733 = vpow.pop %v5732
  %v5734 = vmul.f32 %v5715, 1.442695
  %v5735 = vpow.pop %v5734
  %v5736 = vmul.f32 %v5716, 1.442695
  %v5737 = vpow.pop %v5736
  %v5738 = vmul.f32 %v5717, 1.442695
  %v5739 = vpow.pop %v5738
  %v5740 = vadd.f32 %v5719, 1.0
  %v5741 = vadd.f32 %v5721, 1.0
  %v5742 = vadd.f32 %v5723, 1.0
  %v5743 = vadd.f32 %v5725, 1.0
  %v5744 = vadd.f32 %v5727, 1.0
  %v5745 = vadd.f32 %v5729, 1.0
  %v5746 = vadd.f32 %v5731, 1.0
  %v5747 = vadd.f32 %v5733, 1.0
  %v5748 = vadd.f32 %v5735, 1.0
  %v5749 = vadd.f32 %v5737, 1.0
  %v5750 = vadd.f32 %v5739, 1.0
  %v5751 = vrcp.pop %v5740
  %v5752 = vmul.f32 1.0, %v5751
  %v5753 = vrcp.pop %v5741
  %v5754 = vmul.f32 1.0, %v5753
  %v5755 = vrcp.pop %v5742
  %v5756 = vmul.f32 1.0, %v5755
  %v5757 = vrcp.pop %v5743
  %v5758 = vmul.f32 1.0, %v5757
  %v5759 = vrcp.pop %v5744
  %v5760 = vmul.f32 1.0, %v5759
  %v5761 = vrcp.pop %v5745
  %v5762 = vmul.f32 1.0, %v5761
  %v5763 = vrcp.pop %v5746
  %v5764 = vmul.f32 1.0, %v5763
  %v5765 = vrcp.pop %v5747
  %v5766 = vmul.f32 1.0, %v5765
  %v5767 = vrcp.pop %v5748
  %v5768 = vmul.f32 1.0, %v5767
  %v5769 = vrcp.pop %v5749
  %v5770 = vmul.f32 1.0, %v5769
  %v5771 = vrcp.pop %v5750
  %v5772 = vmul.f32 1.0, %v5771
  %5773 = vst.msk [vmem:[%s25] sm:$0xff] %vm4269, %v5752
  %5774 = vst.msk [vmem:[%s25 + $0x8] sm:$0xff] %vm4269, %v5754
  %5775 = vst.msk [vmem:[%s25 + $0x10] sm:$0xff] %vm4269, %v5756
  %5776 = vst.msk [vmem:[%s25 + $0x18] sm:$0xff] %vm4269, %v5758
  %5777 = vst.msk [vmem:[%s25 + $0x20] sm:$0xff] %vm4269, %v5760
  %5778 = vst.msk [vmem:[%s25 + $0x28] sm:$0xff] %vm4269, %v5762
  %5779 = vst.msk [vmem:[%s25 + $0x30] sm:$0xff] %vm4269, %v5764
  %5780 = vst.msk [vmem:[%s25 + $0x38] sm:$0xff] %vm4269, %v5766
  %5781 = vst.msk [vmem:[%s25 + $0x40] sm:$0xff] %vm4269, %v5768
  %5782 = vst.msk [vmem:[%s25 + $0x48] sm:$0xff] %vm4269, %v5770
  %vm5783 = vcmask 109568
  %5784 = vst.msk [vmem:[%s25 + $0x50] sm:$0xf] %vm5783, %v5772
  // Predicated region
  $region102: #{autoencoder_forward.1} parent=0 // pred_check
    _
  $region103: #{autoencoder_forward.1} parent=0 // pred_check_branch
    %5786 = sbr.rel (0) target = $region105
  $region104: #{autoencoder_forward.1} parent=0 // pred_region
    _
  $region105: #{autoencoder_forward.1} parent=0 // pred_fallthru
    _
  // Predicated region
  $region106: #{autoencoder_forward.1} parent=0 // pred_check
    _
  $region107: #{autoencoder_forward.1} parent=0 // pred_check_branch
    %5788 = sbr.rel (0) target = $region109
  $region108: #{autoencoder_forward.1} parent=0 // pred_region
    _
  $region109: #{autoencoder_forward.1} parent=0 // pred_fallthru
    _

</llo_original>
